<compile_context>
chip_gen: v7x
topology: tpu7x:2x2x1
jax: 0.10.0
libtpu: 0.0.40
codegen_flags: <defaults>
</compile_context>

<pallas_src>
import math

import jax
import jax.numpy as jnp
from jax.experimental import pallas as pl
from jax.experimental.pallas import tpu as pltpu

# ---------------- configuration ----------------
B = 2            # batch
C_IN = 2         # input channels (as in the PyTorch module)
IMG = 64         # image H = W
PS = 16          # patch size / conv stride (kept from ViT-B/16)
NPH = IMG // PS
N_PATCH = NPH * NPH           # 16
SEQ = N_PATCH + 1             # 17 = patches + class token
SEQ_PAD = 32                  # padded rows: clean (16,128) bf16 tiles
PATCH_DIM = C_IN * PS * PS    # 512
D = 128                       # hidden dim (768 in the real model)
HEADS = 4                     # 12 in the real model
HD = D // HEADS
MLP = 512                     # 3072 in the real model
DEPTH = 2                     # 12 in the real model
NUM_CLASSES = 2
OUT_PAD = 128                 # logits lane-padded to a full 128-lane register
OUT_ROWS = 8                  # sublane-aligned logits rows (row 0 = class token)
EPS = 1e-6                    # torchvision ViT LayerNorm eps
NEG_INF = -1e9                # additive mask for padded key columns


# ---------------- in-kernel math helpers ----------------
def _erf(z):
    # Abramowitz & Stegun 7.1.26, |error| <= 1.5e-7 (exact at bf16/f32 level).
    a1, a2, a3, a4, a5 = 0.254829592, -0.284496736, 1.421413741, -1.453152027, 1.061405429
    p = 0.3275911
    az = jnp.abs(z)
    t = 1.0 / (1.0 + p * az)
    poly = ((((a5 * t + a4) * t + a3) * t + a2) * t + a1) * t
    e = 1.0 - poly * jnp.exp(-az * az)
    return jnp.where(z >= 0, e, -e)


def _gelu(x):
    # exact erf-GELU, matching torch nn.GELU() (default, non-approximate).
    return 0.5 * x * (1.0 + _erf(x * 0.7071067811865476))


def _layernorm(x, w, b):
    mu = jnp.mean(x, axis=-1, keepdims=True)
    var = jnp.mean((x - mu) ** 2, axis=-1, keepdims=True)
    return (x - mu) * jax.lax.rsqrt(var + EPS) * w + b


def _dot(a, b):
    # bf16 MXU inputs, f32 accumulation.
    return jnp.dot(a.astype(jnp.bfloat16), b.astype(jnp.bfloat16),
                   preferred_element_type=jnp.float32)


def _dot_nt(a, b):
    # a @ b.T without materializing a transpose.
    return jax.lax.dot_general(
        a.astype(jnp.bfloat16), b.astype(jnp.bfloat16),
        (((1,), (1,)), ((), ())), preferred_element_type=jnp.float32)


# ---------------- fused Pallas kernel (one (batch, layer) grid step) --------
def vit_kernel(patches_ref, proj_w_ref, base_ref,
               ln1w_ref, ln1b_ref, wqkv_ref, bqkv_ref, wo_ref, bo_ref,
               ln2w_ref, ln2b_ref, w1_ref, b1_ref, w2_ref, b2_ref,
               lnf_w_ref, lnf_b_ref, head_w_ref, head_b_ref,
               o_ref, x_scr, head_buf):
    l = pl.program_id(1)

    # additive key mask: 0 on the SEQ real key columns, -1e9 on pad columns.
    col = jax.lax.broadcasted_iota(jnp.int32, (1, SEQ_PAD), 1)
    key_bias = jnp.where(col < SEQ, 0.0, NEG_INF)

    # ---- patch projection + cls/pos embedding (first layer step only) ----
    # base = [cls+pos[0]; proj_b+pos[1:]; zeros]; the cls-slot / pad patch rows
    # are all-zero, so one matmul+add builds the whole padded sequence.
    @pl.when(l == 0)
    def _():
        x_scr[...] = _dot(patches_ref[...], proj_w_ref[...]) + base_ref[...]

    x = x_scr[...]

    # ---- multi-head self-attention (pre-LN); dropout = identity ----
    xn = _layernorm(x, ln1w_ref[...], ln1b_ref[...])
    qkv = _dot(xn, wqkv_ref[...]) + bqkv_ref[...]          # (SEQ_PAD, 3D)
    q = qkv[:, 0 * D:1 * D]                                # 1/sqrt(HD) pre-folded
    k = qkv[:, 1 * D:2 * D]
    v = qkv[:, 2 * D:3 * D]
    for h in range(HEADS):                                 # static head loop
        qh = q[:, h * HD:(h + 1) * HD]
        kh = k[:, h * HD:(h + 1) * HD]
        vh = v[:, h * HD:(h + 1) * HD]
        s = _dot_nt(qh, kh) + key_bias                     # (SEQ_PAD, SEQ_PAD)
        s = s - jnp.max(s, axis=-1, keepdims=True)
        p = jnp.exp(s)
        p = p * pl.reciprocal(jnp.sum(p, axis=-1, keepdims=True), approx=True)
        # assemble all heads at their lane offsets -> one K=D out-projection.
        head_buf[:, h * HD:(h + 1) * HD] = _dot(p, vh).astype(head_buf.dtype)
    x = x + _dot(head_buf[...], wo_ref[...]) + bo_ref[...]  # residual

    # ---- MLP (pre-LN): Linear -> exact GELU -> Linear; dropout = identity ----
    xn2 = _layernorm(x, ln2w_ref[...], ln2b_ref[...])
    hdn = _gelu(_dot(xn2, w1_ref[...]) + b1_ref[...])
    x = x + _dot(hdn, w2_ref[...]) + b2_ref[...]            # residual
    x_scr[...] = x

    # ---- final encoder LayerNorm + classification head (last layer only) ----
    @pl.when(l == DEPTH - 1)
    def _():
        xc = x[0:OUT_ROWS, :]                               # row 0 = class token
        xcn = _layernorm(xc, lnf_w_ref[...], lnf_b_ref[...])
        o_ref[...] = (_dot(xcn, head_w_ref[...]) + head_b_ref[...]).astype(o_ref.dtype)


# ---------------- parameters ----------------
def init_params(key):
    def nrm(k, shape, scale=0.02):
        return scale * jax.random.normal(k, shape, jnp.float32)

    keys = jax.random.split(key, 8 + DEPTH)
    params = {
        "proj_w": nrm(keys[0], (PATCH_DIM, D)),               # conv_proj as matmul
        "proj_b": jnp.zeros((1, D), jnp.float32),
        "cls": nrm(keys[1], (1, 1, D)),
        "pos": nrm(keys[2], (1, SEQ, D)),
        "ln_w": jnp.ones((1, D), jnp.float32),                # final encoder LN
        "ln_b": jnp.zeros((1, D), jnp.float32),
        "head_w": nrm(keys[3], (D, NUM_CLASSES)),
        "head_b": jnp.zeros((1, NUM_CLASSES), jnp.float32),
        "layers": [],
    }
    for l in range(DEPTH):
        lk = jax.random.split(keys[8 + l], 4)
        layer = (
            jnp.ones((1, D), jnp.float32),                    # ln1 weight
            jnp.zeros((1, D), jnp.float32),                   # ln1 bias
            nrm(lk[0], (D, 3 * D)),                           # in-proj (qkv) weight
            jnp.zeros((1, 3 * D), jnp.float32),               # in-proj bias
            nrm(lk[1], (D, D)),                               # attn out-proj weight
            jnp.zeros((1, D), jnp.float32),                   # attn out-proj bias
            jnp.ones((1, D), jnp.float32),                    # ln2 weight
            jnp.zeros((1, D), jnp.float32),                   # ln2 bias
            nrm(lk[2], (D, MLP)),                             # mlp fc1 weight
            jnp.zeros((1, MLP), jnp.float32),                 # mlp fc1 bias
            nrm(lk[3], (MLP, D)),                             # mlp fc2 weight
            jnp.zeros((1, D), jnp.float32),                   # mlp fc2 bias
        )
        params["layers"].append(layer)
    return params


# ---------------- forward ----------------
def vit_forward_impl(x, params):
    b = x.shape[0]

    # Patchify exactly like Conv2d(k=16, s=16) + flatten + permute:
    # (B, C, nh, ps, nw, ps) -> (B, nh, nw, C, ps, ps) -> (B, P, C*ps*ps)
    patches = x.reshape(b, C_IN, NPH, PS, NPH, PS)
    patches = patches.transpose(0, 2, 4, 1, 3, 5).reshape(b, N_PATCH, PATCH_DIM)
    # one zero row in front (class-token slot) + zero rows of sublane padding.
    patches_pad = jnp.pad(patches, ((0, 0), (1, SEQ_PAD - SEQ), (0, 0)))
    patches_pad = patches_pad.astype(jnp.bfloat16)            # (B, SEQ_PAD, PATCH_DIM)

    # base = everything added after the projection matmul (cls, pos, conv bias).
    cls = params["cls"].reshape(1, D)
    pos = params["pos"].reshape(SEQ, D)
    base = jnp.concatenate(
        [cls + pos[:1],
         params["proj_b"] + pos[1:],
         jnp.zeros((SEQ_PAD - SEQ, D), jnp.float32)], axis=0)  # (SEQ_PAD, D)

    # classification head lane-padded to 128 outputs (unmasked stores in-kernel).
    head_w = jnp.zeros((D, OUT_PAD), jnp.float32).at[:, :NUM_CLASSES].set(params["head_w"])
    head_b = jnp.zeros((1, OUT_PAD), jnp.float32).at[:, :NUM_CLASSES].set(params["head_b"])

    def bf16(w):
        return w.astype(jnp.bfloat16)

    def stack(i):
        return jnp.stack([layer[i] for layer in params["layers"]])

    # fold the attention scale 1/sqrt(HD) into the q columns of wqkv / bqkv.
    scale = 1.0 / math.sqrt(HD)
    wqkv = stack(2).at[:, :, :D].multiply(scale)
    bqkv = stack(3).at[:, :, :D].multiply(scale)

    layer_spec = lambda r, c: pl.BlockSpec((None, r, c), lambda bi, li: (li, 0, 0))
    batch_spec = lambda r, c: pl.BlockSpec((None, r, c), lambda bi, li: (bi, 0, 0))
    const_spec = lambda r, c: pl.BlockSpec((r, c), lambda bi, li: (0, 0))

    out = pl.pallas_call(
        vit_kernel,
        out_shape=jax.ShapeDtypeStruct((b, OUT_ROWS, OUT_PAD), jnp.float32),
        grid=(b, DEPTH),
        in_specs=[
            batch_spec(SEQ_PAD, PATCH_DIM),                   # patches
            const_spec(PATCH_DIM, D),                         # proj_w
            const_spec(SEQ_PAD, D),                           # base (cls/pos/bias)
            layer_spec(1, D), layer_spec(1, D),               # ln1 w, b
            layer_spec(D, 3 * D), layer_spec(1, 3 * D),       # qkv w, b
            layer_spec(D, D), layer_spec(1, D),               # out-proj w, b
            layer_spec(1, D), layer_spec(1, D),               # ln2 w, b
            layer_spec(D, MLP), layer_spec(1, MLP),           # mlp fc1 w, b
            layer_spec(MLP, D), layer_spec(1, D),             # mlp fc2 w, b
            const_spec(1, D), const_spec(1, D),               # final LN w, b
            const_spec(D, OUT_PAD), const_spec(1, OUT_PAD),   # head w, b
        ],
        out_specs=pl.BlockSpec((None, OUT_ROWS, OUT_PAD), lambda bi, li: (bi, 0, 0)),
        scratch_shapes=[pltpu.VMEM((SEQ_PAD, D), jnp.float32),    # residual stream
                        pltpu.VMEM((SEQ_PAD, D), jnp.bfloat16)],  # assembled heads
        compiler_params=pltpu.CompilerParams(
            dimension_semantics=("parallel", "arbitrary")),
    )(patches_pad, bf16(params["proj_w"]), base,
      stack(0), stack(1), bf16(wqkv), bqkv, bf16(stack(4)), stack(5),
      stack(6), stack(7), bf16(stack(8)), stack(9), bf16(stack(10)), stack(11),
      params["ln_w"], params["ln_b"], bf16(head_w), head_b)

    return out[:, 0, :NUM_CLASSES]


vit_forward = jax.jit(vit_forward_impl)


# ---------------- pure-JAX f32 reference (matches the torch module) ----------
def vit_reference(x, params):
    b = x.shape[0]
    patches = x.reshape(b, C_IN, NPH, PS, NPH, PS)
    patches = patches.transpose(0, 2, 4, 1, 3, 5).reshape(b, N_PATCH, PATCH_DIM)
    tok = patches @ params["proj_w"] + params["proj_b"]
    cls = jnp.broadcast_to(params["cls"], (b, 1, D))
    h = jnp.concatenate([cls, tok], axis=1) + params["pos"]

    def ln(t, w, bia):
        mu = t.mean(-1, keepdims=True)
        var = ((t - mu) ** 2).mean(-1, keepdims=True)
        return (t - mu) * jax.lax.rsqrt(var + EPS) * w + bia

    for (l1w, l1b, wqkv, bqkv, wo, bo, l2w, l2b, w1, b1, w2, b2) in params["layers"]:
        xn = ln(h, l1w, l1b)
        qkv = xn @ wqkv + bqkv
        q, k, v = jnp.split(qkv, 3, axis=-1)
        q = q.reshape(b, SEQ, HEADS, HD).transpose(0, 2, 1, 3)
        k = k.reshape(b, SEQ, HEADS, HD).transpose(0, 2, 1, 3)
        v = v.reshape(b, SEQ, HEADS, HD).transpose(0, 2, 1, 3)
        s = (q @ jnp.swapaxes(k, -1, -2)) / math.sqrt(HD)
        p = jax.nn.softmax(s, axis=-1)
        o = (p @ v).transpose(0, 2, 1, 3).reshape(b, SEQ, D)
        h = h + o @ wo + bo
        xn2 = ln(h, l2w, l2b)
        h = h + jax.nn.gelu(xn2 @ w1 + b1, approximate=False) @ w2 + b2

    hn = ln(h[:, 0], params["ln_w"], params["ln_b"])
    return hn @ params["head_w"] + params["head_b"]


if __name__ == "__main__":
    root = jax.random.PRNGKey(0)
    k_in, k_par = jax.random.split(root)
    x = jax.random.normal(k_in, (B, C_IN, IMG, IMG), jnp.float32)  # NCHW, like torch
    params = init_params(k_par)

    out = vit_forward(x, params)
    jax.block_until_ready(out)
    assert out.shape == (B, NUM_CLASSES), out.shape

    # tolerance check against the f32 reference (bf16 MXU + approx reciprocal).
    ref = vit_reference(x, params)
    err = float(jnp.max(jnp.abs(out - ref)))
    assert err < 8e-2, f"kernel vs reference max abs err {err}"

    print("KERNEL_OK")
</pallas_src>

<mosaic_0001>
module attributes {stable_mosaic.version = 11 : i64} {
  func.func @vit_kernel(%arg0: i32, %arg1: i32, %arg2: memref<1x32x512xbf16, #tpu.memory_space<vmem>>, %arg3: memref<512x128xbf16, #tpu.memory_space<vmem>>, %arg4: memref<32x128xf32, #tpu.memory_space<vmem>>, %arg5: memref<1x1x128xf32, #tpu.memory_space<vmem>>, %arg6: memref<1x1x128xf32, #tpu.memory_space<vmem>>, %arg7: memref<1x128x384xbf16, #tpu.memory_space<vmem>>, %arg8: memref<1x1x384xf32, #tpu.memory_space<vmem>>, %arg9: memref<1x128x128xbf16, #tpu.memory_space<vmem>>, %arg10: memref<1x1x128xf32, #tpu.memory_space<vmem>>, %arg11: memref<1x1x128xf32, #tpu.memory_space<vmem>>, %arg12: memref<1x1x128xf32, #tpu.memory_space<vmem>>, %arg13: memref<1x128x512xbf16, #tpu.memory_space<vmem>>, %arg14: memref<1x1x512xf32, #tpu.memory_space<vmem>>, %arg15: memref<1x512x128xbf16, #tpu.memory_space<vmem>>, %arg16: memref<1x1x128xf32, #tpu.memory_space<vmem>>, %arg17: memref<1x128xf32, #tpu.memory_space<vmem>>, %arg18: memref<1x128xf32, #tpu.memory_space<vmem>>, %arg19: memref<128x128xbf16, #tpu.memory_space<vmem>>, %arg20: memref<1x128xf32, #tpu.memory_space<vmem>>, %arg21: memref<1x8x128xf32, #tpu.memory_space<vmem>>, %arg22: memref<32x128xf32, #tpu.memory_space<vmem>>, %arg23: memref<32x128xbf16, #tpu.memory_space<vmem>>) attributes {dimension_semantics = [#tpu.dimension_semantics<parallel>, #tpu.dimension_semantics<arbitrary>], iteration_bounds = array<i64: 2, 2>, scalar_prefetch = 0 : i64, scratch_operands = 2 : i64, tpu.core_type = #tpu.core_type<tc>, window_params = [{transform_indices = @transform_0, window_bounds = array<i64: 1, 32, 512>}, {pipeline_mode = #tpu.pipeline_mode<synchronous>, transform_indices = @transform_1, window_bounds = array<i64: 512, 128>}, {pipeline_mode = #tpu.pipeline_mode<synchronous>, transform_indices = @transform_2, window_bounds = array<i64: 32, 128>}, {transform_indices = @transform_3, window_bounds = array<i64: 1, 1, 128>}, {transform_indices = @transform_4, window_bounds = array<i64: 1, 1, 128>}, {transform_indices = @transform_5, window_bounds = array<i64: 1, 128, 384>}, {transform_indices = @transform_6, window_bounds = array<i64: 1, 1, 384>}, {transform_indices = @transform_7, window_bounds = array<i64: 1, 128, 128>}, {transform_indices = @transform_8, window_bounds = array<i64: 1, 1, 128>}, {transform_indices = @transform_9, window_bounds = array<i64: 1, 1, 128>}, {transform_indices = @transform_10, window_bounds = array<i64: 1, 1, 128>}, {transform_indices = @transform_11, window_bounds = array<i64: 1, 128, 512>}, {transform_indices = @transform_12, window_bounds = array<i64: 1, 1, 512>}, {transform_indices = @transform_13, window_bounds = array<i64: 1, 512, 128>}, {transform_indices = @transform_14, window_bounds = array<i64: 1, 1, 128>}, {pipeline_mode = #tpu.pipeline_mode<synchronous>, transform_indices = @transform_15, window_bounds = array<i64: 1, 128>}, {pipeline_mode = #tpu.pipeline_mode<synchronous>, transform_indices = @transform_16, window_bounds = array<i64: 1, 128>}, {pipeline_mode = #tpu.pipeline_mode<synchronous>, transform_indices = @transform_17, window_bounds = array<i64: 128, 128>}, {pipeline_mode = #tpu.pipeline_mode<synchronous>, transform_indices = @transform_18, window_bounds = array<i64: 1, 128>}, {transform_indices = @transform_19, window_bounds = array<i64: 1, 8, 128>}]} {
    %0 = tpu.iota {dimensions = array<i32: 1>} : vector<1x32xi32>
    %c17_i32 = arith.constant 17 : i32
    %1 = vector.broadcast %c17_i32 : i32 to vector<1x32xi32>
    %2 = arith.cmpi slt, %0, %1 : vector<1x32xi32>
    %cst = arith.constant 0.000000e+00 : f32
    %cst_0 = arith.constant -1.000000e+09 : f32
    %3 = vector.broadcast %cst : f32 to vector<1x32xf32>
    %4 = vector.broadcast %cst_0 : f32 to vector<1x32xf32>
    %5 = arith.select %2, %3, %4 : vector<1x32xi1>, vector<1x32xf32>
    %c0_i32 = arith.constant 0 : i32
    %6 = arith.cmpi eq, %arg1, %c0_i32 : i32
    %7 = arith.extui %6 : i1 to i32
    %c0_i32_1 = arith.constant 0 : i32
    %8 = arith.cmpi ne, %7, %c0_i32_1 : i32
    scf.if %8 {
      %c0_94 = arith.constant 0 : index
      %c0_95 = arith.constant 0 : index
      %c0_96 = arith.constant 0 : index
      %235 = vector.load %arg2[%c0_94, %c0_95, %c0_96] : memref<1x32x512xbf16, #tpu.memory_space<vmem>>, vector<1x32x512xbf16>
      %236 = vector.shape_cast %235 : vector<1x32x512xbf16> to vector<32x512xbf16>
      %c0_97 = arith.constant 0 : index
      %c0_98 = arith.constant 0 : index
      %237 = vector.load %arg3[%c0_97, %c0_98] : memref<512x128xbf16, #tpu.memory_space<vmem>>, vector<512x128xbf16>
      %cst_99 = arith.constant dense<0.000000e+00> : vector<32x128xf32>
      %238 = tpu.matmul %236, %237, %cst_99 {dimension_numbers = #tpu.dot_dimension_numbers<[1], [0], [0], [1], [0, 0, 1, 1], [], []>} : vector<32x512xbf16>, vector<512x128xbf16>, vector<32x128xf32> -> vector<32x128xf32>
      %c0_100 = arith.constant 0 : index
      %c0_101 = arith.constant 0 : index
      %239 = vector.load %arg4[%c0_100, %c0_101] : memref<32x128xf32, #tpu.memory_space<vmem>>, vector<32x128xf32>
      %240 = arith.addf %238, %239 : vector<32x128xf32>
      %c0_102 = arith.constant 0 : index
      %c0_103 = arith.constant 0 : index
      %241 = vector.load %arg22[%c0_102, %c0_103] : memref<32x128xf32, #tpu.memory_space<vmem>>, vector<32x128xf32>
      tpu.vector_store %arg22[%c0_102, %c0_103], %240 {strides = array<i32>} : memref<32x128xf32, #tpu.memory_space<vmem>>, vector<32x128xf32>,
    } else {
    }
    %c0 = arith.constant 0 : index
    %c0_2 = arith.constant 0 : index
    %9 = vector.load %arg22[%c0, %c0_2] : memref<32x128xf32, #tpu.memory_space<vmem>>, vector<32x128xf32>
    %c0_3 = arith.constant 0 : index
    %c0_4 = arith.constant 0 : index
    %c0_5 = arith.constant 0 : index
    %10 = vector.load %arg5[%c0_3, %c0_4, %c0_5] : memref<1x1x128xf32, #tpu.memory_space<vmem>>, vector<1x1x128xf32>
    %11 = vector.shape_cast %10 : vector<1x1x128xf32> to vector<1x128xf32>
    %c0_6 = arith.constant 0 : index
    %c0_7 = arith.constant 0 : index
    %c0_8 = arith.constant 0 : index
    %12 = vector.load %arg6[%c0_6, %c0_7, %c0_8] : memref<1x1x128xf32, #tpu.memory_space<vmem>>, vector<1x1x128xf32>
    %13 = vector.shape_cast %12 : vector<1x1x128xf32> to vector<1x128xf32>
    %cst_9 = arith.constant dense<0.000000e+00> : vector<32xf32>
    %14 = vector.multi_reduction <add>, %9, %cst_9 [1] : vector<32x128xf32> to vector<32xf32>
    %15 = vector.shape_cast %14 : vector<32xf32> to vector<32x1xf32>
    %cst_10 = arith.constant 1.280000e+02 : f32
    %16 = vector.broadcast %cst_10 : f32 to vector<32x1xf32>
    %17 = arith.divf %15, %16 : vector<32x1xf32>
    %18 = vector.broadcast %17 : vector<32x1xf32> to vector<32x128xf32>
    %19 = arith.subf %9, %18 : vector<32x128xf32>
    %20 = arith.mulf %19, %19 : vector<32x128xf32>
    %cst_11 = arith.constant dense<0.000000e+00> : vector<32xf32>
    %21 = vector.multi_reduction <add>, %20, %cst_11 [1] : vector<32x128xf32> to vector<32xf32>
    %22 = vector.shape_cast %21 : vector<32xf32> to vector<32x1xf32>
    %cst_12 = arith.constant 1.280000e+02 : f32
    %23 = vector.broadcast %cst_12 : f32 to vector<32x1xf32>
    %24 = arith.divf %22, %23 : vector<32x1xf32>
    %25 = vector.broadcast %17 : vector<32x1xf32> to vector<32x128xf32>
    %26 = arith.subf %9, %25 : vector<32x128xf32>
    %cst_13 = arith.constant 9.99999997E-7 : f32
    %27 = vector.broadcast %cst_13 : f32 to vector<32x1xf32>
    %28 = arith.addf %24, %27 : vector<32x1xf32>
    %29 = math.rsqrt %28 : vector<32x1xf32>
    %30 = vector.broadcast %29 : vector<32x1xf32> to vector<32x128xf32>
    %31 = arith.mulf %26, %30 : vector<32x128xf32>
    %32 = vector.broadcast %11 : vector<1x128xf32> to vector<32x128xf32>
    %33 = arith.mulf %31, %32 : vector<32x128xf32>
    %34 = vector.broadcast %13 : vector<1x128xf32> to vector<32x128xf32>
    %35 = arith.addf %33, %34 : vector<32x128xf32>
    %c0_14 = arith.constant 0 : index
    %c0_15 = arith.constant 0 : index
    %c0_16 = arith.constant 0 : index
    %36 = vector.load %arg7[%c0_14, %c0_15, %c0_16] : memref<1x128x384xbf16, #tpu.memory_space<vmem>>, vector<1x128x384xbf16>
    %37 = vector.shape_cast %36 : vector<1x128x384xbf16> to vector<128x384xbf16>
    %38 = arith.truncf %35 : vector<32x128xf32> to vector<32x128xbf16>
    %cst_17 = arith.constant dense<0.000000e+00> : vector<32x384xf32>
    %39 = tpu.matmul %38, %37, %cst_17 {dimension_numbers = #tpu.dot_dimension_numbers<[1], [0], [0], [1], [0, 0, 1, 1], [], []>} : vector<32x128xbf16>, vector<128x384xbf16>, vector<32x384xf32> -> vector<32x384xf32>
    %c0_18 = arith.constant 0 : index
    %c0_19 = arith.constant 0 : index
    %c0_20 = arith.constant 0 : index
    %40 = vector.load %arg8[%c0_18, %c0_19, %c0_20] : memref<1x1x384xf32, #tpu.memory_space<vmem>>, vector<1x1x384xf32>
    %41 = vector.shape_cast %40 : vector<1x1x384xf32> to vector<1x384xf32>
    %42 = vector.broadcast %41 : vector<1x384xf32> to vector<32x384xf32>
    %43 = arith.addf %39, %42 : vector<32x384xf32>
    %44 = vector.extract_strided_slice %43 {offsets = [0, 0], sizes = [32, 128], strides = [1, 1]} : vector<32x384xf32> to vector<32x128xf32>
    %45 = vector.extract_strided_slice %43 {offsets = [0, 128], sizes = [32, 128], strides = [1, 1]} : vector<32x384xf32> to vector<32x128xf32>
    %46 = vector.extract_strided_slice %43 {offsets = [0, 256], sizes = [32, 128], strides = [1, 1]} : vector<32x384xf32> to vector<32x128xf32>
    %47 = vector.extract_strided_slice %44 {offsets = [0, 0], sizes = [32, 32], strides = [1, 1]} : vector<32x128xf32> to vector<32x32xf32>
    %48 = vector.extract_strided_slice %45 {offsets = [0, 0], sizes = [32, 32], strides = [1, 1]} : vector<32x128xf32> to vector<32x32xf32>
    %49 = vector.extract_strided_slice %46 {offsets = [0, 0], sizes = [32, 32], strides = [1, 1]} : vector<32x128xf32> to vector<32x32xf32>
    %50 = arith.truncf %47 : vector<32x32xf32> to vector<32x32xbf16>
    %51 = arith.truncf %48 : vector<32x32xf32> to vector<32x32xbf16>
    %cst_21 = arith.constant dense<0.000000e+00> : vector<32x32xf32>
    %52 = tpu.matmul %50, %51, %cst_21 {dimension_numbers = #tpu.dot_dimension_numbers<[1], [1], [0], [0], [0, 0, 1, 0], [], []>} : vector<32x32xbf16>, vector<32x32xbf16>, vector<32x32xf32> -> vector<32x32xf32>
    %53 = vector.broadcast %5 : vector<1x32xf32> to vector<32x32xf32>
    %54 = arith.addf %52, %53 : vector<32x32xf32>
    %cst_22 = arith.constant dense<0xFF800000> : vector<32xf32>
    %55 = vector.multi_reduction <maximumf>, %54, %cst_22 [1] : vector<32x32xf32> to vector<32xf32>
    %56 = vector.shape_cast %55 : vector<32xf32> to vector<32x1xf32>
    %57 = vector.broadcast %56 : vector<32x1xf32> to vector<32x32xf32>
    %58 = arith.subf %54, %57 : vector<32x32xf32>
    %59 = math.exp %58 : vector<32x32xf32>
    %cst_23 = arith.constant dense<0.000000e+00> : vector<32xf32>
    %60 = vector.multi_reduction <add>, %59, %cst_23 [1] : vector<32x32xf32> to vector<32xf32>
    %61 = vector.shape_cast %60 : vector<32xf32> to vector<32x1xf32>
    %62 = tpu.reciprocal %61 {approx = true} : vector<32x1xf32> -> vector<32x1xf32>
    %63 = vector.broadcast %62 : vector<32x1xf32> to vector<32x32xf32>
    %64 = arith.mulf %59, %63 : vector<32x32xf32>
    %65 = arith.truncf %64 : vector<32x32xf32> to vector<32x32xbf16>
    %66 = arith.truncf %49 : vector<32x32xf32> to vector<32x32xbf16>
    %cst_24 = arith.constant dense<0.000000e+00> : vector<32x32xf32>
    %67 = tpu.matmul %65, %66, %cst_24 {dimension_numbers = #tpu.dot_dimension_numbers<[1], [0], [0], [1], [0, 0, 1, 1], [], []>} : vector<32x32xbf16>, vector<32x32xbf16>, vector<32x32xf32> -> vector<32x32xf32>
    %68 = arith.truncf %67 : vector<32x32xf32> to vector<32x32xbf16>
    %c0_25 = arith.constant 0 : index
    %c0_26 = arith.constant 0 : index
    %69 = vector.load %arg23[%c0_25, %c0_26] : memref<32x128xbf16, #tpu.memory_space<vmem>>, vector<32x32xbf16>
    tpu.vector_store %arg23[%c0_25, %c0_26], %68 {strides = array<i32>} : memref<32x128xbf16, #tpu.memory_space<vmem>>, vector<32x32xbf16>,
    %70 = vector.extract_strided_slice %44 {offsets = [0, 32], sizes = [32, 32], strides = [1, 1]} : vector<32x128xf32> to vector<32x32xf32>
    %71 = vector.extract_strided_slice %45 {offsets = [0, 32], sizes = [32, 32], strides = [1, 1]} : vector<32x128xf32> to vector<32x32xf32>
    %72 = vector.extract_strided_slice %46 {offsets = [0, 32], sizes = [32, 32], strides = [1, 1]} : vector<32x128xf32> to vector<32x32xf32>
    %73 = arith.truncf %70 : vector<32x32xf32> to vector<32x32xbf16>
    %74 = arith.truncf %71 : vector<32x32xf32> to vector<32x32xbf16>
    %cst_27 = arith.constant dense<0.000000e+00> : vector<32x32xf32>
    %75 = tpu.matmul %73, %74, %cst_27 {dimension_numbers = #tpu.dot_dimension_numbers<[1], [1], [0], [0], [0, 0, 1, 0], [], []>} : vector<32x32xbf16>, vector<32x32xbf16>, vector<32x32xf32> -> vector<32x32xf32>
    %76 = vector.broadcast %5 : vector<1x32xf32> to vector<32x32xf32>
    %77 = arith.addf %75, %76 : vector<32x32xf32>
    %cst_28 = arith.constant dense<0xFF800000> : vector<32xf32>
    %78 = vector.multi_reduction <maximumf>, %77, %cst_28 [1] : vector<32x32xf32> to vector<32xf32>
    %79 = vector.shape_cast %78 : vector<32xf32> to vector<32x1xf32>
    %80 = vector.broadcast %79 : vector<32x1xf32> to vector<32x32xf32>
    %81 = arith.subf %77, %80 : vector<32x32xf32>
    %82 = math.exp %81 : vector<32x32xf32>
    %cst_29 = arith.constant dense<0.000000e+00> : vector<32xf32>
    %83 = vector.multi_reduction <add>, %82, %cst_29 [1] : vector<32x32xf32> to vector<32xf32>
    %84 = vector.shape_cast %83 : vector<32xf32> to vector<32x1xf32>
    %85 = tpu.reciprocal %84 {approx = true} : vector<32x1xf32> -> vector<32x1xf32>
    %86 = vector.broadcast %85 : vector<32x1xf32> to vector<32x32xf32>
    %87 = arith.mulf %82, %86 : vector<32x32xf32>
    %88 = arith.truncf %87 : vector<32x32xf32> to vector<32x32xbf16>
    %89 = arith.truncf %72 : vector<32x32xf32> to vector<32x32xbf16>
    %cst_30 = arith.constant dense<0.000000e+00> : vector<32x32xf32>
    %90 = tpu.matmul %88, %89, %cst_30 {dimension_numbers = #tpu.dot_dimension_numbers<[1], [0], [0], [1], [0, 0, 1, 1], [], []>} : vector<32x32xbf16>, vector<32x32xbf16>, vector<32x32xf32> -> vector<32x32xf32>
    %91 = arith.truncf %90 : vector<32x32xf32> to vector<32x32xbf16>
    %c0_31 = arith.constant 0 : index
    %c32 = arith.constant 32 : index
    %92 = vector.load %arg23[%c0_31, %c32] : memref<32x128xbf16, #tpu.memory_space<vmem>>, vector<32x32xbf16>
    tpu.vector_store %arg23[%c0_31, %c32], %91 {strides = array<i32>} : memref<32x128xbf16, #tpu.memory_space<vmem>>, vector<32x32xbf16>,
    %93 = vector.extract_strided_slice %44 {offsets = [0, 64], sizes = [32, 32], strides = [1, 1]} : vector<32x128xf32> to vector<32x32xf32>
    %94 = vector.extract_strided_slice %45 {offsets = [0, 64], sizes = [32, 32], strides = [1, 1]} : vector<32x128xf32> to vector<32x32xf32>
    %95 = vector.extract_strided_slice %46 {offsets = [0, 64], sizes = [32, 32], strides = [1, 1]} : vector<32x128xf32> to vector<32x32xf32>
    %96 = arith.truncf %93 : vector<32x32xf32> to vector<32x32xbf16>
    %97 = arith.truncf %94 : vector<32x32xf32> to vector<32x32xbf16>
    %cst_32 = arith.constant dense<0.000000e+00> : vector<32x32xf32>
    %98 = tpu.matmul %96, %97, %cst_32 {dimension_numbers = #tpu.dot_dimension_numbers<[1], [1], [0], [0], [0, 0, 1, 0], [], []>} : vector<32x32xbf16>, vector<32x32xbf16>, vector<32x32xf32> -> vector<32x32xf32>
    %99 = vector.broadcast %5 : vector<1x32xf32> to vector<32x32xf32>
    %100 = arith.addf %98, %99 : vector<32x32xf32>
    %cst_33 = arith.constant dense<0xFF800000> : vector<32xf32>
    %101 = vector.multi_reduction <maximumf>, %100, %cst_33 [1] : vector<32x32xf32> to vector<32xf32>
    %102 = vector.shape_cast %101 : vector<32xf32> to vector<32x1xf32>
    %103 = vector.broadcast %102 : vector<32x1xf32> to vector<32x32xf32>
    %104 = arith.subf %100, %103 : vector<32x32xf32>
    %105 = math.exp %104 : vector<32x32xf32>
    %cst_34 = arith.constant dense<0.000000e+00> : vector<32xf32>
    %106 = vector.multi_reduction <add>, %105, %cst_34 [1] : vector<32x32xf32> to vector<32xf32>
    %107 = vector.shape_cast %106 : vector<32xf32> to vector<32x1xf32>
    %108 = tpu.reciprocal %107 {approx = true} : vector<32x1xf32> -> vector<32x1xf32>
    %109 = vector.broadcast %108 : vector<32x1xf32> to vector<32x32xf32>
    %110 = arith.mulf %105, %109 : vector<32x32xf32>
    %111 = arith.truncf %110 : vector<32x32xf32> to vector<32x32xbf16>
    %112 = arith.truncf %95 : vector<32x32xf32> to vector<32x32xbf16>
    %cst_35 = arith.constant dense<0.000000e+00> : vector<32x32xf32>
    %113 = tpu.matmul %111, %112, %cst_35 {dimension_numbers = #tpu.dot_dimension_numbers<[1], [0], [0], [1], [0, 0, 1, 1], [], []>} : vector<32x32xbf16>, vector<32x32xbf16>, vector<32x32xf32> -> vector<32x32xf32>
    %114 = arith.truncf %113 : vector<32x32xf32> to vector<32x32xbf16>
    %c0_36 = arith.constant 0 : index
    %c64 = arith.constant 64 : index
    %115 = vector.load %arg23[%c0_36, %c64] : memref<32x128xbf16, #tpu.memory_space<vmem>>, vector<32x32xbf16>
    tpu.vector_store %arg23[%c0_36, %c64], %114 {strides = array<i32>} : memref<32x128xbf16, #tpu.memory_space<vmem>>, vector<32x32xbf16>,
    %116 = vector.extract_strided_slice %44 {offsets = [0, 96], sizes = [32, 32], strides = [1, 1]} : vector<32x128xf32> to vector<32x32xf32>
    %117 = vector.extract_strided_slice %45 {offsets = [0, 96], sizes = [32, 32], strides = [1, 1]} : vector<32x128xf32> to vector<32x32xf32>
    %118 = vector.extract_strided_slice %46 {offsets = [0, 96], sizes = [32, 32], strides = [1, 1]} : vector<32x128xf32> to vector<32x32xf32>
    %119 = arith.truncf %116 : vector<32x32xf32> to vector<32x32xbf16>
    %120 = arith.truncf %117 : vector<32x32xf32> to vector<32x32xbf16>
    %cst_37 = arith.constant dense<0.000000e+00> : vector<32x32xf32>
    %121 = tpu.matmul %119, %120, %cst_37 {dimension_numbers = #tpu.dot_dimension_numbers<[1], [1], [0], [0], [0, 0, 1, 0], [], []>} : vector<32x32xbf16>, vector<32x32xbf16>, vector<32x32xf32> -> vector<32x32xf32>
    %122 = vector.broadcast %5 : vector<1x32xf32> to vector<32x32xf32>
    %123 = arith.addf %121, %122 : vector<32x32xf32>
    %cst_38 = arith.constant dense<0xFF800000> : vector<32xf32>
    %124 = vector.multi_reduction <maximumf>, %123, %cst_38 [1] : vector<32x32xf32> to vector<32xf32>
    %125 = vector.shape_cast %124 : vector<32xf32> to vector<32x1xf32>
    %126 = vector.broadcast %125 : vector<32x1xf32> to vector<32x32xf32>
    %127 = arith.subf %123, %126 : vector<32x32xf32>
    %128 = math.exp %127 : vector<32x32xf32>
    %cst_39 = arith.constant dense<0.000000e+00> : vector<32xf32>
    %129 = vector.multi_reduction <add>, %128, %cst_39 [1] : vector<32x32xf32> to vector<32xf32>
    %130 = vector.shape_cast %129 : vector<32xf32> to vector<32x1xf32>
    %131 = tpu.reciprocal %130 {approx = true} : vector<32x1xf32> -> vector<32x1xf32>
    %132 = vector.broadcast %131 : vector<32x1xf32> to vector<32x32xf32>
    %133 = arith.mulf %128, %132 : vector<32x32xf32>
    %134 = arith.truncf %133 : vector<32x32xf32> to vector<32x32xbf16>
    %135 = arith.truncf %118 : vector<32x32xf32> to vector<32x32xbf16>
    %cst_40 = arith.constant dense<0.000000e+00> : vector<32x32xf32>
    %136 = tpu.matmul %134, %135, %cst_40 {dimension_numbers = #tpu.dot_dimension_numbers<[1], [0], [0], [1], [0, 0, 1, 1], [], []>} : vector<32x32xbf16>, vector<32x32xbf16>, vector<32x32xf32> -> vector<32x32xf32>
    %137 = arith.truncf %136 : vector<32x32xf32> to vector<32x32xbf16>
    %c0_41 = arith.constant 0 : index
    %c96 = arith.constant 96 : index
    %138 = vector.load %arg23[%c0_41, %c96] : memref<32x128xbf16, #tpu.memory_space<vmem>>, vector<32x32xbf16>
    tpu.vector_store %arg23[%c0_41, %c96], %137 {strides = array<i32>} : memref<32x128xbf16, #tpu.memory_space<vmem>>, vector<32x32xbf16>,
    %c0_42 = arith.constant 0 : index
    %c0_43 = arith.constant 0 : index
    %139 = vector.load %arg23[%c0_42, %c0_43] : memref<32x128xbf16, #tpu.memory_space<vmem>>, vector<32x128xbf16>
    %c0_44 = arith.constant 0 : index
    %c0_45 = arith.constant 0 : index
    %c0_46 = arith.constant 0 : index
    %140 = vector.load %arg9[%c0_44, %c0_45, %c0_46] : memref<1x128x128xbf16, #tpu.memory_space<vmem>>, vector<1x128x128xbf16>
    %141 = vector.shape_cast %140 : vector<1x128x128xbf16> to vector<128x128xbf16>
    %cst_47 = arith.constant dense<0.000000e+00> : vector<32x128xf32>
    %142 = tpu.matmul %139, %141, %cst_47 {dimension_numbers = #tpu.dot_dimension_numbers<[1], [0], [0], [1], [0, 0, 1, 1], [], []>} : vector<32x128xbf16>, vector<128x128xbf16>, vector<32x128xf32> -> vector<32x128xf32>
    %143 = arith.addf %9, %142 : vector<32x128xf32>
    %c0_48 = arith.constant 0 : index
    %c0_49 = arith.constant 0 : index
    %c0_50 = arith.constant 0 : index
    %144 = vector.load %arg10[%c0_48, %c0_49, %c0_50] : memref<1x1x128xf32, #tpu.memory_space<vmem>>, vector<1x1x128xf32>
    %145 = vector.shape_cast %144 : vector<1x1x128xf32> to vector<1x128xf32>
    %146 = vector.broadcast %145 : vector<1x128xf32> to vector<32x128xf32>
    %147 = arith.addf %143, %146 : vector<32x128xf32>
    %c0_51 = arith.constant 0 : index
    %c0_52 = arith.constant 0 : index
    %c0_53 = arith.constant 0 : index
    %148 = vector.load %arg11[%c0_51, %c0_52, %c0_53] : memref<1x1x128xf32, #tpu.memory_space<vmem>>, vector<1x1x128xf32>
    %149 = vector.shape_cast %148 : vector<1x1x128xf32> to vector<1x128xf32>
    %c0_54 = arith.constant 0 : index
    %c0_55 = arith.constant 0 : index
    %c0_56 = arith.constant 0 : index
    %150 = vector.load %arg12[%c0_54, %c0_55, %c0_56] : memref<1x1x128xf32, #tpu.memory_space<vmem>>, vector<1x1x128xf32>
    %151 = vector.shape_cast %150 : vector<1x1x128xf32> to vector<1x128xf32>
    %cst_57 = arith.constant dense<0.000000e+00> : vector<32xf32>
    %152 = vector.multi_reduction <add>, %147, %cst_57 [1] : vector<32x128xf32> to vector<32xf32>
    %153 = vector.shape_cast %152 : vector<32xf32> to vector<32x1xf32>
    %cst_58 = arith.constant 1.280000e+02 : f32
    %154 = vector.broadcast %cst_58 : f32 to vector<32x1xf32>
    %155 = arith.divf %153, %154 : vector<32x1xf32>
    %156 = vector.broadcast %155 : vector<32x1xf32> to vector<32x128xf32>
    %157 = arith.subf %147, %156 : vector<32x128xf32>
    %158 = arith.mulf %157, %157 : vector<32x128xf32>
    %cst_59 = arith.constant dense<0.000000e+00> : vector<32xf32>
    %159 = vector.multi_reduction <add>, %158, %cst_59 [1] : vector<32x128xf32> to vector<32xf32>
    %160 = vector.shape_cast %159 : vector<32xf32> to vector<32x1xf32>
    %cst_60 = arith.constant 1.280000e+02 : f32
    %161 = vector.broadcast %cst_60 : f32 to vector<32x1xf32>
    %162 = arith.divf %160, %161 : vector<32x1xf32>
    %163 = vector.broadcast %155 : vector<32x1xf32> to vector<32x128xf32>
    %164 = arith.subf %147, %163 : vector<32x128xf32>
    %cst_61 = arith.constant 9.99999997E-7 : f32
    %165 = vector.broadcast %cst_61 : f32 to vector<32x1xf32>
    %166 = arith.addf %162, %165 : vector<32x1xf32>
    %167 = math.rsqrt %166 : vector<32x1xf32>
    %168 = vector.broadcast %167 : vector<32x1xf32> to vector<32x128xf32>
    %169 = arith.mulf %164, %168 : vector<32x128xf32>
    %170 = vector.broadcast %149 : vector<1x128xf32> to vector<32x128xf32>
    %171 = arith.mulf %169, %170 : vector<32x128xf32>
    %172 = vector.broadcast %151 : vector<1x128xf32> to vector<32x128xf32>
    %173 = arith.addf %171, %172 : vector<32x128xf32>
    %c0_62 = arith.constant 0 : index
    %c0_63 = arith.constant 0 : index
    %c0_64 = arith.constant 0 : index
    %174 = vector.load %arg13[%c0_62, %c0_63, %c0_64] : memref<1x128x512xbf16, #tpu.memory_space<vmem>>, vector<1x128x512xbf16>
    %175 = vector.shape_cast %174 : vector<1x128x512xbf16> to vector<128x512xbf16>
    %176 = arith.truncf %173 : vector<32x128xf32> to vector<32x128xbf16>
    %cst_65 = arith.constant dense<0.000000e+00> : vector<32x512xf32>
    %177 = tpu.matmul %176, %175, %cst_65 {dimension_numbers = #tpu.dot_dimension_numbers<[1], [0], [0], [1], [0, 0, 1, 1], [], []>} : vector<32x128xbf16>, vector<128x512xbf16>, vector<32x512xf32> -> vector<32x512xf32>
    %c0_66 = arith.constant 0 : index
    %c0_67 = arith.constant 0 : index
    %c0_68 = arith.constant 0 : index
    %178 = vector.load %arg14[%c0_66, %c0_67, %c0_68] : memref<1x1x512xf32, #tpu.memory_space<vmem>>, vector<1x1x512xf32>
    %179 = vector.shape_cast %178 : vector<1x1x512xf32> to vector<1x512xf32>
    %180 = vector.broadcast %179 : vector<1x512xf32> to vector<32x512xf32>
    %181 = arith.addf %177, %180 : vector<32x512xf32>
    %cst_69 = arith.constant 5.000000e-01 : f32
    %182 = vector.broadcast %cst_69 : f32 to vector<32x512xf32>
    %183 = arith.mulf %182, %181 : vector<32x512xf32>
    %cst_70 = arith.constant 0.707106769 : f32
    %184 = vector.broadcast %cst_70 : f32 to vector<32x512xf32>
    %185 = arith.mulf %181, %184 : vector<32x512xf32>
    %186 = math.absf %185 : vector<32x512xf32>
    %cst_71 = arith.constant 0.327591091 : f32
    %187 = vector.broadcast %cst_71 : f32 to vector<32x512xf32>
    %188 = arith.mulf %187, %186 : vector<32x512xf32>
    %cst_72 = arith.constant 1.000000e+00 : f32
    %189 = vector.broadcast %cst_72 : f32 to vector<32x512xf32>
    %190 = arith.addf %189, %188 : vector<32x512xf32>
    %cst_73 = arith.constant 1.000000e+00 : f32
    %191 = vector.broadcast %cst_73 : f32 to vector<32x512xf32>
    %192 = arith.divf %191, %190 : vector<32x512xf32>
    %cst_74 = arith.constant 1.06140542 : f32
    %193 = vector.broadcast %cst_74 : f32 to vector<32x512xf32>
    %194 = arith.mulf %193, %192 : vector<32x512xf32>
    %cst_75 = arith.constant -1.45315206 : f32
    %195 = vector.broadcast %cst_75 : f32 to vector<32x512xf32>
    %196 = arith.addf %194, %195 : vector<32x512xf32>
    %197 = arith.mulf %196, %192 : vector<32x512xf32>
    %cst_76 = arith.constant 1.42141378 : f32
    %198 = vector.broadcast %cst_76 : f32 to vector<32x512xf32>
    %199 = arith.addf %197, %198 : vector<32x512xf32>
    %200 = arith.mulf %199, %192 : vector<32x512xf32>
    %cst_77 = arith.constant -0.284496725 : f32
    %201 = vector.broadcast %cst_77 : f32 to vector<32x512xf32>
    %202 = arith.addf %200, %201 : vector<32x512xf32>
    %203 = arith.mulf %202, %192 : vector<32x512xf32>
    %cst_78 = arith.constant 0.254829586 : f32
    %204 = vector.broadcast %cst_78 : f32 to vector<32x512xf32>
    %205 = arith.addf %203, %204 : vector<32x512xf32>
    %206 = arith.mulf %205, %192 : vector<32x512xf32>
    %cst_79 = arith.constant 0.000000e+00 : f32
    %207 = vector.broadcast %cst_79 : f32 to vector<32x512xf32>
    %208 = arith.subf %207, %186 : vector<32x512xf32>
    %209 = arith.mulf %208, %186 : vector<32x512xf32>
    %210 = math.exp %209 : vector<32x512xf32>
    %211 = arith.mulf %206, %210 : vector<32x512xf32>
    %cst_80 = arith.constant 1.000000e+00 : f32
    %212 = vector.broadcast %cst_80 : f32 to vector<32x512xf32>
    %213 = arith.subf %212, %211 : vector<32x512xf32>
    %cst_81 = arith.constant 0.000000e+00 : f32
    %214 = vector.broadcast %cst_81 : f32 to vector<32x512xf32>
    %215 = arith.cmpf oge, %185, %214 : vector<32x512xf32>
    %cst_82 = arith.constant 0.000000e+00 : f32
    %216 = vector.broadcast %cst_82 : f32 to vector<32x512xf32>
    %217 = arith.subf %216, %213 : vector<32x512xf32>
    %218 = arith.select %215, %213, %217 : vector<32x512xi1>, vector<32x512xf32>
    %cst_83 = arith.constant 1.000000e+00 : f32
    %219 = vector.broadcast %cst_83 : f32 to vector<32x512xf32>
    %220 = arith.addf %219, %218 : vector<32x512xf32>
    %221 = arith.mulf %183, %220 : vector<32x512xf32>
    %c0_84 = arith.constant 0 : index
    %c0_85 = arith.constant 0 : index
    %c0_86 = arith.constant 0 : index
    %222 = vector.load %arg15[%c0_84, %c0_85, %c0_86] : memref<1x512x128xbf16, #tpu.memory_space<vmem>>, vector<1x512x128xbf16>
    %223 = vector.shape_cast %222 : vector<1x512x128xbf16> to vector<512x128xbf16>
    %224 = arith.truncf %221 : vector<32x512xf32> to vector<32x512xbf16>
    %cst_87 = arith.constant dense<0.000000e+00> : vector<32x128xf32>
    %225 = tpu.matmul %224, %223, %cst_87 {dimension_numbers = #tpu.dot_dimension_numbers<[1], [0], [0], [1], [0, 0, 1, 1], [], []>} : vector<32x512xbf16>, vector<512x128xbf16>, vector<32x128xf32> -> vector<32x128xf32>
    %226 = arith.addf %147, %225 : vector<32x128xf32>
    %c0_88 = arith.constant 0 : index
    %c0_89 = arith.constant 0 : index
    %c0_90 = arith.constant 0 : index
    %227 = vector.load %arg16[%c0_88, %c0_89, %c0_90] : memref<1x1x128xf32, #tpu.memory_space<vmem>>, vector<1x1x128xf32>
    %228 = vector.shape_cast %227 : vector<1x1x128xf32> to vector<1x128xf32>
    %229 = vector.broadcast %228 : vector<1x128xf32> to vector<32x128xf32>
    %230 = arith.addf %226, %229 : vector<32x128xf32>
    %c0_91 = arith.constant 0 : index
    %c0_92 = arith.constant 0 : index
    %231 = vector.load %arg22[%c0_91, %c0_92] : memref<32x128xf32, #tpu.memory_space<vmem>>, vector<32x128xf32>
    tpu.vector_store %arg22[%c0_91, %c0_92], %230 {strides = array<i32>} : memref<32x128xf32, #tpu.memory_space<vmem>>, vector<32x128xf32>,
    %c1_i32 = arith.constant 1 : i32
    %232 = arith.cmpi eq, %arg1, %c1_i32 : i32
    %233 = arith.extui %232 : i1 to i32
    %c0_i32_93 = arith.constant 0 : i32
    %234 = arith.cmpi ne, %233, %c0_i32_93 : i32
    scf.if %234 {
      %235 = vector.extract_strided_slice %230 {offsets = [0, 0], sizes = [8, 128], strides = [1, 1]} : vector<32x128xf32> to vector<8x128xf32>
      %c0_94 = arith.constant 0 : index
      %c0_95 = arith.constant 0 : index
      %236 = vector.load %arg17[%c0_94, %c0_95] : memref<1x128xf32, #tpu.memory_space<vmem>>, vector<1x128xf32>
      %c0_96 = arith.constant 0 : index
      %c0_97 = arith.constant 0 : index
      %237 = vector.load %arg18[%c0_96, %c0_97] : memref<1x128xf32, #tpu.memory_space<vmem>>, vector<1x128xf32>
      %cst_98 = arith.constant dense<0.000000e+00> : vector<8xf32>
      %238 = vector.multi_reduction <add>, %235, %cst_98 [1] : vector<8x128xf32> to vector<8xf32>
      %239 = vector.shape_cast %238 : vector<8xf32> to vector<8x1xf32>
      %cst_99 = arith.constant 1.280000e+02 : f32
      %240 = vector.broadcast %cst_99 : f32 to vector<8x1xf32>
      %241 = arith.divf %239, %240 : vector<8x1xf32>
      %242 = vector.broadcast %241 : vector<8x1xf32> to vector<8x128xf32>
      %243 = arith.subf %235, %242 : vector<8x128xf32>
      %244 = arith.mulf %243, %243 : vector<8x128xf32>
      %cst_100 = arith.constant dense<0.000000e+00> : vector<8xf32>
      %245 = vector.multi_reduction <add>, %244, %cst_100 [1] : vector<8x128xf32> to vector<8xf32>
      %246 = vector.shape_cast %245 : vector<8xf32> to vector<8x1xf32>
      %cst_101 = arith.constant 1.280000e+02 : f32
      %247 = vector.broadcast %cst_101 : f32 to vector<8x1xf32>
      %248 = arith.divf %246, %247 : vector<8x1xf32>
      %249 = vector.broadcast %241 : vector<8x1xf32> to vector<8x128xf32>
      %250 = arith.subf %235, %249 : vector<8x128xf32>
      %cst_102 = arith.constant 9.99999997E-7 : f32
      %251 = vector.broadcast %cst_102 : f32 to vector<8x1xf32>
      %252 = arith.addf %248, %251 : vector<8x1xf32>
      %253 = math.rsqrt %252 : vector<8x1xf32>
      %254 = vector.broadcast %253 : vector<8x1xf32> to vector<8x128xf32>
      %255 = arith.mulf %250, %254 : vector<8x128xf32>
      %256 = vector.broadcast %236 : vector<1x128xf32> to vector<8x128xf32>
      %257 = arith.mulf %255, %256 : vector<8x128xf32>
      %258 = vector.broadcast %237 : vector<1x128xf32> to vector<8x128xf32>
      %259 = arith.addf %257, %258 : vector<8x128xf32>
      %c0_103 = arith.constant 0 : index
      %c0_104 = arith.constant 0 : index
      %260 = vector.load %arg19[%c0_103, %c0_104] : memref<128x128xbf16, #tpu.memory_space<vmem>>, vector<128x128xbf16>
      %261 = arith.truncf %259 : vector<8x128xf32> to vector<8x128xbf16>
      %cst_105 = arith.constant dense<0.000000e+00> : vector<8x128xf32>
      %262 = tpu.matmul %261, %260, %cst_105 {dimension_numbers = #tpu.dot_dimension_numbers<[1], [0], [0], [1], [0, 0, 1, 1], [], []>} : vector<8x128xbf16>, vector<128x128xbf16>, vector<8x128xf32> -> vector<8x128xf32>
      %c0_106 = arith.constant 0 : index
      %c0_107 = arith.constant 0 : index
      %263 = vector.load %arg20[%c0_106, %c0_107] : memref<1x128xf32, #tpu.memory_space<vmem>>, vector<1x128xf32>
      %264 = vector.broadcast %263 : vector<1x128xf32> to vector<8x128xf32>
      %265 = arith.addf %262, %264 : vector<8x128xf32>
      %c0_108 = arith.constant 0 : index
      %c0_109 = arith.constant 0 : index
      %c0_110 = arith.constant 0 : index
      %266 = vector.load %arg21[%c0_108, %c0_109, %c0_110] : memref<1x8x128xf32, #tpu.memory_space<vmem>>, vector<1x8x128xf32>
      %267 = vector.shape_cast %266 : vector<1x8x128xf32> to vector<8x128xf32>
      %268 = vector.shape_cast %265 : vector<8x128xf32> to vector<1x8x128xf32>
      tpu.vector_store %arg21[%c0_108, %c0_109, %c0_110], %268 {strides = array<i32>} : memref<1x8x128xf32, #tpu.memory_space<vmem>>, vector<1x8x128xf32>,
    } else {
    }
    return
  }
  func.func @transform_0(%arg0: i32, %arg1: i32) -> (i32, i32, i32) {
    %c0_i32 = arith.constant 0 : i32
    %c0_i32_0 = arith.constant 0 : i32
    %c0_i32_1 = arith.constant 0 : i32
    return %arg0, %c0_i32, %c0_i32_0 : i32, i32, i32
  }
  func.func @transform_1(%arg0: i32, %arg1: i32) -> (i32, i32) {
    %c0_i32 = arith.constant 0 : i32
    %c0_i32_0 = arith.constant 0 : i32
    %c0_i32_1 = arith.constant 0 : i32
    return %c0_i32, %c0_i32_0 : i32, i32
  }
  func.func @transform_2(%arg0: i32, %arg1: i32) -> (i32, i32) {
    %c0_i32 = arith.constant 0 : i32
    %c0_i32_0 = arith.constant 0 : i32
    %c0_i32_1 = arith.constant 0 : i32
    return %c0_i32, %c0_i32_0 : i32, i32
  }
  func.func @transform_3(%arg0: i32, %arg1: i32) -> (i32, i32, i32) {
    %c0_i32 = arith.constant 0 : i32
    %c0_i32_0 = arith.constant 0 : i32
    %c0_i32_1 = arith.constant 0 : i32
    return %arg1, %c0_i32, %c0_i32_0 : i32, i32, i32
  }
  func.func @transform_4(%arg0: i32, %arg1: i32) -> (i32, i32, i32) {
    %c0_i32 = arith.constant 0 : i32
    %c0_i32_0 = arith.constant 0 : i32
    %c0_i32_1 = arith.constant 0 : i32
    return %arg1, %c0_i32, %c0_i32_0 : i32, i32, i32
  }
  func.func @transform_5(%arg0: i32, %arg1: i32) -> (i32, i32, i32) {
    %c0_i32 = arith.constant 0 : i32
    %c0_i32_0 = arith.constant 0 : i32
    %c0_i32_1 = arith.constant 0 : i32
    return %arg1, %c0_i32, %c0_i32_0 : i32, i32, i32
  }
  func.func @transform_6(%arg0: i32, %arg1: i32) -> (i32, i32, i32) {
    %c0_i32 = arith.constant 0 : i32
    %c0_i32_0 = arith.constant 0 : i32
    %c0_i32_1 = arith.constant 0 : i32
    return %arg1, %c0_i32, %c0_i32_0 : i32, i32, i32
  }
  func.func @transform_7(%arg0: i32, %arg1: i32) -> (i32, i32, i32) {
    %c0_i32 = arith.constant 0 : i32
    %c0_i32_0 = arith.constant 0 : i32
    %c0_i32_1 = arith.constant 0 : i32
    return %arg1, %c0_i32, %c0_i32_0 : i32, i32, i32
  }
  func.func @transform_8(%arg0: i32, %arg1: i32) -> (i32, i32, i32) {
    %c0_i32 = arith.constant 0 : i32
    %c0_i32_0 = arith.constant 0 : i32
    %c0_i32_1 = arith.constant 0 : i32
    return %arg1, %c0_i32, %c0_i32_0 : i32, i32, i32
  }
  func.func @transform_9(%arg0: i32, %arg1: i32) -> (i32, i32, i32) {
    %c0_i32 = arith.constant 0 : i32
    %c0_i32_0 = arith.constant 0 : i32
    %c0_i32_1 = arith.constant 0 : i32
    return %arg1, %c0_i32, %c0_i32_0 : i32, i32, i32
  }
  func.func @transform_10(%arg0: i32, %arg1: i32) -> (i32, i32, i32) {
    %c0_i32 = arith.constant 0 : i32
    %c0_i32_0 = arith.constant 0 : i32
    %c0_i32_1 = arith.constant 0 : i32
    return %arg1, %c0_i32, %c0_i32_0 : i32, i32, i32
  }
  func.func @transform_11(%arg0: i32, %arg1: i32) -> (i32, i32, i32) {
    %c0_i32 = arith.constant 0 : i32
    %c0_i32_0 = arith.constant 0 : i32
    %c0_i32_1 = arith.constant 0 : i32
    return %arg1, %c0_i32, %c0_i32_0 : i32, i32, i32
  }
  func.func @transform_12(%arg0: i32, %arg1: i32) -> (i32, i32, i32) {
    %c0_i32 = arith.constant 0 : i32
    %c0_i32_0 = arith.constant 0 : i32
    %c0_i32_1 = arith.constant 0 : i32
    return %arg1, %c0_i32, %c0_i32_0 : i32, i32, i32
  }
  func.func @transform_13(%arg0: i32, %arg1: i32) -> (i32, i32, i32) {
    %c0_i32 = arith.constant 0 : i32
    %c0_i32_0 = arith.constant 0 : i32
    %c0_i32_1 = arith.constant 0 : i32
    return %arg1, %c0_i32, %c0_i32_0 : i32, i32, i32
  }
  func.func @transform_14(%arg0: i32, %arg1: i32) -> (i32, i32, i32) {
    %c0_i32 = arith.constant 0 : i32
    %c0_i32_0 = arith.constant 0 : i32
    %c0_i32_1 = arith.constant 0 : i32
    return %arg1, %c0_i32, %c0_i32_0 : i32, i32, i32
  }
  func.func @transform_15(%arg0: i32, %arg1: i32) -> (i32, i32) {
    %c0_i32 = arith.constant 0 : i32
    %c0_i32_0 = arith.constant 0 : i32
    %c0_i32_1 = arith.constant 0 : i32
    return %c0_i32, %c0_i32_0 : i32, i32
  }
  func.func @transform_16(%arg0: i32, %arg1: i32) -> (i32, i32) {
    %c0_i32 = arith.constant 0 : i32
    %c0_i32_0 = arith.constant 0 : i32
    %c0_i32_1 = arith.constant 0 : i32
    return %c0_i32, %c0_i32_0 : i32, i32
  }
  func.func @transform_17(%arg0: i32, %arg1: i32) -> (i32, i32) {
    %c0_i32 = arith.constant 0 : i32
    %c0_i32_0 = arith.constant 0 : i32
    %c0_i32_1 = arith.constant 0 : i32
    return %c0_i32, %c0_i32_0 : i32, i32
  }
  func.func @transform_18(%arg0: i32, %arg1: i32) -> (i32, i32) {
    %c0_i32 = arith.constant 0 : i32
    %c0_i32_0 = arith.constant 0 : i32
    %c0_i32_1 = arith.constant 0 : i32
    return %c0_i32, %c0_i32_0 : i32, i32
  }
  func.func @transform_19(%arg0: i32, %arg1: i32) -> (i32, i32, i32) {
    %c0_i32 = arith.constant 0 : i32
    %c0_i32_0 = arith.constant 0 : i32
    %c0_i32_1 = arith.constant 0 : i32
    return %arg0, %c0_i32, %c0_i32_0 : i32, i32, i32
  }
}

</mosaic_0001>

<llo_original>
// kernel: vit_forward_impl.1
$region0: #{vit_forward_impl.1}
  #allocation0 [shape = 'u32[]', space=smem, size = 0x4, offset = 0x4, fixed_abs, tag = 'smem constant byte address 0x4 - core index']
  #allocation1 [shape = 'u32[144,128]{1,0:T(1,128)}', space=vmem, size = 0x12000, scoped, tag = 'internal scratch']
  #allocation2 [shape = 'f32[32,128]{1,0:T(8,128)}', space=vmem, size = 0x4000, scoped, tag = 'scratch operand']
  #allocation3 [shape = 'bf16[32,128]{1,0:T(16,128)(2,1)}', space=vmem, size = 0x2000, scoped, tag = 'scratch operand']
  %s0 = inlined_call_operand.vmem [shape: bf16[2,32,512], index: 0, kind: input, shape index: {}]
  %s1 = inlined_call_operand.vmem [shape: bf16[512,128], index: 1, kind: input, shape index: {}]
  %s2 = inlined_call_operand.vmem [shape: f32[32,128], index: 2, kind: input, shape index: {}]
  %s3 = inlined_call_operand.vmem [shape: f32[2,1,128], index: 3, kind: input, shape index: {}]
  %s4 = inlined_call_operand.vmem [shape: f32[2,1,128], index: 4, kind: input, shape index: {}]
  %s5 = inlined_call_operand.vmem [shape: bf16[2,128,384], index: 5, kind: input, shape index: {}]
  %s6 = inlined_call_operand.vmem [shape: f32[2,1,384], index: 6, kind: input, shape index: {}]
  %s7 = inlined_call_operand.vmem [shape: bf16[2,128,128], index: 7, kind: input, shape index: {}]
  %s8 = inlined_call_operand.vmem [shape: f32[2,1,128], index: 8, kind: input, shape index: {}]
  %s9 = inlined_call_operand.vmem [shape: f32[2,1,128], index: 9, kind: input, shape index: {}]
  %s10 = inlined_call_operand.vmem [shape: f32[2,1,128], index: 10, kind: input, shape index: {}]
  %s11 = inlined_call_operand.vmem [shape: bf16[2,128,512], index: 11, kind: input, shape index: {}]
  %s12 = inlined_call_operand.vmem [shape: f32[2,1,512], index: 12, kind: input, shape index: {}]
  %s13 = inlined_call_operand.vmem [shape: bf16[2,512,128], index: 13, kind: input, shape index: {}]
  %s14 = inlined_call_operand.vmem [shape: f32[2,1,128], index: 14, kind: input, shape index: {}]
  %s15 = inlined_call_operand.vmem [shape: f32[1,128], index: 15, kind: input, shape index: {}]
  %s16 = inlined_call_operand.vmem [shape: f32[1,128], index: 16, kind: input, shape index: {}]
  %s17 = inlined_call_operand.vmem [shape: bf16[128,128], index: 17, kind: input, shape index: {}]
  %s18 = inlined_call_operand.vmem [shape: f32[1,128], index: 18, kind: input, shape index: {}]
  %s19 = inlined_call_operand.vmem [shape: f32[2,8,128], index: 19, kind: output, shape index: {}]
  %s20 = sld [smem:[#allocation0]]
  $region117: #{vit_forward_impl.1} parent=0
    _
  %s22 = ssub.s32 1, %s20
  %s23 = scalar_select 0, %s22, %s20
  loop: start=0, step=1, limit=6
  $region2: #{vit_forward_impl.1} parent=0 // loop_pre_header
    _
  $region3: #{vit_forward_impl.1} parent=0 // loop_header
    %s25 = sphi 0, %s29
    %p26 = scmp.ge.s32.totalorder %s25, 6
    %s32 = sphi 0, %s44
    %s33 = sphi 0, %s40
    %s34 = sphi 0, %s32
    %s35 = sphi 0, %s33
    %s36 = sphi 0, %s34
    %s37 = sphi 0, %s35
    %s47 = sphi 0, %s49
    %s50 = sphi 0, %s47
    %s51 = sphi 0, %s50
    %s67 = sphi 0, %s51
    %s71 = sphi 0, %s71
    %s73 = sphi 0, %s71
    %s74 = sphi 0, %s73
    %s88 = sphi 0, %s74
    %s92 = sphi 0, %s92
    %s94 = sphi 0, %s92
    %s95 = sphi 0, %s94
    %s109 = sphi 0, %s95
    %s115 = sphi 0, %s117
    %s118 = sphi 0, %s115
    %s119 = sphi 0, %s118
    %s135 = sphi 0, %s119
    %s141 = sphi 0, %s143
    %s144 = sphi 0, %s141
    %s145 = sphi 0, %s144
    %s161 = sphi 0, %s145
    %s167 = sphi 0, %s169
    %s170 = sphi 0, %s167
    %s171 = sphi 0, %s170
    %s187 = sphi 0, %s171
    %s193 = sphi 0, %s195
    %s196 = sphi 0, %s193
    %s197 = sphi 0, %s196
    %s213 = sphi 0, %s197
    %s219 = sphi 0, %s221
    %s222 = sphi 0, %s219
    %s223 = sphi 0, %s222
    %s239 = sphi 0, %s223
    %s245 = sphi 0, %s247
    %s248 = sphi 0, %s245
    %s249 = sphi 0, %s248
    %s265 = sphi 0, %s249
    %s271 = sphi 0, %s273
    %s274 = sphi 0, %s271
    %s275 = sphi 0, %s274
    %s291 = sphi 0, %s275
    %s297 = sphi 0, %s299
    %s300 = sphi 0, %s297
    %s301 = sphi 0, %s300
    %s317 = sphi 0, %s301
    %s323 = sphi 0, %s325
    %s326 = sphi 0, %s323
    %s327 = sphi 0, %s326
    %s343 = sphi 0, %s327
    %s349 = sphi 0, %s351
    %s352 = sphi 0, %s349
    %s353 = sphi 0, %s352
    %s369 = sphi 0, %s353
    %s375 = sphi 0, %s377
    %s378 = sphi 0, %s375
    %s379 = sphi 0, %s378
    %s395 = sphi 0, %s379
    %s401 = sphi 0, %s403
    %s404 = sphi 0, %s401
    %s405 = sphi 0, %s404
    %s421 = sphi 0, %s405
    %s425 = sphi 0, %s425
    %s427 = sphi 0, %s425
    %s428 = sphi 0, %s427
    %s442 = sphi 0, %s428
    %s446 = sphi 0, %s446
    %s448 = sphi 0, %s446
    %s449 = sphi 0, %s448
    %s463 = sphi 0, %s449
    %s467 = sphi 0, %s467
    %s469 = sphi 0, %s467
    %s470 = sphi 0, %s469
    %s484 = sphi 0, %s470
    %s488 = sphi 0, %s488
    %s490 = sphi 0, %s488
    %s491 = sphi 0, %s490
    %s505 = sphi 0, %s491
    %s511 = sphi 0, %s513
    %s514 = sphi 0, %s511
    %s515 = sphi 0, %s514
    %s531 = sphi 0, %s515
  $region4: #{vit_forward_impl.1} parent=0 // loop_header_branch
    %28 = sbr.rel (%p26) target = $region8
  $region5: #{vit_forward_impl.1} parent=0 // loop_body
    %s30 = ssub.s32 %s25, 1
    %s31 = ssub.s32 %s25, 2
    %s38 = sadd.s32 1, %s33
    %p39 = scmp.ge.s32.totalorder %s38, 2
    %s40 = scalar_select %p39, 0, %s38
    %s41 = sadd.s32 1, %s32
    %s42 = scalar_select %p39, %s41, %s32
    %p43 = scmp.ge.s32.totalorder %s42, 2
    %s44 = scalar_select %p43, 0, %s42
    %s45 = ssub.s32 %s32, %s44
    %p46 = scmp.eq.s32.totalorder %s45, 0
    %s48 = sadd.s32 %s47, 1
    %s49 = scalar_select %p46, %s47, %s48
    %p52 = pneg %p46
    %p53 = scmp.eq.s32.totalorder %s25, 3
    %p54 = por %p52, %p53
    %p55 = scmp.ne.s32.totalorder %s47, %s50
    %p56 = scmp.eq.s32.totalorder %s25, 0
    %p57 = por %p55, %p56
    %p58 = scmp.ne.s32.totalorder %s47, %s50
    %p59 = scmp.eq.s32.totalorder %s30, 3
    %p60 = por %p58, %p59
    %p61 = scmp.ne.s32.totalorder %s50, %s51
    %p62 = scmp.eq.s32.totalorder %s30, 0
    %p63 = por %p61, %p62
    %p64 = scmp.ne.s32.totalorder %s50, %s51
    %p65 = scmp.eq.s32.totalorder %s31, 3
    %p66 = por %p64, %p65
    %p68 = scmp.ne.s32.totalorder %s51, %s67
    %p69 = scmp.eq.s32.totalorder %s31, 0
    %p70 = por %p68, %p69
    %s72 = sadd.s32 %s71, 1
    %p75 = scmp.eq.s32.totalorder %s25, 3
    %p76 = scmp.ne.s32.totalorder %s71, %s73
    %p77 = scmp.eq.s32.totalorder %s25, 0
    %p78 = por %p76, %p77
    %p79 = scmp.ne.s32.totalorder %s71, %s73
    %p80 = scmp.eq.s32.totalorder %s30, 3
    %p81 = por %p79, %p80
    %p82 = scmp.ne.s32.totalorder %s73, %s74
    %p83 = scmp.eq.s32.totalorder %s30, 0
    %p84 = por %p82, %p83
    %p85 = scmp.ne.s32.totalorder %s73, %s74
    %p86 = scmp.eq.s32.totalorder %s31, 3
    %p87 = por %p85, %p86
    %p89 = scmp.ne.s32.totalorder %s74, %s88
    %p90 = scmp.eq.s32.totalorder %s31, 0
    %p91 = por %p89, %p90
    %s93 = sadd.s32 %s92, 1
    %p96 = scmp.eq.s32.totalorder %s25, 3
    %p97 = scmp.ne.s32.totalorder %s92, %s94
    %p98 = scmp.eq.s32.totalorder %s25, 0
    %p99 = por %p97, %p98
    %p100 = scmp.ne.s32.totalorder %s92, %s94
    %p101 = scmp.eq.s32.totalorder %s30, 3
    %p102 = por %p100, %p101
    %p103 = scmp.ne.s32.totalorder %s94, %s95
    %p104 = scmp.eq.s32.totalorder %s30, 0
    %p105 = por %p103, %p104
    %p106 = scmp.ne.s32.totalorder %s94, %s95
    %p107 = scmp.eq.s32.totalorder %s31, 3
    %p108 = por %p106, %p107
    %p110 = scmp.ne.s32.totalorder %s95, %s109
    %p111 = scmp.eq.s32.totalorder %s31, 0
    %p112 = por %p110, %p111
    %s113 = ssub.s32 %s33, %s40
    %p114 = scmp.eq.s32.totalorder %s113, 0
    %s116 = sadd.s32 %s115, 1
    %s117 = scalar_select %p114, %s115, %s116
    %p120 = pneg %p114
    %p121 = scmp.eq.s32.totalorder %s25, 3
    %p122 = por %p120, %p121
    %p123 = scmp.ne.s32.totalorder %s115, %s118
    %p124 = scmp.eq.s32.totalorder %s25, 0
    %p125 = por %p123, %p124
    %p126 = scmp.ne.s32.totalorder %s115, %s118
    %p127 = scmp.eq.s32.totalorder %s30, 3
    %p128 = por %p126, %p127
    %p129 = scmp.ne.s32.totalorder %s118, %s119
    %p130 = scmp.eq.s32.totalorder %s30, 0
    %p131 = por %p129, %p130
    %p132 = scmp.ne.s32.totalorder %s118, %s119
    %p133 = scmp.eq.s32.totalorder %s31, 3
    %p134 = por %p132, %p133
    %p136 = scmp.ne.s32.totalorder %s119, %s135
    %p137 = scmp.eq.s32.totalorder %s31, 0
    %p138 = por %p136, %p137
    %s139 = ssub.s32 %s33, %s40
    %p140 = scmp.eq.s32.totalorder %s139, 0
    %s142 = sadd.s32 %s141, 1
    %s143 = scalar_select %p140, %s141, %s142
    %p146 = pneg %p140
    %p147 = scmp.eq.s32.totalorder %s25, 3
    %p148 = por %p146, %p147
    %p149 = scmp.ne.s32.totalorder %s141, %s144
    %p150 = scmp.eq.s32.totalorder %s25, 0
    %p151 = por %p149, %p150
    %p152 = scmp.ne.s32.totalorder %s141, %s144
    %p153 = scmp.eq.s32.totalorder %s30, 3
    %p154 = por %p152, %p153
    %p155 = scmp.ne.s32.totalorder %s144, %s145
    %p156 = scmp.eq.s32.totalorder %s30, 0
    %p157 = por %p155, %p156
    %p158 = scmp.ne.s32.totalorder %s144, %s145
    %p159 = scmp.eq.s32.totalorder %s31, 3
    %p160 = por %p158, %p159
    %p162 = scmp.ne.s32.totalorder %s145, %s161
    %p163 = scmp.eq.s32.totalorder %s31, 0
    %p164 = por %p162, %p163
    %s165 = ssub.s32 %s33, %s40
    %p166 = scmp.eq.s32.totalorder %s165, 0
    %s168 = sadd.s32 %s167, 1
    %s169 = scalar_select %p166, %s167, %s168
    %p172 = pneg %p166
    %p173 = scmp.eq.s32.totalorder %s25, 3
    %p174 = por %p172, %p173
    %p175 = scmp.ne.s32.totalorder %s167, %s170
    %p176 = scmp.eq.s32.totalorder %s25, 0
    %p177 = por %p175, %p176
    %p178 = scmp.ne.s32.totalorder %s167, %s170
    %p179 = scmp.eq.s32.totalorder %s30, 3
    %p180 = por %p178, %p179
    %p181 = scmp.ne.s32.totalorder %s170, %s171
    %p182 = scmp.eq.s32.totalorder %s30, 0
    %p183 = por %p181, %p182
    %p184 = scmp.ne.s32.totalorder %s170, %s171
    %p185 = scmp.eq.s32.totalorder %s31, 3
    %p186 = por %p184, %p185
    %p188 = scmp.ne.s32.totalorder %s171, %s187
    %p189 = scmp.eq.s32.totalorder %s31, 0
    %p190 = por %p188, %p189
    %s191 = ssub.s32 %s33, %s40
    %p192 = scmp.eq.s32.totalorder %s191, 0
    %s194 = sadd.s32 %s193, 1
    %s195 = scalar_select %p192, %s193, %s194
    %p198 = pneg %p192
    %p199 = scmp.eq.s32.totalorder %s25, 3
    %p200 = por %p198, %p199
    %p201 = scmp.ne.s32.totalorder %s193, %s196
    %p202 = scmp.eq.s32.totalorder %s25, 0
    %p203 = por %p201, %p202
    %p204 = scmp.ne.s32.totalorder %s193, %s196
    %p205 = scmp.eq.s32.totalorder %s30, 3
    %p206 = por %p204, %p205
    %p207 = scmp.ne.s32.totalorder %s196, %s197
    %p208 = scmp.eq.s32.totalorder %s30, 0
    %p209 = por %p207, %p208
    %p210 = scmp.ne.s32.totalorder %s196, %s197
    %p211 = scmp.eq.s32.totalorder %s31, 3
    %p212 = por %p210, %p211
    %p214 = scmp.ne.s32.totalorder %s197, %s213
    %p215 = scmp.eq.s32.totalorder %s31, 0
    %p216 = por %p214, %p215
    %s217 = ssub.s32 %s33, %s40
    %p218 = scmp.eq.s32.totalorder %s217, 0
    %s220 = sadd.s32 %s219, 1
    %s221 = scalar_select %p218, %s219, %s220
    %p224 = pneg %p218
    %p225 = scmp.eq.s32.totalorder %s25, 3
    %p226 = por %p224, %p225
    %p227 = scmp.ne.s32.totalorder %s219, %s222
    %p228 = scmp.eq.s32.totalorder %s25, 0
    %p229 = por %p227, %p228
    %p230 = scmp.ne.s32.totalorder %s219, %s222
    %p231 = scmp.eq.s32.totalorder %s30, 3
    %p232 = por %p230, %p231
    %p233 = scmp.ne.s32.totalorder %s222, %s223
    %p234 = scmp.eq.s32.totalorder %s30, 0
    %p235 = por %p233, %p234
    %p236 = scmp.ne.s32.totalorder %s222, %s223
    %p237 = scmp.eq.s32.totalorder %s31, 3
    %p238 = por %p236, %p237
    %p240 = scmp.ne.s32.totalorder %s223, %s239
    %p241 = scmp.eq.s32.totalorder %s31, 0
    %p242 = por %p240, %p241
    %s243 = ssub.s32 %s33, %s40
    %p244 = scmp.eq.s32.totalorder %s243, 0
    %s246 = sadd.s32 %s245, 1
    %s247 = scalar_select %p244, %s245, %s246
    %p250 = pneg %p244
    %p251 = scmp.eq.s32.totalorder %s25, 3
    %p252 = por %p250, %p251
    %p253 = scmp.ne.s32.totalorder %s245, %s248
    %p254 = scmp.eq.s32.totalorder %s25, 0
    %p255 = por %p253, %p254
    %p256 = scmp.ne.s32.totalorder %s245, %s248
    %p257 = scmp.eq.s32.totalorder %s30, 3
    %p258 = por %p256, %p257
    %p259 = scmp.ne.s32.totalorder %s248, %s249
    %p260 = scmp.eq.s32.totalorder %s30, 0
    %p261 = por %p259, %p260
    %p262 = scmp.ne.s32.totalorder %s248, %s249
    %p263 = scmp.eq.s32.totalorder %s31, 3
    %p264 = por %p262, %p263
    %p266 = scmp.ne.s32.totalorder %s249, %s265
    %p267 = scmp.eq.s32.totalorder %s31, 0
    %p268 = por %p266, %p267
    %s269 = ssub.s32 %s33, %s40
    %p270 = scmp.eq.s32.totalorder %s269, 0
    %s272 = sadd.s32 %s271, 1
    %s273 = scalar_select %p270, %s271, %s272
    %p276 = pneg %p270
    %p277 = scmp.eq.s32.totalorder %s25, 3
    %p278 = por %p276, %p277
    %p279 = scmp.ne.s32.totalorder %s271, %s274
    %p280 = scmp.eq.s32.totalorder %s25, 0
    %p281 = por %p279, %p280
    %p282 = scmp.ne.s32.totalorder %s271, %s274
    %p283 = scmp.eq.s32.totalorder %s30, 3
    %p284 = por %p282, %p283
    %p285 = scmp.ne.s32.totalorder %s274, %s275
    %p286 = scmp.eq.s32.totalorder %s30, 0
    %p287 = por %p285, %p286
    %p288 = scmp.ne.s32.totalorder %s274, %s275
    %p289 = scmp.eq.s32.totalorder %s31, 3
    %p290 = por %p288, %p289
    %p292 = scmp.ne.s32.totalorder %s275, %s291
    %p293 = scmp.eq.s32.totalorder %s31, 0
    %p294 = por %p292, %p293
    %s295 = ssub.s32 %s33, %s40
    %p296 = scmp.eq.s32.totalorder %s295, 0
    %s298 = sadd.s32 %s297, 1
    %s299 = scalar_select %p296, %s297, %s298
    %p302 = pneg %p296
    %p303 = scmp.eq.s32.totalorder %s25, 3
    %p304 = por %p302, %p303
    %p305 = scmp.ne.s32.totalorder %s297, %s300
    %p306 = scmp.eq.s32.totalorder %s25, 0
    %p307 = por %p305, %p306
    %p308 = scmp.ne.s32.totalorder %s297, %s300
    %p309 = scmp.eq.s32.totalorder %s30, 3
    %p310 = por %p308, %p309
    %p311 = scmp.ne.s32.totalorder %s300, %s301
    %p312 = scmp.eq.s32.totalorder %s30, 0
    %p313 = por %p311, %p312
    %p314 = scmp.ne.s32.totalorder %s300, %s301
    %p315 = scmp.eq.s32.totalorder %s31, 3
    %p316 = por %p314, %p315
    %p318 = scmp.ne.s32.totalorder %s301, %s317
    %p319 = scmp.eq.s32.totalorder %s31, 0
    %p320 = por %p318, %p319
    %s321 = ssub.s32 %s33, %s40
    %p322 = scmp.eq.s32.totalorder %s321, 0
    %s324 = sadd.s32 %s323, 1
    %s325 = scalar_select %p322, %s323, %s324
    %p328 = pneg %p322
    %p329 = scmp.eq.s32.totalorder %s25, 3
    %p330 = por %p328, %p329
    %p331 = scmp.ne.s32.totalorder %s323, %s326
    %p332 = scmp.eq.s32.totalorder %s25, 0
    %p333 = por %p331, %p332
    %p334 = scmp.ne.s32.totalorder %s323, %s326
    %p335 = scmp.eq.s32.totalorder %s30, 3
    %p336 = por %p334, %p335
    %p337 = scmp.ne.s32.totalorder %s326, %s327
    %p338 = scmp.eq.s32.totalorder %s30, 0
    %p339 = por %p337, %p338
    %p340 = scmp.ne.s32.totalorder %s326, %s327
    %p341 = scmp.eq.s32.totalorder %s31, 3
    %p342 = por %p340, %p341
    %p344 = scmp.ne.s32.totalorder %s327, %s343
    %p345 = scmp.eq.s32.totalorder %s31, 0
    %p346 = por %p344, %p345
    %s347 = ssub.s32 %s33, %s40
    %p348 = scmp.eq.s32.totalorder %s347, 0
    %s350 = sadd.s32 %s349, 1
    %s351 = scalar_select %p348, %s349, %s350
    %p354 = pneg %p348
    %p355 = scmp.eq.s32.totalorder %s25, 3
    %p356 = por %p354, %p355
    %p357 = scmp.ne.s32.totalorder %s349, %s352
    %p358 = scmp.eq.s32.totalorder %s25, 0
    %p359 = por %p357, %p358
    %p360 = scmp.ne.s32.totalorder %s349, %s352
    %p361 = scmp.eq.s32.totalorder %s30, 3
    %p362 = por %p360, %p361
    %p363 = scmp.ne.s32.totalorder %s352, %s353
    %p364 = scmp.eq.s32.totalorder %s30, 0
    %p365 = por %p363, %p364
    %p366 = scmp.ne.s32.totalorder %s352, %s353
    %p367 = scmp.eq.s32.totalorder %s31, 3
    %p368 = por %p366, %p367
    %p370 = scmp.ne.s32.totalorder %s353, %s369
    %p371 = scmp.eq.s32.totalorder %s31, 0
    %p372 = por %p370, %p371
    %s373 = ssub.s32 %s33, %s40
    %p374 = scmp.eq.s32.totalorder %s373, 0
    %s376 = sadd.s32 %s375, 1
    %s377 = scalar_select %p374, %s375, %s376
    %p380 = pneg %p374
    %p381 = scmp.eq.s32.totalorder %s25, 3
    %p382 = por %p380, %p381
    %p383 = scmp.ne.s32.totalorder %s375, %s378
    %p384 = scmp.eq.s32.totalorder %s25, 0
    %p385 = por %p383, %p384
    %p386 = scmp.ne.s32.totalorder %s375, %s378
    %p387 = scmp.eq.s32.totalorder %s30, 3
    %p388 = por %p386, %p387
    %p389 = scmp.ne.s32.totalorder %s378, %s379
    %p390 = scmp.eq.s32.totalorder %s30, 0
    %p391 = por %p389, %p390
    %p392 = scmp.ne.s32.totalorder %s378, %s379
    %p393 = scmp.eq.s32.totalorder %s31, 3
    %p394 = por %p392, %p393
    %p396 = scmp.ne.s32.totalorder %s379, %s395
    %p397 = scmp.eq.s32.totalorder %s31, 0
    %p398 = por %p396, %p397
    %s399 = ssub.s32 %s33, %s40
    %p400 = scmp.eq.s32.totalorder %s399, 0
    %s402 = sadd.s32 %s401, 1
    %s403 = scalar_select %p400, %s401, %s402
    %p406 = pneg %p400
    %p407 = scmp.eq.s32.totalorder %s25, 3
    %p408 = por %p406, %p407
    %p409 = scmp.ne.s32.totalorder %s401, %s404
    %p410 = scmp.eq.s32.totalorder %s25, 0
    %p411 = por %p409, %p410
    %p412 = scmp.ne.s32.totalorder %s401, %s404
    %p413 = scmp.eq.s32.totalorder %s30, 3
    %p414 = por %p412, %p413
    %p415 = scmp.ne.s32.totalorder %s404, %s405
    %p416 = scmp.eq.s32.totalorder %s30, 0
    %p417 = por %p415, %p416
    %p418 = scmp.ne.s32.totalorder %s404, %s405
    %p419 = scmp.eq.s32.totalorder %s31, 3
    %p420 = por %p418, %p419
    %p422 = scmp.ne.s32.totalorder %s405, %s421
    %p423 = scmp.eq.s32.totalorder %s31, 0
    %p424 = por %p422, %p423
    %s426 = sadd.s32 %s425, 1
    %p429 = scmp.eq.s32.totalorder %s25, 3
    %p430 = scmp.ne.s32.totalorder %s425, %s427
    %p431 = scmp.eq.s32.totalorder %s25, 0
    %p432 = por %p430, %p431
    %p433 = scmp.ne.s32.totalorder %s425, %s427
    %p434 = scmp.eq.s32.totalorder %s30, 3
    %p435 = por %p433, %p434
    %p436 = scmp.ne.s32.totalorder %s427, %s428
    %p437 = scmp.eq.s32.totalorder %s30, 0
    %p438 = por %p436, %p437
    %p439 = scmp.ne.s32.totalorder %s427, %s428
    %p440 = scmp.eq.s32.totalorder %s31, 3
    %p441 = por %p439, %p440
    %p443 = scmp.ne.s32.totalorder %s428, %s442
    %p444 = scmp.eq.s32.totalorder %s31, 0
    %p445 = por %p443, %p444
    %s447 = sadd.s32 %s446, 1
    %p450 = scmp.eq.s32.totalorder %s25, 3
    %p451 = scmp.ne.s32.totalorder %s446, %s448
    %p452 = scmp.eq.s32.totalorder %s25, 0
    %p453 = por %p451, %p452
    %p454 = scmp.ne.s32.totalorder %s446, %s448
    %p455 = scmp.eq.s32.totalorder %s30, 3
    %p456 = por %p454, %p455
    %p457 = scmp.ne.s32.totalorder %s448, %s449
    %p458 = scmp.eq.s32.totalorder %s30, 0
    %p459 = por %p457, %p458
    %p460 = scmp.ne.s32.totalorder %s448, %s449
    %p461 = scmp.eq.s32.totalorder %s31, 3
    %p462 = por %p460, %p461
    %p464 = scmp.ne.s32.totalorder %s449, %s463
    %p465 = scmp.eq.s32.totalorder %s31, 0
    %p466 = por %p464, %p465
    %s468 = sadd.s32 %s467, 1
    %p471 = scmp.eq.s32.totalorder %s25, 3
    %p472 = scmp.ne.s32.totalorder %s467, %s469
    %p473 = scmp.eq.s32.totalorder %s25, 0
    %p474 = por %p472, %p473
    %p475 = scmp.ne.s32.totalorder %s467, %s469
    %p476 = scmp.eq.s32.totalorder %s30, 3
    %p477 = por %p475, %p476
    %p478 = scmp.ne.s32.totalorder %s469, %s470
    %p479 = scmp.eq.s32.totalorder %s30, 0
    %p480 = por %p478, %p479
    %p481 = scmp.ne.s32.totalorder %s469, %s470
    %p482 = scmp.eq.s32.totalorder %s31, 3
    %p483 = por %p481, %p482
    %p485 = scmp.ne.s32.totalorder %s470, %s484
    %p486 = scmp.eq.s32.totalorder %s31, 0
    %p487 = por %p485, %p486
    %s489 = sadd.s32 %s488, 1
    %p492 = scmp.eq.s32.totalorder %s25, 3
    %p493 = scmp.ne.s32.totalorder %s488, %s490
    %p494 = scmp.eq.s32.totalorder %s25, 0
    %p495 = por %p493, %p494
    %p496 = scmp.ne.s32.totalorder %s488, %s490
    %p497 = scmp.eq.s32.totalorder %s30, 3
    %p498 = por %p496, %p497
    %p499 = scmp.ne.s32.totalorder %s490, %s491
    %p500 = scmp.eq.s32.totalorder %s30, 0
    %p501 = por %p499, %p500
    %p502 = scmp.ne.s32.totalorder %s490, %s491
    %p503 = scmp.eq.s32.totalorder %s31, 3
    %p504 = por %p502, %p503
    %p506 = scmp.ne.s32.totalorder %s491, %s505
    %p507 = scmp.eq.s32.totalorder %s31, 0
    %p508 = por %p506, %p507
    %s509 = ssub.s32 %s32, %s44
    %p510 = scmp.eq.s32.totalorder %s509, 0
    %s512 = sadd.s32 %s511, 1
    %s513 = scalar_select %p510, %s511, %s512
    %p516 = pneg %p510
    %p517 = scmp.eq.s32.totalorder %s25, 3
    %p518 = por %p516, %p517
    %p519 = scmp.ne.s32.totalorder %s511, %s514
    %p520 = scmp.eq.s32.totalorder %s25, 0
    %p521 = por %p519, %p520
    %p522 = scmp.ne.s32.totalorder %s511, %s514
    %p523 = scmp.eq.s32.totalorder %s30, 3
    %p524 = por %p522, %p523
    %p525 = scmp.ne.s32.totalorder %s514, %s515
    %p526 = scmp.eq.s32.totalorder %s30, 0
    %p527 = por %p525, %p526
    %p528 = scmp.ne.s32.totalorder %s514, %s515
    %p529 = scmp.eq.s32.totalorder %s31, 3
    %p530 = por %p528, %p529
    %p532 = scmp.ne.s32.totalorder %s515, %s531
    %p533 = scmp.eq.s32.totalorder %s31, 0
    %p534 = por %p532, %p533
    %p535 = scmp.le.s32.totalorder 1, %s25
    %p536 = scmp.lt.s32.totalorder %s25, 5
    %p537 = pnand %p535, %p536
    %p538 = pneg %p537
    // Predicated region
    $region9: #{vit_forward_impl.1} parent=5 // pred_check
      _
    $region10: #{vit_forward_impl.1} parent=5 // pred_check_branch
      %540 = sbr.rel (%p537) target = $region12
    $region11: #{vit_forward_impl.1} parent=5 // pred_region
      %s541 = ssub.s32 %s25, 1
      // Predicated region
      $region13: #{vit_forward_impl.1} parent=11 // pred_check
        %p542 = pneg %p84
      $region14: #{vit_forward_impl.1} parent=11 // pred_check_branch
        %544 = sbr.rel (%p542) target = $region16
      $region15: #{vit_forward_impl.1} parent=11 // pred_region
        _
      $region16: #{vit_forward_impl.1} parent=11 // pred_fallthru
        _
      // Predicated region
      $region17: #{vit_forward_impl.1} parent=11 // pred_check
        %p545 = pneg %p105
      $region18: #{vit_forward_impl.1} parent=11 // pred_check_branch
        %547 = sbr.rel (%p545) target = $region20
      $region19: #{vit_forward_impl.1} parent=11 // pred_region
        _
      $region20: #{vit_forward_impl.1} parent=11 // pred_fallthru
        _
      // Predicated region
      $region21: #{vit_forward_impl.1} parent=11 // pred_check
        %p548 = pneg %p438
      $region22: #{vit_forward_impl.1} parent=11 // pred_check_branch
        %550 = sbr.rel (%p548) target = $region24
      $region23: #{vit_forward_impl.1} parent=11 // pred_region
        _
      $region24: #{vit_forward_impl.1} parent=11 // pred_fallthru
        _
      // Predicated region
      $region25: #{vit_forward_impl.1} parent=11 // pred_check
        %p551 = pneg %p459
      $region26: #{vit_forward_impl.1} parent=11 // pred_check_branch
        %553 = sbr.rel (%p551) target = $region28
      $region27: #{vit_forward_impl.1} parent=11 // pred_region
        _
      $region28: #{vit_forward_impl.1} parent=11 // pred_fallthru
        _
      // Predicated region
      $region29: #{vit_forward_impl.1} parent=11 // pred_check
        %p554 = pneg %p480
      $region30: #{vit_forward_impl.1} parent=11 // pred_check_branch
        %556 = sbr.rel (%p554) target = $region32
      $region31: #{vit_forward_impl.1} parent=11 // pred_region
        _
      $region32: #{vit_forward_impl.1} parent=11 // pred_fallthru
        _
      // Predicated region
      $region33: #{vit_forward_impl.1} parent=11 // pred_check
        %p557 = pneg %p501
      $region34: #{vit_forward_impl.1} parent=11 // pred_check_branch
        %559 = sbr.rel (%p557) target = $region36
      $region35: #{vit_forward_impl.1} parent=11 // pred_region
        _
      $region36: #{vit_forward_impl.1} parent=11 // pred_fallthru
        _
    $region12: #{vit_forward_impl.1} parent=5 // pred_fallthru
      _
    %p560 = scmp.lt.s32.totalorder %s25, 4
    // Predicated region
    $region37: #{vit_forward_impl.1} parent=5 // pred_check
      %p561 = pneg %p560
    $region38: #{vit_forward_impl.1} parent=5 // pred_check_branch
      %563 = sbr.rel (%p561) target = $region40
    $region39: #{vit_forward_impl.1} parent=5 // pred_region
      // Predicated region
      $region41: #{vit_forward_impl.1} parent=39 // pred_check
        %p564 = pneg %p57
      $region42: #{vit_forward_impl.1} parent=39 // pred_check_branch
        %566 = sbr.rel (%p564) target = $region44
      $region43: #{vit_forward_impl.1} parent=39 // pred_region
        %p567 = scmp.lt.s32.totalorder %s32, 1
        %s568 = scalar_select %p567, %s32, 1
        %s569 = smul.addr %s568, 16
        %s570 = smul.addr %s569, 4
        %s571 = scalar_lea.vmem %s0, %s570
      $region44: #{vit_forward_impl.1} parent=39 // pred_fallthru
        _
      // Predicated region
      $region45: #{vit_forward_impl.1} parent=39 // pred_check
        %p572 = pneg %p125
      $region46: #{vit_forward_impl.1} parent=39 // pred_check_branch
        %574 = sbr.rel (%p572) target = $region48
      $region47: #{vit_forward_impl.1} parent=39 // pred_region
        %p575 = scmp.lt.s32.totalorder %s33, 1
        %s576 = scalar_select %p575, %s33, 1
        %s577 = scalar_lea.vmem %s3, %s576
      $region48: #{vit_forward_impl.1} parent=39 // pred_fallthru
        _
      // Predicated region
      $region49: #{vit_forward_impl.1} parent=39 // pred_check
        %p578 = pneg %p151
      $region50: #{vit_forward_impl.1} parent=39 // pred_check_branch
        %580 = sbr.rel (%p578) target = $region52
      $region51: #{vit_forward_impl.1} parent=39 // pred_region
        %p581 = scmp.lt.s32.totalorder %s33, 1
        %s582 = scalar_select %p581, %s33, 1
        %s583 = scalar_lea.vmem %s4, %s582
      $region52: #{vit_forward_impl.1} parent=39 // pred_fallthru
        _
      // Predicated region
      $region53: #{vit_forward_impl.1} parent=39 // pred_check
        %p584 = pneg %p177
      $region54: #{vit_forward_impl.1} parent=39 // pred_check_branch
        %586 = sbr.rel (%p584) target = $region56
      $region55: #{vit_forward_impl.1} parent=39 // pred_region
        %p587 = scmp.lt.s32.totalorder %s33, 1
        %s588 = scalar_select %p587, %s33, 1
        %s589 = smul.addr %s588, 48
        %s590 = smul.addr %s589, 4
        %s591 = scalar_lea.vmem %s5, %s590
      $region56: #{vit_forward_impl.1} parent=39 // pred_fallthru
        _
      // Predicated region
      $region57: #{vit_forward_impl.1} parent=39 // pred_check
        %p592 = pneg %p203
      $region58: #{vit_forward_impl.1} parent=39 // pred_check_branch
        %594 = sbr.rel (%p592) target = $region60
      $region59: #{vit_forward_impl.1} parent=39 // pred_region
        %p595 = scmp.lt.s32.totalorder %s33, 1
        %s596 = scalar_select %p595, %s33, 1
        %s597 = smul.addr %s596, 3
        %s598 = scalar_lea.vmem %s6, %s597
      $region60: #{vit_forward_impl.1} parent=39 // pred_fallthru
        _
      // Predicated region
      $region61: #{vit_forward_impl.1} parent=39 // pred_check
        %p599 = pneg %p229
      $region62: #{vit_forward_impl.1} parent=39 // pred_check_branch
        %601 = sbr.rel (%p599) target = $region64
      $region63: #{vit_forward_impl.1} parent=39 // pred_region
        %p602 = scmp.lt.s32.totalorder %s33, 1
        %s603 = scalar_select %p602, %s33, 1
        %s604 = smul.addr %s603, 16
        %s605 = smul.addr %s604, 4
        %s606 = scalar_lea.vmem %s7, %s605
      $region64: #{vit_forward_impl.1} parent=39 // pred_fallthru
        _
      // Predicated region
      $region65: #{vit_forward_impl.1} parent=39 // pred_check
        %p607 = pneg %p255
      $region66: #{vit_forward_impl.1} parent=39 // pred_check_branch
        %609 = sbr.rel (%p607) target = $region68
      $region67: #{vit_forward_impl.1} parent=39 // pred_region
        %p610 = scmp.lt.s32.totalorder %s33, 1
        %s611 = scalar_select %p610, %s33, 1
        %s612 = scalar_lea.vmem %s8, %s611
      $region68: #{vit_forward_impl.1} parent=39 // pred_fallthru
        _
      // Predicated region
      $region69: #{vit_forward_impl.1} parent=39 // pred_check
        %p613 = pneg %p281
      $region70: #{vit_forward_impl.1} parent=39 // pred_check_branch
        %615 = sbr.rel (%p613) target = $region72
      $region71: #{vit_forward_impl.1} parent=39 // pred_region
        %p616 = scmp.lt.s32.totalorder %s33, 1
        %s617 = scalar_select %p616, %s33, 1
        %s618 = scalar_lea.vmem %s9, %s617
      $region72: #{vit_forward_impl.1} parent=39 // pred_fallthru
        _
      // Predicated region
      $region73: #{vit_forward_impl.1} parent=39 // pred_check
        %p619 = pneg %p307
      $region74: #{vit_forward_impl.1} parent=39 // pred_check_branch
        %621 = sbr.rel (%p619) target = $region76
      $region75: #{vit_forward_impl.1} parent=39 // pred_region
        %p622 = scmp.lt.s32.totalorder %s33, 1
        %s623 = scalar_select %p622, %s33, 1
        %s624 = scalar_lea.vmem %s10, %s623
      $region76: #{vit_forward_impl.1} parent=39 // pred_fallthru
        _
      // Predicated region
      $region77: #{vit_forward_impl.1} parent=39 // pred_check
        %p625 = pneg %p333
      $region78: #{vit_forward_impl.1} parent=39 // pred_check_branch
        %627 = sbr.rel (%p625) target = $region80
      $region79: #{vit_forward_impl.1} parent=39 // pred_region
        %p628 = scmp.lt.s32.totalorder %s33, 1
        %s629 = scalar_select %p628, %s33, 1
        %s630 = smul.addr %s629, 64
        %s631 = smul.addr %s630, 4
        %s632 = scalar_lea.vmem %s11, %s631
      $region80: #{vit_forward_impl.1} parent=39 // pred_fallthru
        _
      // Predicated region
      $region81: #{vit_forward_impl.1} parent=39 // pred_check
        %p633 = pneg %p359
      $region82: #{vit_forward_impl.1} parent=39 // pred_check_branch
        %635 = sbr.rel (%p633) target = $region84
      $region83: #{vit_forward_impl.1} parent=39 // pred_region
        %p636 = scmp.lt.s32.totalorder %s33, 1
        %s637 = scalar_select %p636, %s33, 1
        %s638 = smul.addr %s637, 4
        %s639 = scalar_lea.vmem %s12, %s638
      $region84: #{vit_forward_impl.1} parent=39 // pred_fallthru
        _
      // Predicated region
      $region85: #{vit_forward_impl.1} parent=39 // pred_check
        %p640 = pneg %p385
      $region86: #{vit_forward_impl.1} parent=39 // pred_check_branch
        %642 = sbr.rel (%p640) target = $region88
      $region87: #{vit_forward_impl.1} parent=39 // pred_region
        %p643 = scmp.lt.s32.totalorder %s33, 1
        %s644 = scalar_select %p643, %s33, 1
        %s645 = smul.addr %s644, 64
        %s646 = smul.addr %s645, 4
        %s647 = scalar_lea.vmem %s13, %s646
      $region88: #{vit_forward_impl.1} parent=39 // pred_fallthru
        _
      // Predicated region
      $region89: #{vit_forward_impl.1} parent=39 // pred_check
        %p648 = pneg %p411
      $region90: #{vit_forward_impl.1} parent=39 // pred_check_branch
        %650 = sbr.rel (%p648) target = $region92
      $region91: #{vit_forward_impl.1} parent=39 // pred_region
        %p651 = scmp.lt.s32.totalorder %s33, 1
        %s652 = scalar_select %p651, %s33, 1
        %s653 = scalar_lea.vmem %s14, %s652
      $region92: #{vit_forward_impl.1} parent=39 // pred_fallthru
        _
    $region40: #{vit_forward_impl.1} parent=5 // pred_fallthru
      _
    %p654 = scmp.le.s32.totalorder 1, %s25
    %p655 = scmp.lt.s32.totalorder %s25, 5
    %p656 = pnand %p654, %p655
    %p657 = pneg %p656
    // Predicated region
    $region93: #{vit_forward_impl.1} parent=5 // pred_check
      _
    $region94: #{vit_forward_impl.1} parent=5 // pred_check_branch
      %659 = sbr.rel (%p656) target = $region96
    $region95: #{vit_forward_impl.1} parent=5 // pred_region
      %s660 = ssub.s32 %s25, 1
      %p661 = scmp.lt.s32.totalorder %s34, 1
      %s662 = scalar_select %p661, %s34, 1
      %s663 = smul.addr %s662, 16
      %s664 = smul.addr %s663, 4
      %s665 = scalar_lea.vmem %s0, %s664
      %p666 = pneg %p63
      %p667 = pneg %p60
      %p668 = pneg %p84
      %p669 = pneg %p81
      %p670 = pneg %p105
      %p671 = pneg %p102
      %p672 = scmp.lt.s32.totalorder %s35, 1
      %s673 = scalar_select %p672, %s35, 1
      %s674 = scalar_lea.vmem %s3, %s673
      %p675 = pneg %p131
      %p676 = pneg %p128
      %p677 = scmp.lt.s32.totalorder %s35, 1
      %s678 = scalar_select %p677, %s35, 1
      %s679 = scalar_lea.vmem %s4, %s678
      %p680 = pneg %p157
      %p681 = pneg %p154
      %p682 = scmp.lt.s32.totalorder %s35, 1
      %s683 = scalar_select %p682, %s35, 1
      %s684 = smul.addr %s683, 48
      %s685 = smul.addr %s684, 4
      %s686 = scalar_lea.vmem %s5, %s685
      %p687 = pneg %p183
      %p688 = pneg %p180
      %p689 = scmp.lt.s32.totalorder %s35, 1
      %s690 = scalar_select %p689, %s35, 1
      %s691 = smul.addr %s690, 3
      %s692 = scalar_lea.vmem %s6, %s691
      %p693 = pneg %p209
      %p694 = pneg %p206
      %p695 = scmp.lt.s32.totalorder %s35, 1
      %s696 = scalar_select %p695, %s35, 1
      %s697 = smul.addr %s696, 16
      %s698 = smul.addr %s697, 4
      %s699 = scalar_lea.vmem %s7, %s698
      %p700 = pneg %p235
      %p701 = pneg %p232
      %p702 = scmp.lt.s32.totalorder %s35, 1
      %s703 = scalar_select %p702, %s35, 1
      %s704 = scalar_lea.vmem %s8, %s703
      %p705 = pneg %p261
      %p706 = pneg %p258
      %p707 = scmp.lt.s32.totalorder %s35, 1
      %s708 = scalar_select %p707, %s35, 1
      %s709 = scalar_lea.vmem %s9, %s708
      %p710 = pneg %p287
      %p711 = pneg %p284
      %p712 = scmp.lt.s32.totalorder %s35, 1
      %s713 = scalar_select %p712, %s35, 1
      %s714 = scalar_lea.vmem %s10, %s713
      %p715 = pneg %p313
      %p716 = pneg %p310
      %p717 = scmp.lt.s32.totalorder %s35, 1
      %s718 = scalar_select %p717, %s35, 1
      %s719 = smul.addr %s718, 64
      %s720 = smul.addr %s719, 4
      %s721 = scalar_lea.vmem %s11, %s720
      %p722 = pneg %p339
      %p723 = pneg %p336
      %p724 = scmp.lt.s32.totalorder %s35, 1
      %s725 = scalar_select %p724, %s35, 1
      %s726 = smul.addr %s725, 4
      %s727 = scalar_lea.vmem %s12, %s726
      %p728 = pneg %p365
      %p729 = pneg %p362
      %p730 = scmp.lt.s32.totalorder %s35, 1
      %s731 = scalar_select %p730, %s35, 1
      %s732 = smul.addr %s731, 64
      %s733 = smul.addr %s732, 4
      %s734 = scalar_lea.vmem %s13, %s733
      %p735 = pneg %p391
      %p736 = pneg %p388
      %p737 = scmp.lt.s32.totalorder %s35, 1
      %s738 = scalar_select %p737, %s35, 1
      %s739 = scalar_lea.vmem %s14, %s738
      %p740 = pneg %p417
      %p741 = pneg %p414
      %p742 = pneg %p438
      %p743 = pneg %p435
      %p744 = pneg %p459
      %p745 = pneg %p456
      %p746 = pneg %p480
      %p747 = pneg %p477
      %p748 = pneg %p501
      %p749 = pneg %p498
      %p750 = pneg %p527
      %p751 = pneg %p524
      %p752 = scmp.lt.s32.totalorder %s34, 1
      %s753 = scalar_select %p752, %s34, 1
      %s754 = smul.addr %s753, 8
      %s755 = scalar_lea.vmem %s19, %s754
      %p756 = scmp.lt.s32.totalorder %s34, 1
      %s757 = scalar_select %p756, %s34, 1
      %s758 = smul.addr %s757, 16
      %s759 = smul.addr %s758, 4
      %s760 = scalar_lea.vmem %s0, %s759
      %p761 = scmp.lt.s32.totalorder %s35, 1
      %s762 = scalar_select %p761, %s35, 1
      %s763 = scalar_lea.vmem %s3, %s762
      %p764 = scmp.lt.s32.totalorder %s35, 1
      %s765 = scalar_select %p764, %s35, 1
      %s766 = scalar_lea.vmem %s4, %s765
      %p767 = scmp.lt.s32.totalorder %s35, 1
      %s768 = scalar_select %p767, %s35, 1
      %s769 = smul.addr %s768, 48
      %s770 = smul.addr %s769, 4
      %s771 = scalar_lea.vmem %s5, %s770
      %p772 = scmp.lt.s32.totalorder %s35, 1
      %s773 = scalar_select %p772, %s35, 1
      %s774 = smul.addr %s773, 3
      %s775 = scalar_lea.vmem %s6, %s774
      %p776 = scmp.lt.s32.totalorder %s35, 1
      %s777 = scalar_select %p776, %s35, 1
      %s778 = smul.addr %s777, 16
      %s779 = smul.addr %s778, 4
      %s780 = scalar_lea.vmem %s7, %s779
      %p781 = scmp.lt.s32.totalorder %s35, 1
      %s782 = scalar_select %p781, %s35, 1
      %s783 = scalar_lea.vmem %s8, %s782
      %p784 = scmp.lt.s32.totalorder %s35, 1
      %s785 = scalar_select %p784, %s35, 1
      %s786 = scalar_lea.vmem %s9, %s785
      %p787 = scmp.lt.s32.totalorder %s35, 1
      %s788 = scalar_select %p787, %s35, 1
      %s789 = scalar_lea.vmem %s10, %s788
      %p790 = scmp.lt.s32.totalorder %s35, 1
      %s791 = scalar_select %p790, %s35, 1
      %s792 = smul.addr %s791, 64
      %s793 = smul.addr %s792, 4
      %s794 = scalar_lea.vmem %s11, %s793
      %p795 = scmp.lt.s32.totalorder %s35, 1
      %s796 = scalar_select %p795, %s35, 1
      %s797 = smul.addr %s796, 4
      %s798 = scalar_lea.vmem %s12, %s797
      %p799 = scmp.lt.s32.totalorder %s35, 1
      %s800 = scalar_select %p799, %s35, 1
      %s801 = smul.addr %s800, 64
      %s802 = smul.addr %s801, 4
      %s803 = scalar_lea.vmem %s13, %s802
      %p804 = scmp.lt.s32.totalorder %s35, 1
      %s805 = scalar_select %p804, %s35, 1
      %s806 = scalar_lea.vmem %s14, %s805
      %p807 = scmp.lt.s32.totalorder %s34, 1
      %s808 = scalar_select %p807, %s34, 1
      %s809 = smul.addr %s808, 8
      %s810 = scalar_lea.vmem %s19, %s809
      %v812 = vlaneseq
      %v813 = vand.u32 %v812, 127
      %vm814 = vcmp.lt.s32.totalorder %v813, 17
      %v815 = vsel %vm814, 0.0, -1e+09
      %p816 = scmp.eq.s32.totalorder %s35, 0
      // Predicated region
      $region97: #{vit_forward_impl.1} parent=95 // pred_check
        %p817 = pneg %p816
      $region98: #{vit_forward_impl.1} parent=95 // pred_check_branch
        %819 = sbr.rel (%p817) target = $region100
      $region99: #{vit_forward_impl.1} parent=95 // pred_region
        %v820 = vld [vmem:[%s760] sm:$0xff]
        %v821 = vld [vmem:[%s760 + $0x8] sm:$0xff]
        %v822 = vld [vmem:[%s760 + $0x10] sm:$0xff]
        %v823 = vld [vmem:[%s760 + $0x18] sm:$0xff]
        %v824 = vld [vmem:[%s760 + $0x20] sm:$0xff]
        %v825 = vld [vmem:[%s760 + $0x28] sm:$0xff]
        %v826 = vld [vmem:[%s760 + $0x30] sm:$0xff]
        %v827 = vld [vmem:[%s760 + $0x38] sm:$0xff]
        %v828 = vld [vmem:[%s1] sm:$0xf]
        %v829 = vld [vmem:[%s1 + $0x4] sm:$0xf]
        %v830 = vld [vmem:[%s1 + $0x8] sm:$0xf]
        %v831 = vld [vmem:[%s1 + $0xc] sm:$0xf]
        %v832 = vld [vmem:[%s1 + $0x10] sm:$0xf]
        %v833 = vld [vmem:[%s1 + $0x14] sm:$0xf]
        %v834 = vld [vmem:[%s1 + $0x18] sm:$0xf]
        %v835 = vld [vmem:[%s1 + $0x1c] sm:$0xf]
        %v836 = vld [vmem:[%s1 + $0x20] sm:$0xf]
        %v837 = vld [vmem:[%s1 + $0x24] sm:$0xf]
        %v838 = vld [vmem:[%s1 + $0x28] sm:$0xf]
        %v839 = vld [vmem:[%s1 + $0x2c] sm:$0xf]
        %v840 = vld [vmem:[%s1 + $0x30] sm:$0xf]
        %v841 = vld [vmem:[%s1 + $0x34] sm:$0xf]
        %v842 = vld [vmem:[%s1 + $0x38] sm:$0xf]
        %v843 = vld [vmem:[%s1 + $0x3c] sm:$0xf]
        %v844 = vld [vmem:[%s1 + $0x40] sm:$0xf]
        %v845 = vld [vmem:[%s1 + $0x44] sm:$0xf]
        %v846 = vld [vmem:[%s1 + $0x48] sm:$0xf]
        %v847 = vld [vmem:[%s1 + $0x4c] sm:$0xf]
        %v848 = vld [vmem:[%s1 + $0x50] sm:$0xf]
        %v849 = vld [vmem:[%s1 + $0x54] sm:$0xf]
        %v850 = vld [vmem:[%s1 + $0x58] sm:$0xf]
        %v851 = vld [vmem:[%s1 + $0x5c] sm:$0xf]
        %v852 = vld [vmem:[%s1 + $0x60] sm:$0xf]
        %v853 = vld [vmem:[%s1 + $0x64] sm:$0xf]
        %v854 = vld [vmem:[%s1 + $0x68] sm:$0xf]
        %v855 = vld [vmem:[%s1 + $0x6c] sm:$0xf]
        %v856 = vld [vmem:[%s1 + $0x70] sm:$0xf]
        %v857 = vld [vmem:[%s1 + $0x74] sm:$0xf]
        %v858 = vld [vmem:[%s1 + $0x78] sm:$0xf]
        %v859 = vld [vmem:[%s1 + $0x7c] sm:$0xf]
        %v860 = vld [vmem:[%s1 + $0x80] sm:$0xf]
        %v861 = vld [vmem:[%s1 + $0x84] sm:$0xf]
        %v862 = vld [vmem:[%s1 + $0x88] sm:$0xf]
        %v863 = vld [vmem:[%s1 + $0x8c] sm:$0xf]
        %v864 = vld [vmem:[%s1 + $0x90] sm:$0xf]
        %v865 = vld [vmem:[%s1 + $0x94] sm:$0xf]
        %v866 = vld [vmem:[%s1 + $0x98] sm:$0xf]
        %v867 = vld [vmem:[%s1 + $0x9c] sm:$0xf]
        %v868 = vld [vmem:[%s1 + $0xa0] sm:$0xf]
        %v869 = vld [vmem:[%s1 + $0xa4] sm:$0xf]
        %v870 = vld [vmem:[%s1 + $0xa8] sm:$0xf]
        %v871 = vld [vmem:[%s1 + $0xac] sm:$0xf]
        %v872 = vld [vmem:[%s1 + $0xb0] sm:$0xf]
        %v873 = vld [vmem:[%s1 + $0xb4] sm:$0xf]
        %v874 = vld [vmem:[%s1 + $0xb8] sm:$0xf]
        %v875 = vld [vmem:[%s1 + $0xbc] sm:$0xf]
        %v876 = vld [vmem:[%s1 + $0xc0] sm:$0xf]
        %v877 = vld [vmem:[%s1 + $0xc4] sm:$0xf]
        %v878 = vld [vmem:[%s1 + $0xc8] sm:$0xf]
        %v879 = vld [vmem:[%s1 + $0xcc] sm:$0xf]
        %v880 = vld [vmem:[%s1 + $0xd0] sm:$0xf]
        %v881 = vld [vmem:[%s1 + $0xd4] sm:$0xf]
        %v882 = vld [vmem:[%s1 + $0xd8] sm:$0xf]
        %v883 = vld [vmem:[%s1 + $0xdc] sm:$0xf]
        %v884 = vld [vmem:[%s1 + $0xe0] sm:$0xf]
        %v885 = vld [vmem:[%s1 + $0xe4] sm:$0xf]
        %v886 = vld [vmem:[%s1 + $0xe8] sm:$0xf]
        %v887 = vld [vmem:[%s1 + $0xec] sm:$0xf]
        %v888 = vld [vmem:[%s1 + $0xf0] sm:$0xf]
        %v889 = vld [vmem:[%s1 + $0xf4] sm:$0xf]
        %v890 = vld [vmem:[%s1 + $0xf8] sm:$0xf]
        %v891 = vld [vmem:[%s1 + $0xfc] sm:$0xf]
        %v892 = vld [vmem:[%s2] sm:$0xff]
        %v893 = vld [vmem:[%s2 + $0x8] sm:$0xff]
        %v894 = vld [vmem:[%s2 + $0x10] sm:$0xff]
        %v895 = vld [vmem:[%s2 + $0x18] sm:$0xff]
        %v904 = vunpack.c.l.b16 %v820
        %v905 = vunpack.c.h.b16 %v820
        %v906 = vunpack.c.l.b16 %v821
        %v907 = vunpack.c.h.b16 %v821
        %v908 = vunpack.c.l.b16 %v822
        %v909 = vunpack.c.h.b16 %v822
        %v910 = vunpack.c.l.b16 %v823
        %v911 = vunpack.c.h.b16 %v823
        %v912 = vunpack.c.l.b16 %v824
        %v913 = vunpack.c.h.b16 %v824
        %v914 = vunpack.c.l.b16 %v825
        %v915 = vunpack.c.h.b16 %v825
        %v916 = vunpack.c.l.b16 %v826
        %v917 = vunpack.c.h.b16 %v826
        %v918 = vunpack.c.l.b16 %v827
        %v919 = vunpack.c.h.b16 %v827
        %v920 = vpack.c.b16 %v908, %v904
        %v921 = vpack.c.b16 %v909, %v905
        %v922 = vpack.c.b16 %v910, %v906
        %v923 = vpack.c.b16 %v911, %v907
        %v924 = vpack.c.b16 %v916, %v912
        %v925 = vpack.c.b16 %v917, %v913
        %v926 = vpack.c.b16 %v918, %v914
        %v927 = vpack.c.b16 %v919, %v915
        %v1000 = vunpack.c.l.b16 %v828
        %v1001 = vunpack.c.l.b16 %v829
        %v1002 = vunpack.c.l.b16 %v830
        %v1003 = vunpack.c.l.b16 %v831
        %v1004 = vunpack.c.l.b16 %v832
        %v1005 = vunpack.c.l.b16 %v833
        %v1006 = vunpack.c.l.b16 %v834
        %v1007 = vunpack.c.l.b16 %v835
        %v1008 = vunpack.c.l.b16 %v836
        %v1009 = vunpack.c.l.b16 %v837
        %v1010 = vunpack.c.l.b16 %v838
        %v1011 = vunpack.c.l.b16 %v839
        %v1012 = vunpack.c.l.b16 %v840
        %v1013 = vunpack.c.l.b16 %v841
        %v1014 = vunpack.c.l.b16 %v842
        %v1015 = vunpack.c.l.b16 %v843
        %v1016 = vunpack.c.l.b16 %v844
        %v1017 = vunpack.c.l.b16 %v845
        %v1018 = vunpack.c.l.b16 %v846
        %v1019 = vunpack.c.l.b16 %v847
        %v1020 = vunpack.c.l.b16 %v848
        %v1021 = vunpack.c.l.b16 %v849
        %v1022 = vunpack.c.l.b16 %v850
        %v1023 = vunpack.c.l.b16 %v851
        %v1024 = vunpack.c.l.b16 %v852
        %v1025 = vunpack.c.l.b16 %v853
        %v1026 = vunpack.c.l.b16 %v854
        %v1027 = vunpack.c.l.b16 %v855
        %v1028 = vunpack.c.l.b16 %v856
        %v1029 = vunpack.c.l.b16 %v857
        %v1030 = vunpack.c.l.b16 %v858
        %v1031 = vunpack.c.l.b16 %v859
        %v1032 = vunpack.c.l.b16 %v860
        %v1033 = vunpack.c.l.b16 %v861
        %v1034 = vunpack.c.l.b16 %v862
        %v1035 = vunpack.c.l.b16 %v863
        %v1036 = vunpack.c.l.b16 %v864
        %v1037 = vunpack.c.l.b16 %v865
        %v1038 = vunpack.c.l.b16 %v866
        %v1039 = vunpack.c.l.b16 %v867
        %v1040 = vunpack.c.l.b16 %v868
        %v1041 = vunpack.c.l.b16 %v869
        %v1042 = vunpack.c.l.b16 %v870
        %v1043 = vunpack.c.l.b16 %v871
        %v1044 = vunpack.c.l.b16 %v872
        %v1045 = vunpack.c.l.b16 %v873
        %v1046 = vunpack.c.l.b16 %v874
        %v1047 = vunpack.c.l.b16 %v875
        %v1048 = vunpack.c.l.b16 %v876
        %v1049 = vunpack.c.l.b16 %v877
        %v1050 = vunpack.c.l.b16 %v878
        %v1051 = vunpack.c.l.b16 %v879
        %v1052 = vunpack.c.l.b16 %v880
        %v1053 = vunpack.c.l.b16 %v881
        %v1054 = vunpack.c.l.b16 %v882
        %v1055 = vunpack.c.l.b16 %v883
        %v1056 = vunpack.c.l.b16 %v884
        %v1057 = vunpack.c.l.b16 %v885
        %v1058 = vunpack.c.l.b16 %v886
        %v1059 = vunpack.c.l.b16 %v887
        %v1060 = vunpack.c.l.b16 %v888
        %v1061 = vunpack.c.l.b16 %v889
        %v1062 = vunpack.c.l.b16 %v890
        %v1063 = vunpack.c.l.b16 %v891
        %v1064 = vpack.c.b16 %v1001, %v1000
        %v1065 = vpack.c.b16 %v1003, %v1002
        %v1066 = vpack.c.b16 %v1005, %v1004
        %v1067 = vpack.c.b16 %v1007, %v1006
        %v1068 = vpack.c.b16 %v1009, %v1008
        %v1069 = vpack.c.b16 %v1011, %v1010
        %v1070 = vpack.c.b16 %v1013, %v1012
        %v1071 = vpack.c.b16 %v1015, %v1014
        %v1072 = vpack.c.b16 %v1017, %v1016
        %v1073 = vpack.c.b16 %v1019, %v1018
        %v1074 = vpack.c.b16 %v1021, %v1020
        %v1075 = vpack.c.b16 %v1023, %v1022
        %v1076 = vpack.c.b16 %v1025, %v1024
        %v1077 = vpack.c.b16 %v1027, %v1026
        %v1078 = vpack.c.b16 %v1029, %v1028
        %v1079 = vpack.c.b16 %v1031, %v1030
        %v1080 = vpack.c.b16 %v1033, %v1032
        %v1081 = vpack.c.b16 %v1035, %v1034
        %v1082 = vpack.c.b16 %v1037, %v1036
        %v1083 = vpack.c.b16 %v1039, %v1038
        %v1084 = vpack.c.b16 %v1041, %v1040
        %v1085 = vpack.c.b16 %v1043, %v1042
        %v1086 = vpack.c.b16 %v1045, %v1044
        %v1087 = vpack.c.b16 %v1047, %v1046
        %v1088 = vpack.c.b16 %v1049, %v1048
        %v1089 = vpack.c.b16 %v1051, %v1050
        %v1090 = vpack.c.b16 %v1053, %v1052
        %v1091 = vpack.c.b16 %v1055, %v1054
        %v1092 = vpack.c.b16 %v1057, %v1056
        %v1093 = vpack.c.b16 %v1059, %v1058
        %v1094 = vpack.c.b16 %v1061, %v1060
        %v1095 = vpack.c.b16 %v1063, %v1062
        %1128 = vmatprep.subr.bf16.mxu0 0
        %1129 = vmatpush1.bf16.msra.mxu0 %v1064
        %1130 = vmatprep.subr.bf16.mxu0 0
        %1131 = vmatpush1.bf16.msra.mxu0 %v1065
        %1132 = vmatprep.subr.bf16.mxu0 0
        %1133 = vmatpush1.bf16.msra.mxu0 %v1066
        %1134 = vmatprep.subr.bf16.mxu0 0
        %1135 = vmatpush1.bf16.msra.mxu0 %v1067
        %1136 = vmatprep.subr.bf16.mxu0 0
        %1137 = vmatpush1.bf16.msra.mxu0 %v1068
        %1138 = vmatprep.subr.bf16.mxu0 0
        %1139 = vmatpush1.bf16.msra.mxu0 %v1069
        %1140 = vmatprep.subr.bf16.mxu0 0
        %1141 = vmatpush1.bf16.msra.mxu0 %v1070
        %1142 = vmatprep.subr.bf16.mxu0 0
        %1143 = vmatpush1.bf16.msra.mxu0 %v1071
        %1144 = vmatprep.subr.bf16.mxu0 0
        %1145 = vmatpush1.bf16.msra.mxu0 %v1072
        %1146 = vmatprep.subr.bf16.mxu0 0
        %1147 = vmatpush1.bf16.msra.mxu0 %v1073
        %1148 = vmatprep.subr.bf16.mxu0 0
        %1149 = vmatpush1.bf16.msra.mxu0 %v1074
        %1150 = vmatprep.subr.bf16.mxu0 0
        %1151 = vmatpush1.bf16.msra.mxu0 %v1075
        %1152 = vmatprep.subr.bf16.mxu0 0
        %1153 = vmatpush1.bf16.msra.mxu0 %v1076
        %1154 = vmatprep.subr.bf16.mxu0 0
        %1155 = vmatpush1.bf16.msra.mxu0 %v1077
        %1156 = vmatprep.subr.bf16.mxu0 0
        %1157 = vmatpush1.bf16.msra.mxu0 %v1078
        %1158 = vmatprep.subr.bf16.mxu0 0
        %1159 = vmatpush1.bf16.msra.mxu0 %v1079
        %1160 = vmatprep.mubr.bf16.mxu0 %v921
        %1161 = vmatmul.mubr.bf16.gmra.mrb[0].mxu0 %v920
        %v1162 = vpop.f32.mrb[0].mxu0
        %v1163 = vadd.f32 %v892, %v1162
        %v1164 = vpop.f32.mrb[0].mxu0
        %v1165 = vpop.f32.mrb[0].mxu0
        %v1166 = vadd.f32 %v893, %v1165
        %v1167 = vpop.f32.mrb[0].mxu0
        %1168 = vmatprep.mubr.bf16.mxu0 %v925
        %1169 = vmatmul.mubr.bf16.gmra.mrb[0].mxu0 %v924
        %v1170 = vpop.f32.mrb[0].mxu0
        %v1171 = vadd.f32 %v894, %v1170
        %v1172 = vpop.f32.mrb[0].mxu0
        %v1173 = vpop.f32.mrb[0].mxu0
        %v1174 = vadd.f32 %v895, %v1173
        %v1175 = vpop.f32.mrb[0].mxu0
        %1176 = vdwg.mxu0
        %1177 = vmatprep.subr.bf16.mxu0 0
        %1178 = vmatpush1.bf16.msra.mxu0 %v1080
        %1179 = vmatprep.subr.bf16.mxu0 0
        %1180 = vmatpush1.bf16.msra.mxu0 %v1081
        %1181 = vmatprep.subr.bf16.mxu0 0
        %1182 = vmatpush1.bf16.msra.mxu0 %v1082
        %1183 = vmatprep.subr.bf16.mxu0 0
        %1184 = vmatpush1.bf16.msra.mxu0 %v1083
        %1185 = vmatprep.subr.bf16.mxu0 0
        %1186 = vmatpush1.bf16.msra.mxu0 %v1084
        %1187 = vmatprep.subr.bf16.mxu0 0
        %1188 = vmatpush1.bf16.msra.mxu0 %v1085
        %1189 = vmatprep.subr.bf16.mxu0 0
        %1190 = vmatpush1.bf16.msra.mxu0 %v1086
        %1191 = vmatprep.subr.bf16.mxu0 0
        %1192 = vmatpush1.bf16.msra.mxu0 %v1087
        %1193 = vmatprep.subr.bf16.mxu0 0
        %1194 = vmatpush1.bf16.msra.mxu0 %v1088
        %1195 = vmatprep.subr.bf16.mxu0 0
        %1196 = vmatpush1.bf16.msra.mxu0 %v1089
        %1197 = vmatprep.subr.bf16.mxu0 0
        %1198 = vmatpush1.bf16.msra.mxu0 %v1090
        %1199 = vmatprep.subr.bf16.mxu0 0
        %1200 = vmatpush1.bf16.msra.mxu0 %v1091
        %1201 = vmatprep.subr.bf16.mxu0 0
        %1202 = vmatpush1.bf16.msra.mxu0 %v1092
        %1203 = vmatprep.subr.bf16.mxu0 0
        %1204 = vmatpush1.bf16.msra.mxu0 %v1093
        %1205 = vmatprep.subr.bf16.mxu0 0
        %1206 = vmatpush1.bf16.msra.mxu0 %v1094
        %1207 = vmatprep.subr.bf16.mxu0 0
        %1208 = vmatpush1.bf16.msra.mxu0 %v1095
        %1209 = vmatprep.mubr.bf16.mxu0 %v923
        %1210 = vmatmul.mubr.bf16.gmra.mrb[0].mxu0 %v922
        %v1211 = vpop.f32.mrb[0].mxu0
        %v1212 = vadd.f32 %v1163, %v1211
        %v1213 = vpop.f32.mrb[0].mxu0
        %v1214 = vpop.f32.mrb[0].mxu0
        %v1215 = vadd.f32 %v1166, %v1214
        %v1216 = vpop.f32.mrb[0].mxu0
        %1217 = vmatprep.mubr.bf16.mxu0 %v927
        %1218 = vmatmul.mubr.bf16.gmra.mrb[0].mxu0 %v926
        %v1219 = vpop.f32.mrb[0].mxu0
        %v1220 = vadd.f32 %v1171, %v1219
        %v1221 = vpop.f32.mrb[0].mxu0
        %v1222 = vpop.f32.mrb[0].mxu0
        %v1223 = vadd.f32 %v1174, %v1222
        %v1224 = vpop.f32.mrb[0].mxu0
        %1225 = vdwg.mxu0
        %1226 = vst [vmem:[#allocation2] sm:$0xff] %v1212
        %1227 = vst [vmem:[#allocation2 + $0x8] sm:$0xff] %v1215
        %1228 = vst [vmem:[#allocation2 + $0x10] sm:$0xff] %v1220
        %1229 = vst [vmem:[#allocation2 + $0x18] sm:$0xff] %v1223
      $region100: #{vit_forward_impl.1} parent=95 // pred_fallthru
        _
      %v1230 = vld [vmem:[#allocation2] sm:$0xff]
      %v1231 = vld [vmem:[#allocation2 + $0x8] sm:$0xff]
      %v1232 = vld [vmem:[#allocation2 + $0x10] sm:$0xff]
      %v1233 = vld [vmem:[#allocation2 + $0x18] sm:$0xff]
      %v1234 = vld [vmem:[%s763] sm:$0x1]
      %v1235 = vld [vmem:[%s766] sm:$0x1]
      %1236 = vadd.xlane.f32.xlu0 %v1230
      %v1237 = vpop.xlane.xlu0 %1236
      %1238 = vadd.xlane.f32.xlu0 %v1231
      %v1239 = vpop.xlane.xlu0 %1238
      %1240 = vadd.xlane.f32.xlu0 %v1232
      %v1241 = vpop.xlane.xlu0 %1240
      %1242 = vadd.xlane.f32.xlu0 %v1233
      %v1243 = vpop.xlane.xlu0 %1242
      %v1244 = vrcp.pop 128.0
      %v1245 = vmul.f32 %v1237, %v1244
      %v1246 = vmul.f32 %v1239, %v1244
      %v1247 = vmul.f32 %v1241, %v1244
      %v1248 = vmul.f32 %v1243, %v1244
      %v1249 = vsub.f32 %v1230, %v1245
      %v1250 = vsub.f32 %v1231, %v1246
      %v1251 = vsub.f32 %v1232, %v1247
      %v1252 = vsub.f32 %v1233, %v1248
      %v1253 = vmul.f32 %v1249, %v1249
      %v1254 = vmul.f32 %v1250, %v1250
      %v1255 = vmul.f32 %v1251, %v1251
      %v1256 = vmul.f32 %v1252, %v1252
      %1257 = vadd.xlane.f32.xlu0 %v1253
      %v1258 = vpop.xlane.xlu0 %1257
      %1259 = vadd.xlane.f32.xlu0 %v1254
      %v1260 = vpop.xlane.xlu0 %1259
      %1261 = vadd.xlane.f32.xlu0 %v1255
      %v1262 = vpop.xlane.xlu0 %1261
      %1263 = vadd.xlane.f32.xlu0 %v1256
      %v1264 = vpop.xlane.xlu0 %1263
      %v1265 = vmul.f32 %v1258, %v1244
      %v1266 = vmul.f32 %v1260, %v1244
      %v1267 = vmul.f32 %v1262, %v1244
      %v1268 = vmul.f32 %v1264, %v1244
      %v1269 = vadd.f32 %v1265, 1e-06
      %v1270 = vadd.f32 %v1266, 1e-06
      %v1271 = vadd.f32 %v1267, 1e-06
      %v1272 = vadd.f32 %v1268, 1e-06
      %v1273 = vrsqrt.pop %v1269
      %v1274 = vrsqrt.pop %v1270
      %v1275 = vrsqrt.pop %v1271
      %v1276 = vrsqrt.pop %v1272
      %v1277 = vmul.f32 %v1249, %v1273
      %v1278 = vmul.f32 %v1250, %v1274
      %v1279 = vmul.f32 %v1251, %v1275
      %v1280 = vmul.f32 %v1252, %v1276
      %v1282 = vlaneseq
      %v1283 = vshrl.u32 %v1282, 7
      %v1284 = vsub.s32 0, %v1283
      %v1285 = vrot.slane %v1234, %v1284
      %v1287 = vmul.f32 %v1277, %v1285
      %v1288 = vmul.f32 %v1278, %v1285
      %v1289 = vmul.f32 %v1279, %v1285
      %v1290 = vmul.f32 %v1280, %v1285
      %v1292 = vlaneseq
      %v1293 = vshrl.u32 %v1292, 7
      %v1294 = vsub.s32 0, %v1293
      %v1295 = vrot.slane %v1235, %v1294
      %v1297 = vadd.f32 %v1287, %v1295
      %v1298 = vadd.f32 %v1288, %v1295
      %v1299 = vadd.f32 %v1289, %v1295
      %v1300 = vadd.f32 %v1290, %v1295
      %v1301 = vld [vmem:[%s771] sm:$0xff]
      %v1302 = vld [vmem:[%s771 + $0x8] sm:$0xf]
      %v1303 = vld [vmem:[%s771 + $0xc] sm:$0xff]
      %v1304 = vld [vmem:[%s771 + $0x14] sm:$0xf]
      %v1305 = vld [vmem:[%s771 + $0x18] sm:$0xff]
      %v1306 = vld [vmem:[%s771 + $0x20] sm:$0xf]
      %v1307 = vld [vmem:[%s771 + $0x24] sm:$0xff]
      %v1308 = vld [vmem:[%s771 + $0x2c] sm:$0xf]
      %v1309 = vld [vmem:[%s771 + $0x30] sm:$0xff]
      %v1310 = vld [vmem:[%s771 + $0x38] sm:$0xf]
      %v1311 = vld [vmem:[%s771 + $0x3c] sm:$0xff]
      %v1312 = vld [vmem:[%s771 + $0x44] sm:$0xf]
      %v1313 = vld [vmem:[%s771 + $0x48] sm:$0xff]
      %v1314 = vld [vmem:[%s771 + $0x50] sm:$0xf]
      %v1315 = vld [vmem:[%s771 + $0x54] sm:$0xff]
      %v1316 = vld [vmem:[%s771 + $0x5c] sm:$0xf]
      %v1317 = vld [vmem:[%s771 + $0x60] sm:$0xff]
      %v1318 = vld [vmem:[%s771 + $0x68] sm:$0xf]
      %v1319 = vld [vmem:[%s771 + $0x6c] sm:$0xff]
      %v1320 = vld [vmem:[%s771 + $0x74] sm:$0xf]
      %v1321 = vld [vmem:[%s771 + $0x78] sm:$0xff]
      %v1322 = vld [vmem:[%s771 + $0x80] sm:$0xf]
      %v1323 = vld [vmem:[%s771 + $0x84] sm:$0xff]
      %v1324 = vld [vmem:[%s771 + $0x8c] sm:$0xf]
      %v1325 = vld [vmem:[%s771 + $0x90] sm:$0xff]
      %v1326 = vld [vmem:[%s771 + $0x98] sm:$0xf]
      %v1327 = vld [vmem:[%s771 + $0x9c] sm:$0xff]
      %v1328 = vld [vmem:[%s771 + $0xa4] sm:$0xf]
      %v1329 = vld [vmem:[%s771 + $0xa8] sm:$0xff]
      %v1330 = vld [vmem:[%s771 + $0xb0] sm:$0xf]
      %v1331 = vld [vmem:[%s771 + $0xb4] sm:$0xff]
      %v1332 = vld [vmem:[%s771 + $0xbc] sm:$0xf]
      %v1333 = vpack.c.bf16 %v1298, %v1297
      %v1334 = vpack.c.bf16 %v1300, %v1299
      %v1335 = vld [vmem:[%s775] sm:$0x7]
      %v1337 = vlaneseq
      %v1338 = vshrl.u32 %v1337, 7
      %v1339 = vsub.s32 0, %v1338
      %v1340 = vrot.slane %v1335, %v1339
      %v1341 = vlaneseq
      %v1342 = vshrl.u32 %v1341, 7
      %v1343 = vsub.s32 1, %v1342
      %v1344 = vrot.slane %v1335, %v1343
      %v1345 = vlaneseq
      %v1346 = vshrl.u32 %v1345, 7
      %v1347 = vsub.s32 2, %v1346
      %v1348 = vrot.slane %v1335, %v1347
      %v1384 = vunpack.c.l.b16 %v1301
      %v1385 = vunpack.c.h.b16 %v1301
      %v1386 = vunpack.c.l.b16 %v1302
      %v1387 = vunpack.c.l.b16 %v1303
      %v1388 = vunpack.c.h.b16 %v1303
      %v1389 = vunpack.c.l.b16 %v1304
      %v1390 = vunpack.c.l.b16 %v1305
      %v1391 = vunpack.c.h.b16 %v1305
      %v1392 = vunpack.c.l.b16 %v1306
      %v1393 = vunpack.c.l.b16 %v1307
      %v1394 = vunpack.c.h.b16 %v1307
      %v1395 = vunpack.c.l.b16 %v1308
      %v1396 = vunpack.c.l.b16 %v1309
      %v1397 = vunpack.c.h.b16 %v1309
      %v1398 = vunpack.c.l.b16 %v1310
      %v1399 = vunpack.c.l.b16 %v1311
      %v1400 = vunpack.c.h.b16 %v1311
      %v1401 = vunpack.c.l.b16 %v1312
      %v1402 = vunpack.c.l.b16 %v1313
      %v1403 = vunpack.c.h.b16 %v1313
      %v1404 = vunpack.c.l.b16 %v1314
      %v1405 = vunpack.c.l.b16 %v1315
      %v1406 = vunpack.c.h.b16 %v1315
      %v1407 = vunpack.c.l.b16 %v1316
      %v1408 = vunpack.c.l.b16 %v1317
      %v1409 = vunpack.c.h.b16 %v1317
      %v1410 = vunpack.c.l.b16 %v1318
      %v1411 = vunpack.c.l.b16 %v1319
      %v1412 = vunpack.c.h.b16 %v1319
      %v1413 = vunpack.c.l.b16 %v1320
      %v1414 = vunpack.c.l.b16 %v1321
      %v1415 = vunpack.c.h.b16 %v1321
      %v1416 = vunpack.c.l.b16 %v1322
      %v1417 = vunpack.c.l.b16 %v1323
      %v1418 = vunpack.c.h.b16 %v1323
      %v1419 = vunpack.c.l.b16 %v1324
      %v1420 = vunpack.c.l.b16 %v1325
      %v1421 = vunpack.c.h.b16 %v1325
      %v1422 = vunpack.c.l.b16 %v1326
      %v1423 = vunpack.c.l.b16 %v1327
      %v1424 = vunpack.c.h.b16 %v1327
      %v1425 = vunpack.c.l.b16 %v1328
      %v1426 = vunpack.c.l.b16 %v1329
      %v1427 = vunpack.c.h.b16 %v1329
      %v1428 = vunpack.c.l.b16 %v1330
      %v1429 = vunpack.c.l.b16 %v1331
      %v1430 = vunpack.c.h.b16 %v1331
      %v1431 = vunpack.c.l.b16 %v1332
      %v1432 = vpack.c.b16 %v1387, %v1384
      %v1433 = vpack.c.b16 %v1388, %v1385
      %v1434 = vpack.c.b16 %v1389, %v1386
      %v1435 = vpack.c.b16 %v1393, %v1390
      %v1436 = vpack.c.b16 %v1394, %v1391
      %v1437 = vpack.c.b16 %v1395, %v1392
      %v1438 = vpack.c.b16 %v1399, %v1396
      %v1439 = vpack.c.b16 %v1400, %v1397
      %v1440 = vpack.c.b16 %v1401, %v1398
      %v1441 = vpack.c.b16 %v1405, %v1402
      %v1442 = vpack.c.b16 %v1406, %v1403
      %v1443 = vpack.c.b16 %v1407, %v1404
      %v1444 = vpack.c.b16 %v1411, %v1408
      %v1445 = vpack.c.b16 %v1412, %v1409
      %v1446 = vpack.c.b16 %v1413, %v1410
      %v1447 = vpack.c.b16 %v1417, %v1414
      %v1448 = vpack.c.b16 %v1418, %v1415
      %v1449 = vpack.c.b16 %v1419, %v1416
      %v1450 = vpack.c.b16 %v1423, %v1420
      %v1451 = vpack.c.b16 %v1424, %v1421
      %v1452 = vpack.c.b16 %v1425, %v1422
      %v1453 = vpack.c.b16 %v1429, %v1426
      %v1454 = vpack.c.b16 %v1430, %v1427
      %v1455 = vpack.c.b16 %v1431, %v1428
      %1480 = vmatprep.subr.bf16.mxu0 %v1433
      %1481 = vmatpush1.bf16.msra.mxu0 %v1432
      %1482 = vmatprep.subr.bf16.mxu0 %v1436
      %1483 = vmatpush1.bf16.msra.mxu0 %v1435
      %1484 = vmatprep.subr.bf16.mxu0 %v1439
      %1485 = vmatpush1.bf16.msra.mxu0 %v1438
      %1486 = vmatprep.subr.bf16.mxu0 %v1442
      %1487 = vmatpush1.bf16.msra.mxu0 %v1441
      %1488 = vmatprep.subr.bf16.mxu0 %v1445
      %1489 = vmatpush1.bf16.msra.mxu0 %v1444
      %1490 = vmatprep.subr.bf16.mxu0 %v1448
      %1491 = vmatpush1.bf16.msra.mxu0 %v1447
      %1492 = vmatprep.subr.bf16.mxu0 %v1451
      %1493 = vmatpush1.bf16.msra.mxu0 %v1450
      %1494 = vmatprep.subr.bf16.mxu0 %v1454
      %1495 = vmatpush1.bf16.msra.mxu0 %v1453
      %1496 = vmatprep.subr.bf16.mxu0 0
      %1497 = vmatpush1.bf16.msra.mxu0 0
      %1498 = vmatprep.subr.bf16.mxu0 0
      %1499 = vmatpush1.bf16.msra.mxu0 0
      %1500 = vmatprep.subr.bf16.mxu0 0
      %1501 = vmatpush1.bf16.msra.mxu0 0
      %1502 = vmatprep.subr.bf16.mxu0 0
      %1503 = vmatpush1.bf16.msra.mxu0 0
      %1504 = vmatprep.subr.bf16.mxu0 0
      %1505 = vmatpush1.bf16.msra.mxu0 0
      %1506 = vmatprep.subr.bf16.mxu0 0
      %1507 = vmatpush1.bf16.msra.mxu0 0
      %1508 = vmatprep.subr.bf16.mxu0 0
      %1509 = vmatpush1.bf16.msra.mxu0 0
      %1510 = vmatprep.subr.bf16.mxu0 0
      %1511 = vmatpush1.bf16.msra.mxu0 0
      %1512 = vmatprep.mubr.bf16.mxu0 0
      %1513 = vmatmul.mubr.bf16.gmra.mrb[0].mxu0 %v1333
      %v1514 = vpop.f32.mrb[0].mxu0
      %v1515 = vadd.f32 %v1340, %v1514
      %v1516 = vpop.f32.mrb[0].mxu0
      %v1517 = vadd.f32 %v1344, %v1516
      %v1518 = vpop.f32.mrb[0].mxu0
      %v1519 = vadd.f32 %v1340, %v1518
      %v1520 = vpop.f32.mrb[0].mxu0
      %v1521 = vadd.f32 %v1344, %v1520
      %1522 = vmatprep.mubr.bf16.mxu0 0
      %1523 = vmatmul.mubr.bf16.gmra.mrb[0].mxu0 %v1334
      %v1524 = vpop.f32.mrb[0].mxu0
      %v1525 = vadd.f32 %v1340, %v1524
      %v1526 = vpop.f32.mrb[0].mxu0
      %v1527 = vadd.f32 %v1344, %v1526
      %v1528 = vpop.f32.mrb[0].mxu0
      %v1529 = vadd.f32 %v1340, %v1528
      %v1530 = vpop.f32.mrb[0].mxu0
      %v1531 = vadd.f32 %v1344, %v1530
      %1532 = vdwg.mxu0
      %1533 = vmatprep.subr.bf16.mxu0 0
      %1534 = vmatpush1.bf16.msra.mxu0 %v1434
      %1535 = vmatprep.subr.bf16.mxu0 0
      %1536 = vmatpush1.bf16.msra.mxu0 %v1437
      %1537 = vmatprep.subr.bf16.mxu0 0
      %1538 = vmatpush1.bf16.msra.mxu0 %v1440
      %1539 = vmatprep.subr.bf16.mxu0 0
      %1540 = vmatpush1.bf16.msra.mxu0 %v1443
      %1541 = vmatprep.subr.bf16.mxu0 0
      %1542 = vmatpush1.bf16.msra.mxu0 %v1446
      %1543 = vmatprep.subr.bf16.mxu0 0
      %1544 = vmatpush1.bf16.msra.mxu0 %v1449
      %1545 = vmatprep.subr.bf16.mxu0 0
      %1546 = vmatpush1.bf16.msra.mxu0 %v1452
      %1547 = vmatprep.subr.bf16.mxu0 0
      %1548 = vmatpush1.bf16.msra.mxu0 %v1455
      %1549 = vmatprep.subr.bf16.mxu0 0
      %1550 = vmatpush1.bf16.msra.mxu0 0
      %1551 = vmatprep.subr.bf16.mxu0 0
      %1552 = vmatpush1.bf16.msra.mxu0 0
      %1553 = vmatprep.subr.bf16.mxu0 0
      %1554 = vmatpush1.bf16.msra.mxu0 0
      %1555 = vmatprep.subr.bf16.mxu0 0
      %1556 = vmatpush1.bf16.msra.mxu0 0
      %1557 = vmatprep.subr.bf16.mxu0 0
      %1558 = vmatpush1.bf16.msra.mxu0 0
      %1559 = vmatprep.subr.bf16.mxu0 0
      %1560 = vmatpush1.bf16.msra.mxu0 0
      %1561 = vmatprep.subr.bf16.mxu0 0
      %1562 = vmatpush1.bf16.msra.mxu0 0
      %1563 = vmatprep.subr.bf16.mxu0 0
      %1564 = vmatpush1.bf16.msra.mxu0 0
      %1565 = vmatprep.mubr.bf16.mxu0 0
      %1566 = vmatmul.mubr.bf16.gmra.mrb[0].mxu0 %v1333
      %v1567 = vpop.f32.mrb[0].mxu0
      %v1568 = vadd.f32 %v1348, %v1567
      %v1569 = vpop.f32.mrb[0].mxu0
      %v1570 = vpop.f32.mrb[0].mxu0
      %v1571 = vadd.f32 %v1348, %v1570
      %v1572 = vpop.f32.mrb[0].mxu0
      %1573 = vmatprep.mubr.bf16.mxu0 0
      %1574 = vmatmul.mubr.bf16.gmra.mrb[0].mxu0 %v1334
      %v1575 = vpop.f32.mrb[0].mxu0
      %v1576 = vadd.f32 %v1348, %v1575
      %v1577 = vpop.f32.mrb[0].mxu0
      %v1578 = vpop.f32.mrb[0].mxu0
      %v1579 = vadd.f32 %v1348, %v1578
      %v1580 = vpop.f32.mrb[0].mxu0
      %1581 = vdwg.mxu0
      %v1582 = vpack.c.bf16 %v1519, %v1515
      %v1583 = vpack.c.bf16 %v1529, %v1525
      %v1584 = vpack.c.bf16 %v1521, %v1517
      %v1585 = vpack.c.bf16 %v1531, %v1527
      %vm1586 = vcmask 261120
      %v1588 = vsel %vm1586, %v1582, 0
      %v1591 = vsel %vm1586, %v1583, 0
      %v1594 = vsel %vm1586, %v1584, 0
      %v1597 = vsel %vm1586, %v1585, 0
      %1599 = vmatprep.subr.bf16.mxu0 0
      %1600 = vmatpush1.bf16.xpose.msra.mxu0 %v1594
      %1601 = vmatprep.subr.bf16.mxu0 0
      %1602 = vmatpush1.bf16.xpose.msra.mxu0 %v1597
      %1603 = vmatprep.subr.bf16.mxu0 0
      %1604 = vmatpush1.bf16.xpose.msra.mxu0 0
      %1605 = vmatprep.subr.bf16.mxu0 0
      %1606 = vmatpush1.bf16.xpose.msra.mxu0 0
      %1607 = vmatprep.subr.bf16.mxu0 0
      %1608 = vmatpush1.bf16.xpose.msra.mxu0 0
      %1609 = vmatprep.subr.bf16.mxu0 0
      %1610 = vmatpush1.bf16.xpose.msra.mxu0 0
      %1611 = vmatprep.subr.bf16.mxu0 0
      %1612 = vmatpush1.bf16.xpose.msra.mxu0 0
      %1613 = vmatprep.subr.bf16.mxu0 0
      %1614 = vmatpush1.bf16.xpose.msra.mxu0 0
      %1615 = vmatprep.subr.bf16.mxu0 0
      %1616 = vmatpush1.bf16.xpose.msra.mxu0 0
      %1617 = vmatprep.subr.bf16.mxu0 0
      %1618 = vmatpush1.bf16.xpose.msra.mxu0 0
      %1619 = vmatprep.subr.bf16.mxu0 0
      %1620 = vmatpush1.bf16.xpose.msra.mxu0 0
      %1621 = vmatprep.subr.bf16.mxu0 0
      %1622 = vmatpush1.bf16.xpose.msra.mxu0 0
      %1623 = vmatprep.subr.bf16.mxu0 0
      %1624 = vmatpush1.bf16.xpose.msra.mxu0 0
      %1625 = vmatprep.subr.bf16.mxu0 0
      %1626 = vmatpush1.bf16.xpose.msra.mxu0 0
      %1627 = vmatprep.subr.bf16.mxu0 0
      %1628 = vmatpush1.bf16.xpose.msra.mxu0 0
      %1629 = vmatprep.subr.bf16.mxu0 0
      %1630 = vmatpush1.bf16.xpose.msra.mxu0 0
      %1631 = vmatprep.mubr.bf16.mxu0 0
      %1632 = vmatmul.mubr.bf16.gmra.mrb[0].mxu0 %v1588
      %v1633 = vpop.f32.mrb[0].mxu0
      %v1634 = vadd.f32 %v815, %v1633
      %v1635 = vpop.f32.mrb[0].mxu0
      %v1636 = vpop.f32.mrb[0].mxu0
      %v1637 = vadd.f32 %v815, %v1636
      %v1638 = vpop.f32.mrb[0].mxu0
      %1639 = vmatprep.mubr.bf16.mxu0 0
      %1640 = vmatmul.mubr.bf16.gmra.mrb[0].mxu0 %v1591
      %v1641 = vpop.f32.mrb[0].mxu0
      %v1642 = vadd.f32 %v815, %v1641
      %v1643 = vpop.f32.mrb[0].mxu0
      %v1644 = vpop.f32.mrb[0].mxu0
      %v1645 = vadd.f32 %v815, %v1644
      %v1646 = vpop.f32.mrb[0].mxu0
      %1647 = vdwg.mxu0
      %v1648 = vsel %vm1586, %v1634, -inf
      %1649 = vmax.xlane.f32.xlu0 %v1648
      %v1650 = vpop.xlane.xlu0 %1649
      %v1651 = vsel %vm1586, %v1637, -inf
      %1652 = vmax.xlane.f32.xlu0 %v1651
      %v1653 = vpop.xlane.xlu0 %1652
      %v1654 = vsel %vm1586, %v1642, -inf
      %1655 = vmax.xlane.f32.xlu0 %v1654
      %v1656 = vpop.xlane.xlu0 %1655
      %v1657 = vsel %vm1586, %v1645, -inf
      %1658 = vmax.xlane.f32.xlu0 %v1657
      %v1659 = vpop.xlane.xlu0 %1658
      %v1660 = vsub.f32 %v1634, %v1650
      %v1661 = vsub.f32 %v1637, %v1653
      %v1662 = vsub.f32 %v1642, %v1656
      %v1663 = vsub.f32 %v1645, %v1659
      %v1664 = vmul.f32 %v1660, 1.442695
      %v1665 = vpow.pop %v1664
      %v1666 = vmul.f32 %v1661, 1.442695
      %v1667 = vpow.pop %v1666
      %v1668 = vmul.f32 %v1662, 1.442695
      %v1669 = vpow.pop %v1668
      %v1670 = vmul.f32 %v1663, 1.442695
      %v1671 = vpow.pop %v1670
      %v1672 = vsel %vm1586, %v1665, 0.0
      %1673 = vadd.xlane.f32.xlu0 %v1672
      %v1674 = vpop.xlane.xlu0 %1673
      %v1675 = vsel %vm1586, %v1667, 0.0
      %1676 = vadd.xlane.f32.xlu0 %v1675
      %v1677 = vpop.xlane.xlu0 %1676
      %v1678 = vsel %vm1586, %v1669, 0.0
      %1679 = vadd.xlane.f32.xlu0 %v1678
      %v1680 = vpop.xlane.xlu0 %1679
      %v1681 = vsel %vm1586, %v1671, 0.0
      %1682 = vadd.xlane.f32.xlu0 %v1681
      %v1683 = vpop.xlane.xlu0 %1682
      %v1684 = vrcp.pop %v1674
      %v1685 = vrcp.pop %v1677
      %v1686 = vrcp.pop %v1680
      %v1687 = vrcp.pop %v1683
      %v1688 = vmul.f32 %v1665, %v1684
      %v1689 = vmul.f32 %v1667, %v1685
      %v1690 = vmul.f32 %v1669, %v1686
      %v1691 = vmul.f32 %v1671, %v1687
      %v1692 = vpack.c.bf16 %v1689, %v1688
      %v1693 = vpack.c.bf16 %v1691, %v1690
      %v1694 = vpack.c.bf16 %v1571, %v1568
      %v1695 = vpack.c.bf16 %v1579, %v1576
      %v1697 = vsel %vm1586, %v1692, 0
      %v1700 = vsel %vm1586, %v1693, 0
      %1702 = vmatprep.subr.bf16.mxu0 0
      %1703 = vmatpush1.bf16.msra.mxu0 %v1694
      %1704 = vmatprep.subr.bf16.mxu0 0
      %1705 = vmatpush1.bf16.msra.mxu0 %v1695
      %1706 = vmatprep.subr.bf16.mxu0 0
      %1707 = vmatpush1.bf16.msra.mxu0 0
      %1708 = vmatprep.subr.bf16.mxu0 0
      %1709 = vmatpush1.bf16.msra.mxu0 0
      %1710 = vmatprep.subr.bf16.mxu0 0
      %1711 = vmatpush1.bf16.msra.mxu0 0
      %1712 = vmatprep.subr.bf16.mxu0 0
      %1713 = vmatpush1.bf16.msra.mxu0 0
      %1714 = vmatprep.subr.bf16.mxu0 0
      %1715 = vmatpush1.bf16.msra.mxu0 0
      %1716 = vmatprep.subr.bf16.mxu0 0
      %1717 = vmatpush1.bf16.msra.mxu0 0
      %1718 = vmatprep.subr.bf16.mxu0 0
      %1719 = vmatpush1.bf16.msra.mxu0 0
      %1720 = vmatprep.subr.bf16.mxu0 0
      %1721 = vmatpush1.bf16.msra.mxu0 0
      %1722 = vmatprep.subr.bf16.mxu0 0
      %1723 = vmatpush1.bf16.msra.mxu0 0
      %1724 = vmatprep.subr.bf16.mxu0 0
      %1725 = vmatpush1.bf16.msra.mxu0 0
      %1726 = vmatprep.subr.bf16.mxu0 0
      %1727 = vmatpush1.bf16.msra.mxu0 0
      %1728 = vmatprep.subr.bf16.mxu0 0
      %1729 = vmatpush1.bf16.msra.mxu0 0
      %1730 = vmatprep.subr.bf16.mxu0 0
      %1731 = vmatpush1.bf16.msra.mxu0 0
      %1732 = vmatprep.subr.bf16.mxu0 0
      %1733 = vmatpush1.bf16.msra.mxu0 0
      %1734 = vmatprep.mubr.bf16.mxu0 0
      %1735 = vmatmul.mubr.bf16.gmra.mrb[0].mxu0 %v1697
      %v1736 = vpop.f32.mrb[0].mxu0
      %v1737 = vadd.f32 0.0, %v1736
      %v1738 = vpop.f32.mrb[0].mxu0
      %v1739 = vpop.f32.mrb[0].mxu0
      %v1740 = vadd.f32 0.0, %v1739
      %v1741 = vpop.f32.mrb[0].mxu0
      %1742 = vmatprep.mubr.bf16.mxu0 0
      %1743 = vmatmul.mubr.bf16.gmra.mrb[0].mxu0 %v1700
      %v1744 = vpop.f32.mrb[0].mxu0
      %v1745 = vadd.f32 0.0, %v1744
      %v1746 = vpop.f32.mrb[0].mxu0
      %v1747 = vpop.f32.mrb[0].mxu0
      %v1748 = vadd.f32 0.0, %v1747
      %v1749 = vpop.f32.mrb[0].mxu0
      %1750 = vdwg.mxu0
      %v1751 = vpack.c.bf16 %v1740, %v1737
      %v1752 = vpack.c.bf16 %v1748, %v1745
      %1753 = vst.msk [vmem:[#allocation3] sm:$0xff] %vm1586, %v1751
      %1754 = vst.msk [vmem:[#allocation3 + $0x8] sm:$0xff] %vm1586, %v1752
      %1757 = vrot.lane.b32.xlu0 %v1582, 96
      %v1758 = vpop.permute.xlu0 %1757
      %1759 = vrot.lane.b32.xlu0 %v1583, 96
      %v1760 = vpop.permute.xlu0 %1759
      %1763 = vrot.lane.b32.xlu0 %v1584, 96
      %v1764 = vpop.permute.xlu0 %1763
      %1765 = vrot.lane.b32.xlu0 %v1585, 96
      %v1766 = vpop.permute.xlu0 %1765
      %v1768 = vsel %vm1586, %v1758, 0
      %v1771 = vsel %vm1586, %v1760, 0
      %v1774 = vsel %vm1586, %v1764, 0
      %v1777 = vsel %vm1586, %v1766, 0
      %1779 = vmatprep.subr.bf16.mxu0 0
      %1780 = vmatpush1.bf16.xpose.msra.mxu0 %v1774
      %1781 = vmatprep.subr.bf16.mxu0 0
      %1782 = vmatpush1.bf16.xpose.msra.mxu0 %v1777
      %1783 = vmatprep.subr.bf16.mxu0 0
      %1784 = vmatpush1.bf16.xpose.msra.mxu0 0
      %1785 = vmatprep.subr.bf16.mxu0 0
      %1786 = vmatpush1.bf16.xpose.msra.mxu0 0
      %1787 = vmatprep.subr.bf16.mxu0 0
      %1788 = vmatpush1.bf16.xpose.msra.mxu0 0
      %1789 = vmatprep.subr.bf16.mxu0 0
      %1790 = vmatpush1.bf16.xpose.msra.mxu0 0
      %1791 = vmatprep.subr.bf16.mxu0 0
      %1792 = vmatpush1.bf16.xpose.msra.mxu0 0
      %1793 = vmatprep.subr.bf16.mxu0 0
      %1794 = vmatpush1.bf16.xpose.msra.mxu0 0
      %1795 = vmatprep.subr.bf16.mxu0 0
      %1796 = vmatpush1.bf16.xpose.msra.mxu0 0
      %1797 = vmatprep.subr.bf16.mxu0 0
      %1798 = vmatpush1.bf16.xpose.msra.mxu0 0
      %1799 = vmatprep.subr.bf16.mxu0 0
      %1800 = vmatpush1.bf16.xpose.msra.mxu0 0
      %1801 = vmatprep.subr.bf16.mxu0 0
      %1802 = vmatpush1.bf16.xpose.msra.mxu0 0
      %1803 = vmatprep.subr.bf16.mxu0 0
      %1804 = vmatpush1.bf16.xpose.msra.mxu0 0
      %1805 = vmatprep.subr.bf16.mxu0 0
      %1806 = vmatpush1.bf16.xpose.msra.mxu0 0
      %1807 = vmatprep.subr.bf16.mxu0 0
      %1808 = vmatpush1.bf16.xpose.msra.mxu0 0
      %1809 = vmatprep.subr.bf16.mxu0 0
      %1810 = vmatpush1.bf16.xpose.msra.mxu0 0
      %1811 = vmatprep.mubr.bf16.mxu0 0
      %1812 = vmatmul.mubr.bf16.gmra.mrb[0].mxu0 %v1768
      %v1813 = vpop.f32.mrb[0].mxu0
      %v1814 = vadd.f32 %v815, %v1813
      %v1815 = vpop.f32.mrb[0].mxu0
      %v1816 = vpop.f32.mrb[0].mxu0
      %v1817 = vadd.f32 %v815, %v1816
      %v1818 = vpop.f32.mrb[0].mxu0
      %1819 = vmatprep.mubr.bf16.mxu0 0
      %1820 = vmatmul.mubr.bf16.gmra.mrb[0].mxu0 %v1771
      %v1821 = vpop.f32.mrb[0].mxu0
      %v1822 = vadd.f32 %v815, %v1821
      %v1823 = vpop.f32.mrb[0].mxu0
      %v1824 = vpop.f32.mrb[0].mxu0
      %v1825 = vadd.f32 %v815, %v1824
      %v1826 = vpop.f32.mrb[0].mxu0
      %1827 = vdwg.mxu0
      %v1828 = vsel %vm1586, %v1814, -inf
      %1829 = vmax.xlane.f32.xlu0 %v1828
      %v1830 = vpop.xlane.xlu0 %1829
      %v1831 = vsel %vm1586, %v1817, -inf
      %1832 = vmax.xlane.f32.xlu0 %v1831
      %v1833 = vpop.xlane.xlu0 %1832
      %v1834 = vsel %vm1586, %v1822, -inf
      %1835 = vmax.xlane.f32.xlu0 %v1834
      %v1836 = vpop.xlane.xlu0 %1835
      %v1837 = vsel %vm1586, %v1825, -inf
      %1838 = vmax.xlane.f32.xlu0 %v1837
      %v1839 = vpop.xlane.xlu0 %1838
      %v1840 = vsub.f32 %v1814, %v1830
      %v1841 = vsub.f32 %v1817, %v1833
      %v1842 = vsub.f32 %v1822, %v1836
      %v1843 = vsub.f32 %v1825, %v1839
      %v1844 = vmul.f32 %v1840, 1.442695
      %v1845 = vpow.pop %v1844
      %v1846 = vmul.f32 %v1841, 1.442695
      %v1847 = vpow.pop %v1846
      %v1848 = vmul.f32 %v1842, 1.442695
      %v1849 = vpow.pop %v1848
      %v1850 = vmul.f32 %v1843, 1.442695
      %v1851 = vpow.pop %v1850
      %v1852 = vsel %vm1586, %v1845, 0.0
      %1853 = vadd.xlane.f32.xlu0 %v1852
      %v1854 = vpop.xlane.xlu0 %1853
      %v1855 = vsel %vm1586, %v1847, 0.0
      %1856 = vadd.xlane.f32.xlu0 %v1855
      %v1857 = vpop.xlane.xlu0 %1856
      %v1858 = vsel %vm1586, %v1849, 0.0
      %1859 = vadd.xlane.f32.xlu0 %v1858
      %v1860 = vpop.xlane.xlu0 %1859
      %v1861 = vsel %vm1586, %v1851, 0.0
      %1862 = vadd.xlane.f32.xlu0 %v1861
      %v1863 = vpop.xlane.xlu0 %1862
      %v1864 = vrcp.pop %v1854
      %v1865 = vrcp.pop %v1857
      %v1866 = vrcp.pop %v1860
      %v1867 = vrcp.pop %v1863
      %v1868 = vmul.f32 %v1845, %v1864
      %v1869 = vmul.f32 %v1847, %v1865
      %v1870 = vmul.f32 %v1849, %v1866
      %v1871 = vmul.f32 %v1851, %v1867
      %v1872 = vpack.c.bf16 %v1869, %v1868
      %v1873 = vpack.c.bf16 %v1871, %v1870
      %1876 = vrot.lane.b32.xlu0 %v1694, 96
      %v1877 = vpop.permute.xlu0 %1876
      %1878 = vrot.lane.b32.xlu0 %v1695, 96
      %v1879 = vpop.permute.xlu0 %1878
      %v1883 = vsel %vm1586, %v1872, 0
      %v1886 = vsel %vm1586, %v1873, 0
      %1888 = vmatprep.subr.bf16.mxu0 0
      %1889 = vmatpush1.bf16.msra.mxu0 %v1877
      %1890 = vmatprep.subr.bf16.mxu0 0
      %1891 = vmatpush1.bf16.msra.mxu0 %v1879
      %1892 = vmatprep.subr.bf16.mxu0 0
      %1893 = vmatpush1.bf16.msra.mxu0 0
      %1894 = vmatprep.subr.bf16.mxu0 0
      %1895 = vmatpush1.bf16.msra.mxu0 0
      %1896 = vmatprep.subr.bf16.mxu0 0
      %1897 = vmatpush1.bf16.msra.mxu0 0
      %1898 = vmatprep.subr.bf16.mxu0 0
      %1899 = vmatpush1.bf16.msra.mxu0 0
      %1900 = vmatprep.subr.bf16.mxu0 0
      %1901 = vmatpush1.bf16.msra.mxu0 0
      %1902 = vmatprep.subr.bf16.mxu0 0
      %1903 = vmatpush1.bf16.msra.mxu0 0
      %1904 = vmatprep.subr.bf16.mxu0 0
      %1905 = vmatpush1.bf16.msra.mxu0 0
      %1906 = vmatprep.subr.bf16.mxu0 0
      %1907 = vmatpush1.bf16.msra.mxu0 0
      %1908 = vmatprep.subr.bf16.mxu0 0
      %1909 = vmatpush1.bf16.msra.mxu0 0
      %1910 = vmatprep.subr.bf16.mxu0 0
      %1911 = vmatpush1.bf16.msra.mxu0 0
      %1912 = vmatprep.subr.bf16.mxu0 0
      %1913 = vmatpush1.bf16.msra.mxu0 0
      %1914 = vmatprep.subr.bf16.mxu0 0
      %1915 = vmatpush1.bf16.msra.mxu0 0
      %1916 = vmatprep.subr.bf16.mxu0 0
      %1917 = vmatpush1.bf16.msra.mxu0 0
      %1918 = vmatprep.subr.bf16.mxu0 0
      %1919 = vmatpush1.bf16.msra.mxu0 0
      %1920 = vmatprep.mubr.bf16.mxu0 0
      %1921 = vmatmul.mubr.bf16.gmra.mrb[0].mxu0 %v1883
      %v1922 = vpop.f32.mrb[0].mxu0
      %v1923 = vadd.f32 0.0, %v1922
      %v1924 = vpop.f32.mrb[0].mxu0
      %v1925 = vpop.f32.mrb[0].mxu0
      %v1926 = vadd.f32 0.0, %v1925
      %v1927 = vpop.f32.mrb[0].mxu0
      %1928 = vmatprep.mubr.bf16.mxu0 0
      %1929 = vmatmul.mubr.bf16.gmra.mrb[0].mxu0 %v1886
      %v1930 = vpop.f32.mrb[0].mxu0
      %v1931 = vadd.f32 0.0, %v1930
      %v1932 = vpop.f32.mrb[0].mxu0
      %v1933 = vpop.f32.mrb[0].mxu0
      %v1934 = vadd.f32 0.0, %v1933
      %v1935 = vpop.f32.mrb[0].mxu0
      %1936 = vdwg.mxu0
      %v1937 = vpack.c.bf16 %v1926, %v1923
      %v1938 = vpack.c.bf16 %v1934, %v1931
      %1941 = vrot.lane.b32.xlu0 %v1937, 32
      %v1942 = vpop.permute.xlu0 %1941
      %1943 = vrot.lane.b32.xlu0 %v1938, 32
      %v1944 = vpop.permute.xlu0 %1943
      %vm1947 = vcmask 523520
      %1948 = vst.msk [vmem:[#allocation3] sm:$0xff] %vm1947, %v1942
      %1949 = vst.msk [vmem:[#allocation3 + $0x8] sm:$0xff] %vm1947, %v1944
      %1950 = vrot.lane.b32.xlu0 %v1582, 64
      %v1951 = vpop.permute.xlu0 %1950
      %1952 = vrot.lane.b32.xlu0 %v1583, 64
      %v1953 = vpop.permute.xlu0 %1952
      %1954 = vrot.lane.b32.xlu0 %v1584, 64
      %v1955 = vpop.permute.xlu0 %1954
      %1956 = vrot.lane.b32.xlu0 %v1585, 64
      %v1957 = vpop.permute.xlu0 %1956
      %v1959 = vsel %vm1586, %v1951, 0
      %v1962 = vsel %vm1586, %v1953, 0
      %v1965 = vsel %vm1586, %v1955, 0
      %v1968 = vsel %vm1586, %v1957, 0
      %1970 = vmatprep.subr.bf16.mxu0 0
      %1971 = vmatpush1.bf16.xpose.msra.mxu0 %v1965
      %1972 = vmatprep.subr.bf16.mxu0 0
      %1973 = vmatpush1.bf16.xpose.msra.mxu0 %v1968
      %1974 = vmatprep.subr.bf16.mxu0 0
      %1975 = vmatpush1.bf16.xpose.msra.mxu0 0
      %1976 = vmatprep.subr.bf16.mxu0 0
      %1977 = vmatpush1.bf16.xpose.msra.mxu0 0
      %1978 = vmatprep.subr.bf16.mxu0 0
      %1979 = vmatpush1.bf16.xpose.msra.mxu0 0
      %1980 = vmatprep.subr.bf16.mxu0 0
      %1981 = vmatpush1.bf16.xpose.msra.mxu0 0
      %1982 = vmatprep.subr.bf16.mxu0 0
      %1983 = vmatpush1.bf16.xpose.msra.mxu0 0
      %1984 = vmatprep.subr.bf16.mxu0 0
      %1985 = vmatpush1.bf16.xpose.msra.mxu0 0
      %1986 = vmatprep.subr.bf16.mxu0 0
      %1987 = vmatpush1.bf16.xpose.msra.mxu0 0
      %1988 = vmatprep.subr.bf16.mxu0 0
      %1989 = vmatpush1.bf16.xpose.msra.mxu0 0
      %1990 = vmatprep.subr.bf16.mxu0 0
      %1991 = vmatpush1.bf16.xpose.msra.mxu0 0
      %1992 = vmatprep.subr.bf16.mxu0 0
      %1993 = vmatpush1.bf16.xpose.msra.mxu0 0
      %1994 = vmatprep.subr.bf16.mxu0 0
      %1995 = vmatpush1.bf16.xpose.msra.mxu0 0
      %1996 = vmatprep.subr.bf16.mxu0 0
      %1997 = vmatpush1.bf16.xpose.msra.mxu0 0
      %1998 = vmatprep.subr.bf16.mxu0 0
      %1999 = vmatpush1.bf16.xpose.msra.mxu0 0
      %2000 = vmatprep.subr.bf16.mxu0 0
      %2001 = vmatpush1.bf16.xpose.msra.mxu0 0
      %2002 = vmatprep.mubr.bf16.mxu0 0
      %2003 = vmatmul.mubr.bf16.gmra.mrb[0].mxu0 %v1959
      %v2004 = vpop.f32.mrb[0].mxu0
      %v2005 = vadd.f32 %v815, %v2004
      %v2006 = vpop.f32.mrb[0].mxu0
      %v2007 = vpop.f32.mrb[0].mxu0
      %v2008 = vadd.f32 %v815, %v2007
      %v2009 = vpop.f32.mrb[0].mxu0
      %2010 = vmatprep.mubr.bf16.mxu0 0
      %2011 = vmatmul.mubr.bf16.gmra.mrb[0].mxu0 %v1962
      %v2012 = vpop.f32.mrb[0].mxu0
      %v2013 = vadd.f32 %v815, %v2012
      %v2014 = vpop.f32.mrb[0].mxu0
      %v2015 = vpop.f32.mrb[0].mxu0
      %v2016 = vadd.f32 %v815, %v2015
      %v2017 = vpop.f32.mrb[0].mxu0
      %2018 = vdwg.mxu0
      %v2019 = vsel %vm1586, %v2005, -inf
      %2020 = vmax.xlane.f32.xlu0 %v2019
      %v2021 = vpop.xlane.xlu0 %2020
      %v2022 = vsel %vm1586, %v2008, -inf
      %2023 = vmax.xlane.f32.xlu0 %v2022
      %v2024 = vpop.xlane.xlu0 %2023
      %v2025 = vsel %vm1586, %v2013, -inf
      %2026 = vmax.xlane.f32.xlu0 %v2025
      %v2027 = vpop.xlane.xlu0 %2026
      %v2028 = vsel %vm1586, %v2016, -inf
      %2029 = vmax.xlane.f32.xlu0 %v2028
      %v2030 = vpop.xlane.xlu0 %2029
      %v2031 = vsub.f32 %v2005, %v2021
      %v2032 = vsub.f32 %v2008, %v2024
      %v2033 = vsub.f32 %v2013, %v2027
      %v2034 = vsub.f32 %v2016, %v2030
      %v2035 = vmul.f32 %v2031, 1.442695
      %v2036 = vpow.pop %v2035
      %v2037 = vmul.f32 %v2032, 1.442695
      %v2038 = vpow.pop %v2037
      %v2039 = vmul.f32 %v2033, 1.442695
      %v2040 = vpow.pop %v2039
      %v2041 = vmul.f32 %v2034, 1.442695
      %v2042 = vpow.pop %v2041
      %v2043 = vsel %vm1586, %v2036, 0.0
      %2044 = vadd.xlane.f32.xlu0 %v2043
      %v2045 = vpop.xlane.xlu0 %2044
      %v2046 = vsel %vm1586, %v2038, 0.0
      %2047 = vadd.xlane.f32.xlu0 %v2046
      %v2048 = vpop.xlane.xlu0 %2047
      %v2049 = vsel %vm1586, %v2040, 0.0
      %2050 = vadd.xlane.f32.xlu0 %v2049
      %v2051 = vpop.xlane.xlu0 %2050
      %v2052 = vsel %vm1586, %v2042, 0.0
      %2053 = vadd.xlane.f32.xlu0 %v2052
      %v2054 = vpop.xlane.xlu0 %2053
      %v2055 = vrcp.pop %v2045
      %v2056 = vrcp.pop %v2048
      %v2057 = vrcp.pop %v2051
      %v2058 = vrcp.pop %v2054
      %v2059 = vmul.f32 %v2036, %v2055
      %v2060 = vmul.f32 %v2038, %v2056
      %v2061 = vmul.f32 %v2040, %v2057
      %v2062 = vmul.f32 %v2042, %v2058
      %v2063 = vpack.c.bf16 %v2060, %v2059
      %v2064 = vpack.c.bf16 %v2062, %v2061
      %2065 = vrot.lane.b32.xlu0 %v1694, 64
      %v2066 = vpop.permute.xlu0 %2065
      %2067 = vrot.lane.b32.xlu0 %v1695, 64
      %v2068 = vpop.permute.xlu0 %2067
      %v2072 = vsel %vm1586, %v2063, 0
      %v2075 = vsel %vm1586, %v2064, 0
      %2077 = vmatprep.subr.bf16.mxu0 0
      %2078 = vmatpush1.bf16.msra.mxu0 %v2066
      %2079 = vmatprep.subr.bf16.mxu0 0
      %2080 = vmatpush1.bf16.msra.mxu0 %v2068
      %2081 = vmatprep.subr.bf16.mxu0 0
      %2082 = vmatpush1.bf16.msra.mxu0 0
      %2083 = vmatprep.subr.bf16.mxu0 0
      %2084 = vmatpush1.bf16.msra.mxu0 0
      %2085 = vmatprep.subr.bf16.mxu0 0
      %2086 = vmatpush1.bf16.msra.mxu0 0
      %2087 = vmatprep.subr.bf16.mxu0 0
      %2088 = vmatpush1.bf16.msra.mxu0 0
      %2089 = vmatprep.subr.bf16.mxu0 0
      %2090 = vmatpush1.bf16.msra.mxu0 0
      %2091 = vmatprep.subr.bf16.mxu0 0
      %2092 = vmatpush1.bf16.msra.mxu0 0
      %2093 = vmatprep.subr.bf16.mxu0 0
      %2094 = vmatpush1.bf16.msra.mxu0 0
      %2095 = vmatprep.subr.bf16.mxu0 0
      %2096 = vmatpush1.bf16.msra.mxu0 0
      %2097 = vmatprep.subr.bf16.mxu0 0
      %2098 = vmatpush1.bf16.msra.mxu0 0
      %2099 = vmatprep.subr.bf16.mxu0 0
      %2100 = vmatpush1.bf16.msra.mxu0 0
      %2101 = vmatprep.subr.bf16.mxu0 0
      %2102 = vmatpush1.bf16.msra.mxu0 0
      %2103 = vmatprep.subr.bf16.mxu0 0
      %2104 = vmatpush1.bf16.msra.mxu0 0
      %2105 = vmatprep.subr.bf16.mxu0 0
      %2106 = vmatpush1.bf16.msra.mxu0 0
      %2107 = vmatprep.subr.bf16.mxu0 0
      %2108 = vmatpush1.bf16.msra.mxu0 0
      %2109 = vmatprep.mubr.bf16.mxu0 0
      %2110 = vmatmul.mubr.bf16.gmra.mrb[0].mxu0 %v2072
      %v2111 = vpop.f32.mrb[0].mxu0
      %v2112 = vadd.f32 0.0, %v2111
      %v2113 = vpop.f32.mrb[0].mxu0
      %v2114 = vpop.f32.mrb[0].mxu0
      %v2115 = vadd.f32 0.0, %v2114
      %v2116 = vpop.f32.mrb[0].mxu0
      %2117 = vmatprep.mubr.bf16.mxu0 0
      %2118 = vmatmul.mubr.bf16.gmra.mrb[0].mxu0 %v2075
      %v2119 = vpop.f32.mrb[0].mxu0
      %v2120 = vadd.f32 0.0, %v2119
      %v2121 = vpop.f32.mrb[0].mxu0
      %v2122 = vpop.f32.mrb[0].mxu0
      %v2123 = vadd.f32 0.0, %v2122
      %v2124 = vpop.f32.mrb[0].mxu0
      %2125 = vdwg.mxu0
      %v2126 = vpack.c.bf16 %v2115, %v2112
      %v2127 = vpack.c.bf16 %v2123, %v2120
      %2130 = vrot.lane.b32.xlu0 %v2126, 64
      %v2131 = vpop.permute.xlu0 %2130
      %2132 = vrot.lane.b32.xlu0 %v2127, 64
      %v2133 = vpop.permute.xlu0 %2132
      %vm2136 = vcmask 785920
      %2137 = vst.msk [vmem:[#allocation3] sm:$0xff] %vm2136, %v2131
      %2138 = vst.msk [vmem:[#allocation3 + $0x8] sm:$0xff] %vm2136, %v2133
      %2139 = vrot.lane.b32.xlu0 %v1582, 32
      %v2140 = vpop.permute.xlu0 %2139
      %2141 = vrot.lane.b32.xlu0 %v1583, 32
      %v2142 = vpop.permute.xlu0 %2141
      %2143 = vrot.lane.b32.xlu0 %v1584, 32
      %v2144 = vpop.permute.xlu0 %2143
      %2145 = vrot.lane.b32.xlu0 %v1585, 32
      %v2146 = vpop.permute.xlu0 %2145
      %v2148 = vsel %vm1586, %v2140, 0
      %v2151 = vsel %vm1586, %v2142, 0
      %v2154 = vsel %vm1586, %v2144, 0
      %v2157 = vsel %vm1586, %v2146, 0
      %2159 = vmatprep.subr.bf16.mxu0 0
      %2160 = vmatpush1.bf16.xpose.msra.mxu0 %v2154
      %2161 = vmatprep.subr.bf16.mxu0 0
      %2162 = vmatpush1.bf16.xpose.msra.mxu0 %v2157
      %2163 = vmatprep.subr.bf16.mxu0 0
      %2164 = vmatpush1.bf16.xpose.msra.mxu0 0
      %2165 = vmatprep.subr.bf16.mxu0 0
      %2166 = vmatpush1.bf16.xpose.msra.mxu0 0
      %2167 = vmatprep.subr.bf16.mxu0 0
      %2168 = vmatpush1.bf16.xpose.msra.mxu0 0
      %2169 = vmatprep.subr.bf16.mxu0 0
      %2170 = vmatpush1.bf16.xpose.msra.mxu0 0
      %2171 = vmatprep.subr.bf16.mxu0 0
      %2172 = vmatpush1.bf16.xpose.msra.mxu0 0
      %2173 = vmatprep.subr.bf16.mxu0 0
      %2174 = vmatpush1.bf16.xpose.msra.mxu0 0
      %2175 = vmatprep.subr.bf16.mxu0 0
      %2176 = vmatpush1.bf16.xpose.msra.mxu0 0
      %2177 = vmatprep.subr.bf16.mxu0 0
      %2178 = vmatpush1.bf16.xpose.msra.mxu0 0
      %2179 = vmatprep.subr.bf16.mxu0 0
      %2180 = vmatpush1.bf16.xpose.msra.mxu0 0
      %2181 = vmatprep.subr.bf16.mxu0 0
      %2182 = vmatpush1.bf16.xpose.msra.mxu0 0
      %2183 = vmatprep.subr.bf16.mxu0 0
      %2184 = vmatpush1.bf16.xpose.msra.mxu0 0
      %2185 = vmatprep.subr.bf16.mxu0 0
      %2186 = vmatpush1.bf16.xpose.msra.mxu0 0
      %2187 = vmatprep.subr.bf16.mxu0 0
      %2188 = vmatpush1.bf16.xpose.msra.mxu0 0
      %2189 = vmatprep.subr.bf16.mxu0 0
      %2190 = vmatpush1.bf16.xpose.msra.mxu0 0
      %2191 = vmatprep.mubr.bf16.mxu0 0
      %2192 = vmatmul.mubr.bf16.gmra.mrb[0].mxu0 %v2148
      %v2193 = vpop.f32.mrb[0].mxu0
      %v2194 = vadd.f32 %v815, %v2193
      %v2195 = vpop.f32.mrb[0].mxu0
      %v2196 = vpop.f32.mrb[0].mxu0
      %v2197 = vadd.f32 %v815, %v2196
      %v2198 = vpop.f32.mrb[0].mxu0
      %2199 = vmatprep.mubr.bf16.mxu0 0
      %2200 = vmatmul.mubr.bf16.gmra.mrb[0].mxu0 %v2151
      %v2201 = vpop.f32.mrb[0].mxu0
      %v2202 = vadd.f32 %v815, %v2201
      %v2203 = vpop.f32.mrb[0].mxu0
      %v2204 = vpop.f32.mrb[0].mxu0
      %v2205 = vadd.f32 %v815, %v2204
      %v2206 = vpop.f32.mrb[0].mxu0
      %2207 = vdwg.mxu0
      %v2208 = vsel %vm1586, %v2194, -inf
      %2209 = vmax.xlane.f32.xlu0 %v2208
      %v2210 = vpop.xlane.xlu0 %2209
      %v2211 = vsel %vm1586, %v2197, -inf
      %2212 = vmax.xlane.f32.xlu0 %v2211
      %v2213 = vpop.xlane.xlu0 %2212
      %v2214 = vsel %vm1586, %v2202, -inf
      %2215 = vmax.xlane.f32.xlu0 %v2214
      %v2216 = vpop.xlane.xlu0 %2215
      %v2217 = vsel %vm1586, %v2205, -inf
      %2218 = vmax.xlane.f32.xlu0 %v2217
      %v2219 = vpop.xlane.xlu0 %2218
      %v2220 = vsub.f32 %v2194, %v2210
      %v2221 = vsub.f32 %v2197, %v2213
      %v2222 = vsub.f32 %v2202, %v2216
      %v2223 = vsub.f32 %v2205, %v2219
      %v2224 = vmul.f32 %v2220, 1.442695
      %v2225 = vpow.pop %v2224
      %v2226 = vmul.f32 %v2221, 1.442695
      %v2227 = vpow.pop %v2226
      %v2228 = vmul.f32 %v2222, 1.442695
      %v2229 = vpow.pop %v2228
      %v2230 = vmul.f32 %v2223, 1.442695
      %v2231 = vpow.pop %v2230
      %v2232 = vsel %vm1586, %v2225, 0.0
      %2233 = vadd.xlane.f32.xlu0 %v2232
      %v2234 = vpop.xlane.xlu0 %2233
      %v2235 = vsel %vm1586, %v2227, 0.0
      %2236 = vadd.xlane.f32.xlu0 %v2235
      %v2237 = vpop.xlane.xlu0 %2236
      %v2238 = vsel %vm1586, %v2229, 0.0
      %2239 = vadd.xlane.f32.xlu0 %v2238
      %v2240 = vpop.xlane.xlu0 %2239
      %v2241 = vsel %vm1586, %v2231, 0.0
      %2242 = vadd.xlane.f32.xlu0 %v2241
      %v2243 = vpop.xlane.xlu0 %2242
      %v2244 = vrcp.pop %v2234
      %v2245 = vrcp.pop %v2237
      %v2246 = vrcp.pop %v2240
      %v2247 = vrcp.pop %v2243
      %v2248 = vmul.f32 %v2225, %v2244
      %v2249 = vmul.f32 %v2227, %v2245
      %v2250 = vmul.f32 %v2229, %v2246
      %v2251 = vmul.f32 %v2231, %v2247
      %v2252 = vpack.c.bf16 %v2249, %v2248
      %v2253 = vpack.c.bf16 %v2251, %v2250
      %2254 = vrot.lane.b32.xlu0 %v1694, 32
      %v2255 = vpop.permute.xlu0 %2254
      %2256 = vrot.lane.b32.xlu0 %v1695, 32
      %v2257 = vpop.permute.xlu0 %2256
      %v2261 = vsel %vm1586, %v2252, 0
      %v2264 = vsel %vm1586, %v2253, 0
      %2266 = vmatprep.subr.bf16.mxu0 0
      %2267 = vmatpush1.bf16.msra.mxu0 %v2255
      %2268 = vmatprep.subr.bf16.mxu0 0
      %2269 = vmatpush1.bf16.msra.mxu0 %v2257
      %2270 = vmatprep.subr.bf16.mxu0 0
      %2271 = vmatpush1.bf16.msra.mxu0 0
      %2272 = vmatprep.subr.bf16.mxu0 0
      %2273 = vmatpush1.bf16.msra.mxu0 0
      %2274 = vmatprep.subr.bf16.mxu0 0
      %2275 = vmatpush1.bf16.msra.mxu0 0
      %2276 = vmatprep.subr.bf16.mxu0 0
      %2277 = vmatpush1.bf16.msra.mxu0 0
      %2278 = vmatprep.subr.bf16.mxu0 0
      %2279 = vmatpush1.bf16.msra.mxu0 0
      %2280 = vmatprep.subr.bf16.mxu0 0
      %2281 = vmatpush1.bf16.msra.mxu0 0
      %2282 = vmatprep.subr.bf16.mxu0 0
      %2283 = vmatpush1.bf16.msra.mxu0 0
      %2284 = vmatprep.subr.bf16.mxu0 0
      %2285 = vmatpush1.bf16.msra.mxu0 0
      %2286 = vmatprep.subr.bf16.mxu0 0
      %2287 = vmatpush1.bf16.msra.mxu0 0
      %2288 = vmatprep.subr.bf16.mxu0 0
      %2289 = vmatpush1.bf16.msra.mxu0 0
      %2290 = vmatprep.subr.bf16.mxu0 0
      %2291 = vmatpush1.bf16.msra.mxu0 0
      %2292 = vmatprep.subr.bf16.mxu0 0
      %2293 = vmatpush1.bf16.msra.mxu0 0
      %2294 = vmatprep.subr.bf16.mxu0 0
      %2295 = vmatpush1.bf16.msra.mxu0 0
      %2296 = vmatprep.subr.bf16.mxu0 0
      %2297 = vmatpush1.bf16.msra.mxu0 0
      %2298 = vmatprep.mubr.bf16.mxu0 0
      %2299 = vmatmul.mubr.bf16.gmra.mrb[0].mxu0 %v2261
      %v2300 = vpop.f32.mrb[0].mxu0
      %v2301 = vadd.f32 0.0, %v2300
      %v2302 = vpop.f32.mrb[0].mxu0
      %v2303 = vpop.f32.mrb[0].mxu0
      %v2304 = vadd.f32 0.0, %v2303
      %v2305 = vpop.f32.mrb[0].mxu0
      %2306 = vmatprep.mubr.bf16.mxu0 0
      %2307 = vmatmul.mubr.bf16.gmra.mrb[0].mxu0 %v2264
      %v2308 = vpop.f32.mrb[0].mxu0
      %v2309 = vadd.f32 0.0, %v2308
      %v2310 = vpop.f32.mrb[0].mxu0
      %v2311 = vpop.f32.mrb[0].mxu0
      %v2312 = vadd.f32 0.0, %v2311
      %v2313 = vpop.f32.mrb[0].mxu0
      %2314 = vdwg.mxu0
      %v2315 = vpack.c.bf16 %v2304, %v2301
      %v2316 = vpack.c.bf16 %v2312, %v2309
      %2319 = vrot.lane.b32.xlu0 %v2315, 96
      %v2320 = vpop.permute.xlu0 %2319
      %2321 = vrot.lane.b32.xlu0 %v2316, 96
      %v2322 = vpop.permute.xlu0 %2321
      %vm2325 = vcmask 1048320
      %2326 = vst.msk [vmem:[#allocation3] sm:$0xff] %vm2325, %v2320
      %2327 = vst.msk [vmem:[#allocation3 + $0x8] sm:$0xff] %vm2325, %v2322
      %v2328 = vld [vmem:[#allocation3] sm:$0xff]
      %v2329 = vld [vmem:[#allocation3 + $0x8] sm:$0xff]
      %v2330 = vld [vmem:[%s780] sm:$0xf]
      %v2331 = vld [vmem:[%s780 + $0x4] sm:$0xf]
      %v2332 = vld [vmem:[%s780 + $0x8] sm:$0xf]
      %v2333 = vld [vmem:[%s780 + $0xc] sm:$0xf]
      %v2334 = vld [vmem:[%s780 + $0x10] sm:$0xf]
      %v2335 = vld [vmem:[%s780 + $0x14] sm:$0xf]
      %v2336 = vld [vmem:[%s780 + $0x18] sm:$0xf]
      %v2337 = vld [vmem:[%s780 + $0x1c] sm:$0xf]
      %v2338 = vld [vmem:[%s780 + $0x20] sm:$0xf]
      %v2339 = vld [vmem:[%s780 + $0x24] sm:$0xf]
      %v2340 = vld [vmem:[%s780 + $0x28] sm:$0xf]
      %v2341 = vld [vmem:[%s780 + $0x2c] sm:$0xf]
      %v2342 = vld [vmem:[%s780 + $0x30] sm:$0xf]
      %v2343 = vld [vmem:[%s780 + $0x34] sm:$0xf]
      %v2344 = vld [vmem:[%s780 + $0x38] sm:$0xf]
      %v2345 = vld [vmem:[%s780 + $0x3c] sm:$0xf]
      %v2362 = vunpack.c.l.b16 %v2330
      %v2363 = vunpack.c.l.b16 %v2331
      %v2364 = vunpack.c.l.b16 %v2332
      %v2365 = vunpack.c.l.b16 %v2333
      %v2366 = vunpack.c.l.b16 %v2334
      %v2367 = vunpack.c.l.b16 %v2335
      %v2368 = vunpack.c.l.b16 %v2336
      %v2369 = vunpack.c.l.b16 %v2337
      %v2370 = vunpack.c.l.b16 %v2338
      %v2371 = vunpack.c.l.b16 %v2339
      %v2372 = vunpack.c.l.b16 %v2340
      %v2373 = vunpack.c.l.b16 %v2341
      %v2374 = vunpack.c.l.b16 %v2342
      %v2375 = vunpack.c.l.b16 %v2343
      %v2376 = vunpack.c.l.b16 %v2344
      %v2377 = vunpack.c.l.b16 %v2345
      %v2378 = vpack.c.b16 %v2363, %v2362
      %v2379 = vpack.c.b16 %v2365, %v2364
      %v2380 = vpack.c.b16 %v2367, %v2366
      %v2381 = vpack.c.b16 %v2369, %v2368
      %v2382 = vpack.c.b16 %v2371, %v2370
      %v2383 = vpack.c.b16 %v2373, %v2372
      %v2384 = vpack.c.b16 %v2375, %v2374
      %v2385 = vpack.c.b16 %v2377, %v2376
      %2394 = vmatprep.subr.bf16.mxu0 0
      %2395 = vmatpush1.bf16.msra.mxu0 %v2378
      %2396 = vmatprep.subr.bf16.mxu0 0
      %2397 = vmatpush1.bf16.msra.mxu0 %v2379
      %2398 = vmatprep.subr.bf16.mxu0 0
      %2399 = vmatpush1.bf16.msra.mxu0 %v2380
      %2400 = vmatprep.subr.bf16.mxu0 0
      %2401 = vmatpush1.bf16.msra.mxu0 %v2381
      %2402 = vmatprep.subr.bf16.mxu0 0
      %2403 = vmatpush1.bf16.msra.mxu0 %v2382
      %2404 = vmatprep.subr.bf16.mxu0 0
      %2405 = vmatpush1.bf16.msra.mxu0 %v2383
      %2406 = vmatprep.subr.bf16.mxu0 0
      %2407 = vmatpush1.bf16.msra.mxu0 %v2384
      %2408 = vmatprep.subr.bf16.mxu0 0
      %2409 = vmatpush1.bf16.msra.mxu0 %v2385
      %2410 = vmatprep.subr.bf16.mxu0 0
      %2411 = vmatpush1.bf16.msra.mxu0 0
      %2412 = vmatprep.subr.bf16.mxu0 0
      %2413 = vmatpush1.bf16.msra.mxu0 0
      %2414 = vmatprep.subr.bf16.mxu0 0
      %2415 = vmatpush1.bf16.msra.mxu0 0
      %2416 = vmatprep.subr.bf16.mxu0 0
      %2417 = vmatpush1.bf16.msra.mxu0 0
      %2418 = vmatprep.subr.bf16.mxu0 0
      %2419 = vmatpush1.bf16.msra.mxu0 0
      %2420 = vmatprep.subr.bf16.mxu0 0
      %2421 = vmatpush1.bf16.msra.mxu0 0
      %2422 = vmatprep.subr.bf16.mxu0 0
      %2423 = vmatpush1.bf16.msra.mxu0 0
      %2424 = vmatprep.subr.bf16.mxu0 0
      %2425 = vmatpush1.bf16.msra.mxu0 0
      %2426 = vmatprep.mubr.bf16.mxu0 0
      %2427 = vmatmul.mubr.bf16.gmra.mrb[0].mxu0 %v2328
      %v2428 = vpop.f32.mrb[0].mxu0
      %v2429 = vadd.f32 0.0, %v2428
      %v2430 = vpop.f32.mrb[0].mxu0
      %v2431 = vpop.f32.mrb[0].mxu0
      %v2432 = vadd.f32 0.0, %v2431
      %v2433 = vpop.f32.mrb[0].mxu0
      %2434 = vmatprep.mubr.bf16.mxu0 0
      %2435 = vmatmul.mubr.bf16.gmra.mrb[0].mxu0 %v2329
      %v2436 = vpop.f32.mrb[0].mxu0
      %v2437 = vadd.f32 0.0, %v2436
      %v2438 = vpop.f32.mrb[0].mxu0
      %v2439 = vpop.f32.mrb[0].mxu0
      %v2440 = vadd.f32 0.0, %v2439
      %v2441 = vpop.f32.mrb[0].mxu0
      %2442 = vdwg.mxu0
      %v2443 = vadd.f32 %v1230, %v2429
      %v2444 = vadd.f32 %v1231, %v2432
      %v2445 = vadd.f32 %v1232, %v2437
      %v2446 = vadd.f32 %v1233, %v2440
      %v2447 = vld [vmem:[%s783] sm:$0x1]
      %v2449 = vlaneseq
      %v2450 = vshrl.u32 %v2449, 7
      %v2451 = vsub.s32 0, %v2450
      %v2452 = vrot.slane %v2447, %v2451
      %v2454 = vadd.f32 %v2443, %v2452
      %v2455 = vadd.f32 %v2444, %v2452
      %v2456 = vadd.f32 %v2445, %v2452
      %v2457 = vadd.f32 %v2446, %v2452
      %v2458 = vld [vmem:[%s786] sm:$0x1]
      %v2459 = vld [vmem:[%s789] sm:$0x1]
      %2460 = vadd.xlane.f32.xlu0 %v2454
      %v2461 = vpop.xlane.xlu0 %2460
      %2462 = vadd.xlane.f32.xlu0 %v2455
      %v2463 = vpop.xlane.xlu0 %2462
      %2464 = vadd.xlane.f32.xlu0 %v2456
      %v2465 = vpop.xlane.xlu0 %2464
      %2466 = vadd.xlane.f32.xlu0 %v2457
      %v2467 = vpop.xlane.xlu0 %2466
      %v2468 = vmul.f32 %v2461, %v1244
      %v2469 = vmul.f32 %v2463, %v1244
      %v2470 = vmul.f32 %v2465, %v1244
      %v2471 = vmul.f32 %v2467, %v1244
      %v2472 = vsub.f32 %v2454, %v2468
      %v2473 = vsub.f32 %v2455, %v2469
      %v2474 = vsub.f32 %v2456, %v2470
      %v2475 = vsub.f32 %v2457, %v2471
      %v2476 = vmul.f32 %v2472, %v2472
      %v2477 = vmul.f32 %v2473, %v2473
      %v2478 = vmul.f32 %v2474, %v2474
      %v2479 = vmul.f32 %v2475, %v2475
      %2480 = vadd.xlane.f32.xlu0 %v2476
      %v2481 = vpop.xlane.xlu0 %2480
      %2482 = vadd.xlane.f32.xlu0 %v2477
      %v2483 = vpop.xlane.xlu0 %2482
      %2484 = vadd.xlane.f32.xlu0 %v2478
      %v2485 = vpop.xlane.xlu0 %2484
      %2486 = vadd.xlane.f32.xlu0 %v2479
      %v2487 = vpop.xlane.xlu0 %2486
      %v2488 = vmul.f32 %v2481, %v1244
      %v2489 = vmul.f32 %v2483, %v1244
      %v2490 = vmul.f32 %v2485, %v1244
      %v2491 = vmul.f32 %v2487, %v1244
      %v2492 = vadd.f32 %v2488, 1e-06
      %v2493 = vadd.f32 %v2489, 1e-06
      %v2494 = vadd.f32 %v2490, 1e-06
      %v2495 = vadd.f32 %v2491, 1e-06
      %v2496 = vrsqrt.pop %v2492
      %v2497 = vrsqrt.pop %v2493
      %v2498 = vrsqrt.pop %v2494
      %v2499 = vrsqrt.pop %v2495
      %v2500 = vmul.f32 %v2472, %v2496
      %v2501 = vmul.f32 %v2473, %v2497
      %v2502 = vmul.f32 %v2474, %v2498
      %v2503 = vmul.f32 %v2475, %v2499
      %v2505 = vlaneseq
      %v2506 = vshrl.u32 %v2505, 7
      %v2507 = vsub.s32 0, %v2506
      %v2508 = vrot.slane %v2458, %v2507
      %v2510 = vmul.f32 %v2500, %v2508
      %v2511 = vmul.f32 %v2501, %v2508
      %v2512 = vmul.f32 %v2502, %v2508
      %v2513 = vmul.f32 %v2503, %v2508
      %v2515 = vlaneseq
      %v2516 = vshrl.u32 %v2515, 7
      %v2517 = vsub.s32 0, %v2516
      %v2518 = vrot.slane %v2459, %v2517
      %v2520 = vadd.f32 %v2510, %v2518
      %v2521 = vadd.f32 %v2511, %v2518
      %v2522 = vadd.f32 %v2512, %v2518
      %v2523 = vadd.f32 %v2513, %v2518
      %v2524 = vld [vmem:[%s794] sm:$0xff]
      %v2525 = vld [vmem:[%s794 + $0x8] sm:$0xff]
      %v2526 = vld [vmem:[%s794 + $0x10] sm:$0xff]
      %v2527 = vld [vmem:[%s794 + $0x18] sm:$0xff]
      %v2528 = vld [vmem:[%s794 + $0x20] sm:$0xff]
      %v2529 = vld [vmem:[%s794 + $0x28] sm:$0xff]
      %v2530 = vld [vmem:[%s794 + $0x30] sm:$0xff]
      %v2531 = vld [vmem:[%s794 + $0x38] sm:$0xff]
      %v2532 = vld [vmem:[%s794 + $0x40] sm:$0xff]
      %v2533 = vld [vmem:[%s794 + $0x48] sm:$0xff]
      %v2534 = vld [vmem:[%s794 + $0x50] sm:$0xff]
      %v2535 = vld [vmem:[%s794 + $0x58] sm:$0xff]
      %v2536 = vld [vmem:[%s794 + $0x60] sm:$0xff]
      %v2537 = vld [vmem:[%s794 + $0x68] sm:$0xff]
      %v2538 = vld [vmem:[%s794 + $0x70] sm:$0xff]
      %v2539 = vld [vmem:[%s794 + $0x78] sm:$0xff]
      %v2540 = vld [vmem:[%s794 + $0x80] sm:$0xff]
      %v2541 = vld [vmem:[%s794 + $0x88] sm:$0xff]
      %v2542 = vld [vmem:[%s794 + $0x90] sm:$0xff]
      %v2543 = vld [vmem:[%s794 + $0x98] sm:$0xff]
      %v2544 = vld [vmem:[%s794 + $0xa0] sm:$0xff]
      %v2545 = vld [vmem:[%s794 + $0xa8] sm:$0xff]
      %v2546 = vld [vmem:[%s794 + $0xb0] sm:$0xff]
      %v2547 = vld [vmem:[%s794 + $0xb8] sm:$0xff]
      %v2548 = vld [vmem:[%s794 + $0xc0] sm:$0xff]
      %v2549 = vld [vmem:[%s794 + $0xc8] sm:$0xff]
      %v2550 = vld [vmem:[%s794 + $0xd0] sm:$0xff]
      %v2551 = vld [vmem:[%s794 + $0xd8] sm:$0xff]
      %v2552 = vld [vmem:[%s794 + $0xe0] sm:$0xff]
      %v2553 = vld [vmem:[%s794 + $0xe8] sm:$0xff]
      %v2554 = vld [vmem:[%s794 + $0xf0] sm:$0xff]
      %v2555 = vld [vmem:[%s794 + $0xf8] sm:$0xff]
      %v2556 = vpack.c.bf16 %v2521, %v2520
      %v2557 = vpack.c.bf16 %v2523, %v2522
      %v2558 = vld [vmem:[%s798] sm:$0xf]
      %v2560 = vlaneseq
      %v2561 = vshrl.u32 %v2560, 7
      %v2562 = vsub.s32 0, %v2561
      %v2563 = vrot.slane %v2558, %v2562
      %v2564 = vlaneseq
      %v2565 = vshrl.u32 %v2564, 7
      %v2566 = vsub.s32 1, %v2565
      %v2567 = vrot.slane %v2558, %v2566
      %v2568 = vlaneseq
      %v2569 = vshrl.u32 %v2568, 7
      %v2570 = vsub.s32 2, %v2569
      %v2571 = vrot.slane %v2558, %v2570
      %v2572 = vlaneseq
      %v2573 = vshrl.u32 %v2572, 7
      %v2574 = vsub.s32 3, %v2573
      %v2575 = vrot.slane %v2558, %v2574
      %v2612 = vunpack.c.l.b16 %v2524
      %v2613 = vunpack.c.h.b16 %v2524
      %v2614 = vunpack.c.l.b16 %v2525
      %v2615 = vunpack.c.h.b16 %v2525
      %v2616 = vunpack.c.l.b16 %v2526
      %v2617 = vunpack.c.h.b16 %v2526
      %v2618 = vunpack.c.l.b16 %v2527
      %v2619 = vunpack.c.h.b16 %v2527
      %v2620 = vunpack.c.l.b16 %v2528
      %v2621 = vunpack.c.h.b16 %v2528
      %v2622 = vunpack.c.l.b16 %v2529
      %v2623 = vunpack.c.h.b16 %v2529
      %v2624 = vunpack.c.l.b16 %v2530
      %v2625 = vunpack.c.h.b16 %v2530
      %v2626 = vunpack.c.l.b16 %v2531
      %v2627 = vunpack.c.h.b16 %v2531
      %v2628 = vunpack.c.l.b16 %v2532
      %v2629 = vunpack.c.h.b16 %v2532
      %v2630 = vunpack.c.l.b16 %v2533
      %v2631 = vunpack.c.h.b16 %v2533
      %v2632 = vunpack.c.l.b16 %v2534
      %v2633 = vunpack.c.h.b16 %v2534
      %v2634 = vunpack.c.l.b16 %v2535
      %v2635 = vunpack.c.h.b16 %v2535
      %v2636 = vunpack.c.l.b16 %v2536
      %v2637 = vunpack.c.h.b16 %v2536
      %v2638 = vunpack.c.l.b16 %v2537
      %v2639 = vunpack.c.h.b16 %v2537
      %v2640 = vunpack.c.l.b16 %v2538
      %v2641 = vunpack.c.h.b16 %v2538
      %v2642 = vunpack.c.l.b16 %v2539
      %v2643 = vunpack.c.h.b16 %v2539
      %v2644 = vunpack.c.l.b16 %v2540
      %v2645 = vunpack.c.h.b16 %v2540
      %v2646 = vunpack.c.l.b16 %v2541
      %v2647 = vunpack.c.h.b16 %v2541
      %v2648 = vunpack.c.l.b16 %v2542
      %v2649 = vunpack.c.h.b16 %v2542
      %v2650 = vunpack.c.l.b16 %v2543
      %v2651 = vunpack.c.h.b16 %v2543
      %v2652 = vunpack.c.l.b16 %v2544
      %v2653 = vunpack.c.h.b16 %v2544
      %v2654 = vunpack.c.l.b16 %v2545
      %v2655 = vunpack.c.h.b16 %v2545
      %v2656 = vunpack.c.l.b16 %v2546
      %v2657 = vunpack.c.h.b16 %v2546
      %v2658 = vunpack.c.l.b16 %v2547
      %v2659 = vunpack.c.h.b16 %v2547
      %v2660 = vunpack.c.l.b16 %v2548
      %v2661 = vunpack.c.h.b16 %v2548
      %v2662 = vunpack.c.l.b16 %v2549
      %v2663 = vunpack.c.h.b16 %v2549
      %v2664 = vunpack.c.l.b16 %v2550
      %v2665 = vunpack.c.h.b16 %v2550
      %v2666 = vunpack.c.l.b16 %v2551
      %v2667 = vunpack.c.h.b16 %v2551
      %v2668 = vunpack.c.l.b16 %v2552
      %v2669 = vunpack.c.h.b16 %v2552
      %v2670 = vunpack.c.l.b16 %v2553
      %v2671 = vunpack.c.h.b16 %v2553
      %v2672 = vunpack.c.l.b16 %v2554
      %v2673 = vunpack.c.h.b16 %v2554
      %v2674 = vunpack.c.l.b16 %v2555
      %v2675 = vunpack.c.h.b16 %v2555
      %v2676 = vpack.c.b16 %v2616, %v2612
      %v2677 = vpack.c.b16 %v2617, %v2613
      %v2678 = vpack.c.b16 %v2618, %v2614
      %v2679 = vpack.c.b16 %v2619, %v2615
      %v2680 = vpack.c.b16 %v2624, %v2620
      %v2681 = vpack.c.b16 %v2625, %v2621
      %v2682 = vpack.c.b16 %v2626, %v2622
      %v2683 = vpack.c.b16 %v2627, %v2623
      %v2684 = vpack.c.b16 %v2632, %v2628
      %v2685 = vpack.c.b16 %v2633, %v2629
      %v2686 = vpack.c.b16 %v2634, %v2630
      %v2687 = vpack.c.b16 %v2635, %v2631
      %v2688 = vpack.c.b16 %v2640, %v2636
      %v2689 = vpack.c.b16 %v2641, %v2637
      %v2690 = vpack.c.b16 %v2642, %v2638
      %v2691 = vpack.c.b16 %v2643, %v2639
      %v2692 = vpack.c.b16 %v2648, %v2644
      %v2693 = vpack.c.b16 %v2649, %v2645
      %v2694 = vpack.c.b16 %v2650, %v2646
      %v2695 = vpack.c.b16 %v2651, %v2647
      %v2696 = vpack.c.b16 %v2656, %v2652
      %v2697 = vpack.c.b16 %v2657, %v2653
      %v2698 = vpack.c.b16 %v2658, %v2654
      %v2699 = vpack.c.b16 %v2659, %v2655
      %v2700 = vpack.c.b16 %v2664, %v2660
      %v2701 = vpack.c.b16 %v2665, %v2661
      %v2702 = vpack.c.b16 %v2666, %v2662
      %v2703 = vpack.c.b16 %v2667, %v2663
      %v2704 = vpack.c.b16 %v2672, %v2668
      %v2705 = vpack.c.b16 %v2673, %v2669
      %v2706 = vpack.c.b16 %v2674, %v2670
      %v2707 = vpack.c.b16 %v2675, %v2671
      %2740 = vmatprep.subr.bf16.mxu0 %v2677
      %2741 = vmatpush1.bf16.msra.mxu0 %v2676
      %2742 = vmatprep.subr.bf16.mxu0 %v2681
      %2743 = vmatpush1.bf16.msra.mxu0 %v2680
      %2744 = vmatprep.subr.bf16.mxu0 %v2685
      %2745 = vmatpush1.bf16.msra.mxu0 %v2684
      %2746 = vmatprep.subr.bf16.mxu0 %v2689
      %2747 = vmatpush1.bf16.msra.mxu0 %v2688
      %2748 = vmatprep.subr.bf16.mxu0 %v2693
      %2749 = vmatpush1.bf16.msra.mxu0 %v2692
      %2750 = vmatprep.subr.bf16.mxu0 %v2697
      %2751 = vmatpush1.bf16.msra.mxu0 %v2696
      %2752 = vmatprep.subr.bf16.mxu0 %v2701
      %2753 = vmatpush1.bf16.msra.mxu0 %v2700
      %2754 = vmatprep.subr.bf16.mxu0 %v2705
      %2755 = vmatpush1.bf16.msra.mxu0 %v2704
      %2756 = vmatprep.subr.bf16.mxu0 0
      %2757 = vmatpush1.bf16.msra.mxu0 0
      %2758 = vmatprep.subr.bf16.mxu0 0
      %2759 = vmatpush1.bf16.msra.mxu0 0
      %2760 = vmatprep.subr.bf16.mxu0 0
      %2761 = vmatpush1.bf16.msra.mxu0 0
      %2762 = vmatprep.subr.bf16.mxu0 0
      %2763 = vmatpush1.bf16.msra.mxu0 0
      %2764 = vmatprep.subr.bf16.mxu0 0
      %2765 = vmatpush1.bf16.msra.mxu0 0
      %2766 = vmatprep.subr.bf16.mxu0 0
      %2767 = vmatpush1.bf16.msra.mxu0 0
      %2768 = vmatprep.subr.bf16.mxu0 0
      %2769 = vmatpush1.bf16.msra.mxu0 0
      %2770 = vmatprep.subr.bf16.mxu0 0
      %2771 = vmatpush1.bf16.msra.mxu0 0
      %2772 = vmatprep.mubr.bf16.mxu0 0
      %2773 = vmatmul.mubr.bf16.gmra.mrb[0].mxu0 %v2556
      %v2774 = vpop.f32.mrb[0].mxu0
      %v2775 = vadd.f32 %v2563, %v2774
      %v2776 = vpop.f32.mrb[0].mxu0
      %v2777 = vadd.f32 %v2567, %v2776
      %v2778 = vpop.f32.mrb[0].mxu0
      %v2779 = vadd.f32 %v2563, %v2778
      %v2780 = vpop.f32.mrb[0].mxu0
      %v2781 = vadd.f32 %v2567, %v2780
      %2782 = vmatprep.mubr.bf16.mxu0 0
      %2783 = vmatmul.mubr.bf16.gmra.mrb[0].mxu0 %v2557
      %v2784 = vpop.f32.mrb[0].mxu0
      %v2785 = vadd.f32 %v2563, %v2784
      %v2786 = vpop.f32.mrb[0].mxu0
      %v2787 = vadd.f32 %v2567, %v2786
      %v2788 = vpop.f32.mrb[0].mxu0
      %v2789 = vadd.f32 %v2563, %v2788
      %v2790 = vpop.f32.mrb[0].mxu0
      %v2791 = vadd.f32 %v2567, %v2790
      %2792 = vdwg.mxu0
      %2793 = vmatprep.subr.bf16.mxu0 %v2679
      %2794 = vmatpush1.bf16.msra.mxu0 %v2678
      %2795 = vmatprep.subr.bf16.mxu0 %v2683
      %2796 = vmatpush1.bf16.msra.mxu0 %v2682
      %2797 = vmatprep.subr.bf16.mxu0 %v2687
      %2798 = vmatpush1.bf16.msra.mxu0 %v2686
      %2799 = vmatprep.subr.bf16.mxu0 %v2691
      %2800 = vmatpush1.bf16.msra.mxu0 %v2690
      %2801 = vmatprep.subr.bf16.mxu0 %v2695
      %2802 = vmatpush1.bf16.msra.mxu0 %v2694
      %2803 = vmatprep.subr.bf16.mxu0 %v2699
      %2804 = vmatpush1.bf16.msra.mxu0 %v2698
      %2805 = vmatprep.subr.bf16.mxu0 %v2703
      %2806 = vmatpush1.bf16.msra.mxu0 %v2702
      %2807 = vmatprep.subr.bf16.mxu0 %v2707
      %2808 = vmatpush1.bf16.msra.mxu0 %v2706
      %2809 = vmatprep.subr.bf16.mxu0 0
      %2810 = vmatpush1.bf16.msra.mxu0 0
      %2811 = vmatprep.subr.bf16.mxu0 0
      %2812 = vmatpush1.bf16.msra.mxu0 0
      %2813 = vmatprep.subr.bf16.mxu0 0
      %2814 = vmatpush1.bf16.msra.mxu0 0
      %2815 = vmatprep.subr.bf16.mxu0 0
      %2816 = vmatpush1.bf16.msra.mxu0 0
      %2817 = vmatprep.subr.bf16.mxu0 0
      %2818 = vmatpush1.bf16.msra.mxu0 0
      %2819 = vmatprep.subr.bf16.mxu0 0
      %2820 = vmatpush1.bf16.msra.mxu0 0
      %2821 = vmatprep.subr.bf16.mxu0 0
      %2822 = vmatpush1.bf16.msra.mxu0 0
      %2823 = vmatprep.subr.bf16.mxu0 0
      %2824 = vmatpush1.bf16.msra.mxu0 0
      %2825 = vmatprep.mubr.bf16.mxu0 0
      %2826 = vmatmul.mubr.bf16.gmra.mrb[0].mxu0 %v2556
      %v2827 = vpop.f32.mrb[0].mxu0
      %v2828 = vadd.f32 %v2571, %v2827
      %v2829 = vpop.f32.mrb[0].mxu0
      %v2830 = vadd.f32 %v2575, %v2829
      %v2831 = vpop.f32.mrb[0].mxu0
      %v2832 = vadd.f32 %v2571, %v2831
      %v2833 = vpop.f32.mrb[0].mxu0
      %v2834 = vadd.f32 %v2575, %v2833
      %2835 = vmatprep.mubr.bf16.mxu0 0
      %2836 = vmatmul.mubr.bf16.gmra.mrb[0].mxu0 %v2557
      %v2837 = vpop.f32.mrb[0].mxu0
      %v2838 = vadd.f32 %v2571, %v2837
      %v2839 = vpop.f32.mrb[0].mxu0
      %v2840 = vadd.f32 %v2575, %v2839
      %v2841 = vpop.f32.mrb[0].mxu0
      %v2842 = vadd.f32 %v2571, %v2841
      %v2843 = vpop.f32.mrb[0].mxu0
      %v2844 = vadd.f32 %v2575, %v2843
      %2845 = vdwg.mxu0
      %v2846 = vmul.f32 %v2775, 0.5
      %v2847 = vmul.f32 %v2777, 0.5
      %v2848 = vmul.f32 %v2828, 0.5
      %v2849 = vmul.f32 %v2830, 0.5
      %v2850 = vmul.f32 %v2779, 0.5
      %v2851 = vmul.f32 %v2781, 0.5
      %v2852 = vmul.f32 %v2832, 0.5
      %v2853 = vmul.f32 %v2834, 0.5
      %v2854 = vmul.f32 %v2785, 0.5
      %v2855 = vmul.f32 %v2787, 0.5
      %v2856 = vmul.f32 %v2838, 0.5
      %v2857 = vmul.f32 %v2840, 0.5
      %v2858 = vmul.f32 %v2789, 0.5
      %v2859 = vmul.f32 %v2791, 0.5
      %v2860 = vmul.f32 %v2842, 0.5
      %v2861 = vmul.f32 %v2844, 0.5
      %v2862 = vmul.f32 %v2775, 0.70710677
      %v2863 = vmul.f32 %v2777, 0.70710677
      %v2864 = vmul.f32 %v2828, 0.70710677
      %v2865 = vmul.f32 %v2830, 0.70710677
      %v2866 = vmul.f32 %v2779, 0.70710677
      %v2867 = vmul.f32 %v2781, 0.70710677
      %v2868 = vmul.f32 %v2832, 0.70710677
      %v2869 = vmul.f32 %v2834, 0.70710677
      %v2870 = vmul.f32 %v2785, 0.70710677
      %v2871 = vmul.f32 %v2787, 0.70710677
      %v2872 = vmul.f32 %v2838, 0.70710677
      %v2873 = vmul.f32 %v2840, 0.70710677
      %v2874 = vmul.f32 %v2789, 0.70710677
      %v2875 = vmul.f32 %v2791, 0.70710677
      %v2876 = vmul.f32 %v2842, 0.70710677
      %v2877 = vmul.f32 %v2844, 0.70710677
      %v2878 = vand.u32 2147483647, %v2862
      %v2879 = vand.u32 2147483647, %v2863
      %v2880 = vand.u32 2147483647, %v2864
      %v2881 = vand.u32 2147483647, %v2865
      %v2882 = vand.u32 2147483647, %v2866
      %v2883 = vand.u32 2147483647, %v2867
      %v2884 = vand.u32 2147483647, %v2868
      %v2885 = vand.u32 2147483647, %v2869
      %v2886 = vand.u32 2147483647, %v2870
      %v2887 = vand.u32 2147483647, %v2871
      %v2888 = vand.u32 2147483647, %v2872
      %v2889 = vand.u32 2147483647, %v2873
      %v2890 = vand.u32 2147483647, %v2874
      %v2891 = vand.u32 2147483647, %v2875
      %v2892 = vand.u32 2147483647, %v2876
      %v2893 = vand.u32 2147483647, %v2877
      %v2894 = vmul.f32 %v2878, 0.3275911
      %v2895 = vmul.f32 %v2879, 0.3275911
      %v2896 = vmul.f32 %v2880, 0.3275911
      %v2897 = vmul.f32 %v2881, 0.3275911
      %v2898 = vmul.f32 %v2882, 0.3275911
      %v2899 = vmul.f32 %v2883, 0.3275911
      %v2900 = vmul.f32 %v2884, 0.3275911
      %v2901 = vmul.f32 %v2885, 0.3275911
      %v2902 = vmul.f32 %v2886, 0.3275911
      %v2903 = vmul.f32 %v2887, 0.3275911
      %v2904 = vmul.f32 %v2888, 0.3275911
      %v2905 = vmul.f32 %v2889, 0.3275911
      %v2906 = vmul.f32 %v2890, 0.3275911
      %v2907 = vmul.f32 %v2891, 0.3275911
      %v2908 = vmul.f32 %v2892, 0.3275911
      %v2909 = vmul.f32 %v2893, 0.3275911
      %v2910 = vadd.f32 %v2894, 1.0
      %v2911 = vadd.f32 %v2895, 1.0
      %v2912 = vadd.f32 %v2896, 1.0
      %v2913 = vadd.f32 %v2897, 1.0
      %v2914 = vadd.f32 %v2898, 1.0
      %v2915 = vadd.f32 %v2899, 1.0
      %v2916 = vadd.f32 %v2900, 1.0
      %v2917 = vadd.f32 %v2901, 1.0
      %v2918 = vadd.f32 %v2902, 1.0
      %v2919 = vadd.f32 %v2903, 1.0
      %v2920 = vadd.f32 %v2904, 1.0
      %v2921 = vadd.f32 %v2905, 1.0
      %v2922 = vadd.f32 %v2906, 1.0
      %v2923 = vadd.f32 %v2907, 1.0
      %v2924 = vadd.f32 %v2908, 1.0
      %v2925 = vadd.f32 %v2909, 1.0
      %v2926 = vrcp.pop %v2910
      %v2927 = vmul.f32 1.0, %v2926
      %v2928 = vrcp.pop %v2911
      %v2929 = vmul.f32 1.0, %v2928
      %v2930 = vrcp.pop %v2912
      %v2931 = vmul.f32 1.0, %v2930
      %v2932 = vrcp.pop %v2913
      %v2933 = vmul.f32 1.0, %v2932
      %v2934 = vrcp.pop %v2914
      %v2935 = vmul.f32 1.0, %v2934
      %v2936 = vrcp.pop %v2915
      %v2937 = vmul.f32 1.0, %v2936
      %v2938 = vrcp.pop %v2916
      %v2939 = vmul.f32 1.0, %v2938
      %v2940 = vrcp.pop %v2917
      %v2941 = vmul.f32 1.0, %v2940
      %v2942 = vrcp.pop %v2918
      %v2943 = vmul.f32 1.0, %v2942
      %v2944 = vrcp.pop %v2919
      %v2945 = vmul.f32 1.0, %v2944
      %v2946 = vrcp.pop %v2920
      %v2947 = vmul.f32 1.0, %v2946
      %v2948 = vrcp.pop %v2921
      %v2949 = vmul.f32 1.0, %v2948
      %v2950 = vrcp.pop %v2922
      %v2951 = vmul.f32 1.0, %v2950
      %v2952 = vrcp.pop %v2923
      %v2953 = vmul.f32 1.0, %v2952
      %v2954 = vrcp.pop %v2924
      %v2955 = vmul.f32 1.0, %v2954
      %v2956 = vrcp.pop %v2925
      %v2957 = vmul.f32 1.0, %v2956
      %v2958 = vmul.f32 %v2927, 1.0614054
      %v2959 = vmul.f32 %v2929, 1.0614054
      %v2960 = vmul.f32 %v2931, 1.0614054
      %v2961 = vmul.f32 %v2933, 1.0614054
      %v2962 = vmul.f32 %v2935, 1.0614054
      %v2963 = vmul.f32 %v2937, 1.0614054
      %v2964 = vmul.f32 %v2939, 1.0614054
      %v2965 = vmul.f32 %v2941, 1.0614054
      %v2966 = vmul.f32 %v2943, 1.0614054
      %v2967 = vmul.f32 %v2945, 1.0614054
      %v2968 = vmul.f32 %v2947, 1.0614054
      %v2969 = vmul.f32 %v2949, 1.0614054
      %v2970 = vmul.f32 %v2951, 1.0614054
      %v2971 = vmul.f32 %v2953, 1.0614054
      %v2972 = vmul.f32 %v2955, 1.0614054
      %v2973 = vmul.f32 %v2957, 1.0614054
      %v2974 = vadd.f32 %v2958, -1.4531521
      %v2975 = vadd.f32 %v2959, -1.4531521
      %v2976 = vadd.f32 %v2960, -1.4531521
      %v2977 = vadd.f32 %v2961, -1.4531521
      %v2978 = vadd.f32 %v2962, -1.4531521
      %v2979 = vadd.f32 %v2963, -1.4531521
      %v2980 = vadd.f32 %v2964, -1.4531521
      %v2981 = vadd.f32 %v2965, -1.4531521
      %v2982 = vadd.f32 %v2966, -1.4531521
      %v2983 = vadd.f32 %v2967, -1.4531521
      %v2984 = vadd.f32 %v2968, -1.4531521
      %v2985 = vadd.f32 %v2969, -1.4531521
      %v2986 = vadd.f32 %v2970, -1.4531521
      %v2987 = vadd.f32 %v2971, -1.4531521
      %v2988 = vadd.f32 %v2972, -1.4531521
      %v2989 = vadd.f32 %v2973, -1.4531521
      %v2990 = vmul.f32 %v2974, %v2927
      %v2991 = vmul.f32 %v2975, %v2929
      %v2992 = vmul.f32 %v2976, %v2931
      %v2993 = vmul.f32 %v2977, %v2933
      %v2994 = vmul.f32 %v2978, %v2935
      %v2995 = vmul.f32 %v2979, %v2937
      %v2996 = vmul.f32 %v2980, %v2939
      %v2997 = vmul.f32 %v2981, %v2941
      %v2998 = vmul.f32 %v2982, %v2943
      %v2999 = vmul.f32 %v2983, %v2945
      %v3000 = vmul.f32 %v2984, %v2947
      %v3001 = vmul.f32 %v2985, %v2949
      %v3002 = vmul.f32 %v2986, %v2951
      %v3003 = vmul.f32 %v2987, %v2953
      %v3004 = vmul.f32 %v2988, %v2955
      %v3005 = vmul.f32 %v2989, %v2957
      %v3006 = vadd.f32 %v2990, 1.4214138
      %v3007 = vadd.f32 %v2991, 1.4214138
      %v3008 = vadd.f32 %v2992, 1.4214138
      %v3009 = vadd.f32 %v2993, 1.4214138
      %v3010 = vadd.f32 %v2994, 1.4214138
      %v3011 = vadd.f32 %v2995, 1.4214138
      %v3012 = vadd.f32 %v2996, 1.4214138
      %v3013 = vadd.f32 %v2997, 1.4214138
      %v3014 = vadd.f32 %v2998, 1.4214138
      %v3015 = vadd.f32 %v2999, 1.4214138
      %v3016 = vadd.f32 %v3000, 1.4214138
      %v3017 = vadd.f32 %v3001, 1.4214138
      %v3018 = vadd.f32 %v3002, 1.4214138
      %v3019 = vadd.f32 %v3003, 1.4214138
      %v3020 = vadd.f32 %v3004, 1.4214138
      %v3021 = vadd.f32 %v3005, 1.4214138
      %v3022 = vmul.f32 %v3006, %v2927
      %v3023 = vmul.f32 %v3007, %v2929
      %v3024 = vmul.f32 %v3008, %v2931
      %v3025 = vmul.f32 %v3009, %v2933
      %v3026 = vmul.f32 %v3010, %v2935
      %v3027 = vmul.f32 %v3011, %v2937
      %v3028 = vmul.f32 %v3012, %v2939
      %v3029 = vmul.f32 %v3013, %v2941
      %v3030 = vmul.f32 %v3014, %v2943
      %v3031 = vmul.f32 %v3015, %v2945
      %v3032 = vmul.f32 %v3016, %v2947
      %v3033 = vmul.f32 %v3017, %v2949
      %v3034 = vmul.f32 %v3018, %v2951
      %v3035 = vmul.f32 %v3019, %v2953
      %v3036 = vmul.f32 %v3020, %v2955
      %v3037 = vmul.f32 %v3021, %v2957
      %v3038 = vadd.f32 %v3022, -0.28449672
      %v3039 = vadd.f32 %v3023, -0.28449672
      %v3040 = vadd.f32 %v3024, -0.28449672
      %v3041 = vadd.f32 %v3025, -0.28449672
      %v3042 = vadd.f32 %v3026, -0.28449672
      %v3043 = vadd.f32 %v3027, -0.28449672
      %v3044 = vadd.f32 %v3028, -0.28449672
      %v3045 = vadd.f32 %v3029, -0.28449672
      %v3046 = vadd.f32 %v3030, -0.28449672
      %v3047 = vadd.f32 %v3031, -0.28449672
      %v3048 = vadd.f32 %v3032, -0.28449672
      %v3049 = vadd.f32 %v3033, -0.28449672
      %v3050 = vadd.f32 %v3034, -0.28449672
      %v3051 = vadd.f32 %v3035, -0.28449672
      %v3052 = vadd.f32 %v3036, -0.28449672
      %v3053 = vadd.f32 %v3037, -0.28449672
      %v3054 = vmul.f32 %v3038, %v2927
      %v3055 = vmul.f32 %v3039, %v2929
      %v3056 = vmul.f32 %v3040, %v2931
      %v3057 = vmul.f32 %v3041, %v2933
      %v3058 = vmul.f32 %v3042, %v2935
      %v3059 = vmul.f32 %v3043, %v2937
      %v3060 = vmul.f32 %v3044, %v2939
      %v3061 = vmul.f32 %v3045, %v2941
      %v3062 = vmul.f32 %v3046, %v2943
      %v3063 = vmul.f32 %v3047, %v2945
      %v3064 = vmul.f32 %v3048, %v2947
      %v3065 = vmul.f32 %v3049, %v2949
      %v3066 = vmul.f32 %v3050, %v2951
      %v3067 = vmul.f32 %v3051, %v2953
      %v3068 = vmul.f32 %v3052, %v2955
      %v3069 = vmul.f32 %v3053, %v2957
      %v3070 = vadd.f32 %v3054, 0.2548296
      %v3071 = vadd.f32 %v3055, 0.2548296
      %v3072 = vadd.f32 %v3056, 0.2548296
      %v3073 = vadd.f32 %v3057, 0.2548296
      %v3074 = vadd.f32 %v3058, 0.2548296
      %v3075 = vadd.f32 %v3059, 0.2548296
      %v3076 = vadd.f32 %v3060, 0.2548296
      %v3077 = vadd.f32 %v3061, 0.2548296
      %v3078 = vadd.f32 %v3062, 0.2548296
      %v3079 = vadd.f32 %v3063, 0.2548296
      %v3080 = vadd.f32 %v3064, 0.2548296
      %v3081 = vadd.f32 %v3065, 0.2548296
      %v3082 = vadd.f32 %v3066, 0.2548296
      %v3083 = vadd.f32 %v3067, 0.2548296
      %v3084 = vadd.f32 %v3068, 0.2548296
      %v3085 = vadd.f32 %v3069, 0.2548296
      %v3086 = vmul.f32 %v3070, %v2927
      %v3087 = vmul.f32 %v3071, %v2929
      %v3088 = vmul.f32 %v3072, %v2931
      %v3089 = vmul.f32 %v3073, %v2933
      %v3090 = vmul.f32 %v3074, %v2935
      %v3091 = vmul.f32 %v3075, %v2937
      %v3092 = vmul.f32 %v3076, %v2939
      %v3093 = vmul.f32 %v3077, %v2941
      %v3094 = vmul.f32 %v3078, %v2943
      %v3095 = vmul.f32 %v3079, %v2945
      %v3096 = vmul.f32 %v3080, %v2947
      %v3097 = vmul.f32 %v3081, %v2949
      %v3098 = vmul.f32 %v3082, %v2951
      %v3099 = vmul.f32 %v3083, %v2953
      %v3100 = vmul.f32 %v3084, %v2955
      %v3101 = vmul.f32 %v3085, %v2957
      %v3102 = vsub.f32 0.0, %v2878
      %v3103 = vsub.f32 0.0, %v2879
      %v3104 = vsub.f32 0.0, %v2880
      %v3105 = vsub.f32 0.0, %v2881
      %v3106 = vsub.f32 0.0, %v2882
      %v3107 = vsub.f32 0.0, %v2883
      %v3108 = vsub.f32 0.0, %v2884
      %v3109 = vsub.f32 0.0, %v2885
      %v3110 = vsub.f32 0.0, %v2886
      %v3111 = vsub.f32 0.0, %v2887
      %v3112 = vsub.f32 0.0, %v2888
      %v3113 = vsub.f32 0.0, %v2889
      %v3114 = vsub.f32 0.0, %v2890
      %v3115 = vsub.f32 0.0, %v2891
      %v3116 = vsub.f32 0.0, %v2892
      %v3117 = vsub.f32 0.0, %v2893
      %v3118 = vmul.f32 %v3102, %v2878
      %v3119 = vmul.f32 %v3103, %v2879
      %v3120 = vmul.f32 %v3104, %v2880
      %v3121 = vmul.f32 %v3105, %v2881
      %v3122 = vmul.f32 %v3106, %v2882
      %v3123 = vmul.f32 %v3107, %v2883
      %v3124 = vmul.f32 %v3108, %v2884
      %v3125 = vmul.f32 %v3109, %v2885
      %v3126 = vmul.f32 %v3110, %v2886
      %v3127 = vmul.f32 %v3111, %v2887
      %v3128 = vmul.f32 %v3112, %v2888
      %v3129 = vmul.f32 %v3113, %v2889
      %v3130 = vmul.f32 %v3114, %v2890
      %v3131 = vmul.f32 %v3115, %v2891
      %v3132 = vmul.f32 %v3116, %v2892
      %v3133 = vmul.f32 %v3117, %v2893
      %v3134 = vmul.f32 %v3118, 1.442695
      %v3135 = vpow.pop %v3134
      %v3136 = vmul.f32 %v3119, 1.442695
      %v3137 = vpow.pop %v3136
      %v3138 = vmul.f32 %v3120, 1.442695
      %v3139 = vpow.pop %v3138
      %v3140 = vmul.f32 %v3121, 1.442695
      %v3141 = vpow.pop %v3140
      %v3142 = vmul.f32 %v3122, 1.442695
      %v3143 = vpow.pop %v3142
      %v3144 = vmul.f32 %v3123, 1.442695
      %v3145 = vpow.pop %v3144
      %v3146 = vmul.f32 %v3124, 1.442695
      %v3147 = vpow.pop %v3146
      %v3148 = vmul.f32 %v3125, 1.442695
      %v3149 = vpow.pop %v3148
      %v3150 = vmul.f32 %v3126, 1.442695
      %v3151 = vpow.pop %v3150
      %v3152 = vmul.f32 %v3127, 1.442695
      %v3153 = vpow.pop %v3152
      %v3154 = vmul.f32 %v3128, 1.442695
      %v3155 = vpow.pop %v3154
      %v3156 = vmul.f32 %v3129, 1.442695
      %v3157 = vpow.pop %v3156
      %v3158 = vmul.f32 %v3130, 1.442695
      %v3159 = vpow.pop %v3158
      %v3160 = vmul.f32 %v3131, 1.442695
      %v3161 = vpow.pop %v3160
      %v3162 = vmul.f32 %v3132, 1.442695
      %v3163 = vpow.pop %v3162
      %v3164 = vmul.f32 %v3133, 1.442695
      %v3165 = vpow.pop %v3164
      %v3166 = vmul.f32 %v3086, %v3135
      %v3167 = vmul.f32 %v3087, %v3137
      %v3168 = vmul.f32 %v3088, %v3139
      %v3169 = vmul.f32 %v3089, %v3141
      %v3170 = vmul.f32 %v3090, %v3143
      %v3171 = vmul.f32 %v3091, %v3145
      %v3172 = vmul.f32 %v3092, %v3147
      %v3173 = vmul.f32 %v3093, %v3149
      %v3174 = vmul.f32 %v3094, %v3151
      %v3175 = vmul.f32 %v3095, %v3153
      %v3176 = vmul.f32 %v3096, %v3155
      %v3177 = vmul.f32 %v3097, %v3157
      %v3178 = vmul.f32 %v3098, %v3159
      %v3179 = vmul.f32 %v3099, %v3161
      %v3180 = vmul.f32 %v3100, %v3163
      %v3181 = vmul.f32 %v3101, %v3165
      %v3182 = vsub.f32 1.0, %v3166
      %v3183 = vsub.f32 1.0, %v3167
      %v3184 = vsub.f32 1.0, %v3168
      %v3185 = vsub.f32 1.0, %v3169
      %v3186 = vsub.f32 1.0, %v3170
      %v3187 = vsub.f32 1.0, %v3171
      %v3188 = vsub.f32 1.0, %v3172
      %v3189 = vsub.f32 1.0, %v3173
      %v3190 = vsub.f32 1.0, %v3174
      %v3191 = vsub.f32 1.0, %v3175
      %v3192 = vsub.f32 1.0, %v3176
      %v3193 = vsub.f32 1.0, %v3177
      %v3194 = vsub.f32 1.0, %v3178
      %v3195 = vsub.f32 1.0, %v3179
      %v3196 = vsub.f32 1.0, %v3180
      %v3197 = vsub.f32 1.0, %v3181
      %vm3198 = vcmp.ge.f32.partialorder %v2862, 0.0
      %vm3199 = vcmp.ge.f32.partialorder %v2863, 0.0
      %vm3200 = vcmp.ge.f32.partialorder %v2864, 0.0
      %vm3201 = vcmp.ge.f32.partialorder %v2865, 0.0
      %vm3202 = vcmp.ge.f32.partialorder %v2866, 0.0
      %vm3203 = vcmp.ge.f32.partialorder %v2867, 0.0
      %vm3204 = vcmp.ge.f32.partialorder %v2868, 0.0
      %vm3205 = vcmp.ge.f32.partialorder %v2869, 0.0
      %vm3206 = vcmp.ge.f32.partialorder %v2870, 0.0
      %vm3207 = vcmp.ge.f32.partialorder %v2871, 0.0
      %vm3208 = vcmp.ge.f32.partialorder %v2872, 0.0
      %vm3209 = vcmp.ge.f32.partialorder %v2873, 0.0
      %vm3210 = vcmp.ge.f32.partialorder %v2874, 0.0
      %vm3211 = vcmp.ge.f32.partialorder %v2875, 0.0
      %vm3212 = vcmp.ge.f32.partialorder %v2876, 0.0
      %vm3213 = vcmp.ge.f32.partialorder %v2877, 0.0
      %v3214 = vsub.f32 0.0, %v3182
      %v3215 = vsub.f32 0.0, %v3183
      %v3216 = vsub.f32 0.0, %v3184
      %v3217 = vsub.f32 0.0, %v3185
      %v3218 = vsub.f32 0.0, %v3186
      %v3219 = vsub.f32 0.0, %v3187
      %v3220 = vsub.f32 0.0, %v3188
      %v3221 = vsub.f32 0.0, %v3189
      %v3222 = vsub.f32 0.0, %v3190
      %v3223 = vsub.f32 0.0, %v3191
      %v3224 = vsub.f32 0.0, %v3192
      %v3225 = vsub.f32 0.0, %v3193
      %v3226 = vsub.f32 0.0, %v3194
      %v3227 = vsub.f32 0.0, %v3195
      %v3228 = vsub.f32 0.0, %v3196
      %v3229 = vsub.f32 0.0, %v3197
      %v3230 = vsel %vm3198, %v3182, %v3214
      %v3231 = vsel %vm3199, %v3183, %v3215
      %v3232 = vsel %vm3200, %v3184, %v3216
      %v3233 = vsel %vm3201, %v3185, %v3217
      %v3234 = vsel %vm3202, %v3186, %v3218
      %v3235 = vsel %vm3203, %v3187, %v3219
      %v3236 = vsel %vm3204, %v3188, %v3220
      %v3237 = vsel %vm3205, %v3189, %v3221
      %v3238 = vsel %vm3206, %v3190, %v3222
      %v3239 = vsel %vm3207, %v3191, %v3223
      %v3240 = vsel %vm3208, %v3192, %v3224
      %v3241 = vsel %vm3209, %v3193, %v3225
      %v3242 = vsel %vm3210, %v3194, %v3226
      %v3243 = vsel %vm3211, %v3195, %v3227
      %v3244 = vsel %vm3212, %v3196, %v3228
      %v3245 = vsel %vm3213, %v3197, %v3229
      %v3246 = vadd.f32 %v3230, 1.0
      %v3247 = vadd.f32 %v3231, 1.0
      %v3248 = vadd.f32 %v3232, 1.0
      %v3249 = vadd.f32 %v3233, 1.0
      %v3250 = vadd.f32 %v3234, 1.0
      %v3251 = vadd.f32 %v3235, 1.0
      %v3252 = vadd.f32 %v3236, 1.0
      %v3253 = vadd.f32 %v3237, 1.0
      %v3254 = vadd.f32 %v3238, 1.0
      %v3255 = vadd.f32 %v3239, 1.0
      %v3256 = vadd.f32 %v3240, 1.0
      %v3257 = vadd.f32 %v3241, 1.0
      %v3258 = vadd.f32 %v3242, 1.0
      %v3259 = vadd.f32 %v3243, 1.0
      %v3260 = vadd.f32 %v3244, 1.0
      %v3261 = vadd.f32 %v3245, 1.0
      %v3262 = vmul.f32 %v2846, %v3246
      %v3263 = vmul.f32 %v2847, %v3247
      %v3264 = vmul.f32 %v2848, %v3248
      %v3265 = vmul.f32 %v2849, %v3249
      %v3266 = vmul.f32 %v2850, %v3250
      %v3267 = vmul.f32 %v2851, %v3251
      %v3268 = vmul.f32 %v2852, %v3252
      %v3269 = vmul.f32 %v2853, %v3253
      %v3270 = vmul.f32 %v2854, %v3254
      %v3271 = vmul.f32 %v2855, %v3255
      %v3272 = vmul.f32 %v2856, %v3256
      %v3273 = vmul.f32 %v2857, %v3257
      %v3274 = vmul.f32 %v2858, %v3258
      %v3275 = vmul.f32 %v2859, %v3259
      %v3276 = vmul.f32 %v2860, %v3260
      %v3277 = vmul.f32 %v2861, %v3261
      %v3278 = vld [vmem:[%s803] sm:$0xf]
      %v3279 = vld [vmem:[%s803 + $0x4] sm:$0xf]
      %v3280 = vld [vmem:[%s803 + $0x8] sm:$0xf]
      %v3281 = vld [vmem:[%s803 + $0xc] sm:$0xf]
      %v3282 = vld [vmem:[%s803 + $0x10] sm:$0xf]
      %v3283 = vld [vmem:[%s803 + $0x14] sm:$0xf]
      %v3284 = vld [vmem:[%s803 + $0x18] sm:$0xf]
      %v3285 = vld [vmem:[%s803 + $0x1c] sm:$0xf]
      %v3286 = vld [vmem:[%s803 + $0x20] sm:$0xf]
      %v3287 = vld [vmem:[%s803 + $0x24] sm:$0xf]
      %v3288 = vld [vmem:[%s803 + $0x28] sm:$0xf]
      %v3289 = vld [vmem:[%s803 + $0x2c] sm:$0xf]
      %v3290 = vld [vmem:[%s803 + $0x30] sm:$0xf]
      %v3291 = vld [vmem:[%s803 + $0x34] sm:$0xf]
      %v3292 = vld [vmem:[%s803 + $0x38] sm:$0xf]
      %v3293 = vld [vmem:[%s803 + $0x3c] sm:$0xf]
      %v3294 = vld [vmem:[%s803 + $0x40] sm:$0xf]
      %v3295 = vld [vmem:[%s803 + $0x44] sm:$0xf]
      %v3296 = vld [vmem:[%s803 + $0x48] sm:$0xf]
      %v3297 = vld [vmem:[%s803 + $0x4c] sm:$0xf]
      %v3298 = vld [vmem:[%s803 + $0x50] sm:$0xf]
      %v3299 = vld [vmem:[%s803 + $0x54] sm:$0xf]
      %v3300 = vld [vmem:[%s803 + $0x58] sm:$0xf]
      %v3301 = vld [vmem:[%s803 + $0x5c] sm:$0xf]
      %v3302 = vld [vmem:[%s803 + $0x60] sm:$0xf]
      %v3303 = vld [vmem:[%s803 + $0x64] sm:$0xf]
      %v3304 = vld [vmem:[%s803 + $0x68] sm:$0xf]
      %v3305 = vld [vmem:[%s803 + $0x6c] sm:$0xf]
      %v3306 = vld [vmem:[%s803 + $0x70] sm:$0xf]
      %v3307 = vld [vmem:[%s803 + $0x74] sm:$0xf]
      %v3308 = vld [vmem:[%s803 + $0x78] sm:$0xf]
      %v3309 = vld [vmem:[%s803 + $0x7c] sm:$0xf]
      %v3310 = vld [vmem:[%s803 + $0x80] sm:$0xf]
      %v3311 = vld [vmem:[%s803 + $0x84] sm:$0xf]
      %v3312 = vld [vmem:[%s803 + $0x88] sm:$0xf]
      %v3313 = vld [vmem:[%s803 + $0x8c] sm:$0xf]
      %v3314 = vld [vmem:[%s803 + $0x90] sm:$0xf]
      %v3315 = vld [vmem:[%s803 + $0x94] sm:$0xf]
      %v3316 = vld [vmem:[%s803 + $0x98] sm:$0xf]
      %v3317 = vld [vmem:[%s803 + $0x9c] sm:$0xf]
      %v3318 = vld [vmem:[%s803 + $0xa0] sm:$0xf]
      %v3319 = vld [vmem:[%s803 + $0xa4] sm:$0xf]
      %v3320 = vld [vmem:[%s803 + $0xa8] sm:$0xf]
      %v3321 = vld [vmem:[%s803 + $0xac] sm:$0xf]
      %v3322 = vld [vmem:[%s803 + $0xb0] sm:$0xf]
      %v3323 = vld [vmem:[%s803 + $0xb4] sm:$0xf]
      %v3324 = vld [vmem:[%s803 + $0xb8] sm:$0xf]
      %v3325 = vld [vmem:[%s803 + $0xbc] sm:$0xf]
      %v3326 = vld [vmem:[%s803 + $0xc0] sm:$0xf]
      %v3327 = vld [vmem:[%s803 + $0xc4] sm:$0xf]
      %v3328 = vld [vmem:[%s803 + $0xc8] sm:$0xf]
      %v3329 = vld [vmem:[%s803 + $0xcc] sm:$0xf]
      %v3330 = vld [vmem:[%s803 + $0xd0] sm:$0xf]
      %v3331 = vld [vmem:[%s803 + $0xd4] sm:$0xf]
      %v3332 = vld [vmem:[%s803 + $0xd8] sm:$0xf]
      %v3333 = vld [vmem:[%s803 + $0xdc] sm:$0xf]
      %v3334 = vld [vmem:[%s803 + $0xe0] sm:$0xf]
      %v3335 = vld [vmem:[%s803 + $0xe4] sm:$0xf]
      %v3336 = vld [vmem:[%s803 + $0xe8] sm:$0xf]
      %v3337 = vld [vmem:[%s803 + $0xec] sm:$0xf]
      %v3338 = vld [vmem:[%s803 + $0xf0] sm:$0xf]
      %v3339 = vld [vmem:[%s803 + $0xf4] sm:$0xf]
      %v3340 = vld [vmem:[%s803 + $0xf8] sm:$0xf]
      %v3341 = vld [vmem:[%s803 + $0xfc] sm:$0xf]
      %v3342 = vpack.c.bf16 %v3266, %v3262
      %v3343 = vpack.c.bf16 %v3267, %v3263
      %v3344 = vpack.c.bf16 %v3268, %v3264
      %v3345 = vpack.c.bf16 %v3269, %v3265
      %v3346 = vpack.c.bf16 %v3274, %v3270
      %v3347 = vpack.c.bf16 %v3275, %v3271
      %v3348 = vpack.c.bf16 %v3276, %v3272
      %v3349 = vpack.c.bf16 %v3277, %v3273
      %v3414 = vunpack.c.l.b16 %v3278
      %v3415 = vunpack.c.l.b16 %v3279
      %v3416 = vunpack.c.l.b16 %v3280
      %v3417 = vunpack.c.l.b16 %v3281
      %v3418 = vunpack.c.l.b16 %v3282
      %v3419 = vunpack.c.l.b16 %v3283
      %v3420 = vunpack.c.l.b16 %v3284
      %v3421 = vunpack.c.l.b16 %v3285
      %v3422 = vunpack.c.l.b16 %v3286
      %v3423 = vunpack.c.l.b16 %v3287
      %v3424 = vunpack.c.l.b16 %v3288
      %v3425 = vunpack.c.l.b16 %v3289
      %v3426 = vunpack.c.l.b16 %v3290
      %v3427 = vunpack.c.l.b16 %v3291
      %v3428 = vunpack.c.l.b16 %v3292
      %v3429 = vunpack.c.l.b16 %v3293
      %v3430 = vunpack.c.l.b16 %v3294
      %v3431 = vunpack.c.l.b16 %v3295
      %v3432 = vunpack.c.l.b16 %v3296
      %v3433 = vunpack.c.l.b16 %v3297
      %v3434 = vunpack.c.l.b16 %v3298
      %v3435 = vunpack.c.l.b16 %v3299
      %v3436 = vunpack.c.l.b16 %v3300
      %v3437 = vunpack.c.l.b16 %v3301
      %v3438 = vunpack.c.l.b16 %v3302
      %v3439 = vunpack.c.l.b16 %v3303
      %v3440 = vunpack.c.l.b16 %v3304
      %v3441 = vunpack.c.l.b16 %v3305
      %v3442 = vunpack.c.l.b16 %v3306
      %v3443 = vunpack.c.l.b16 %v3307
      %v3444 = vunpack.c.l.b16 %v3308
      %v3445 = vunpack.c.l.b16 %v3309
      %v3446 = vunpack.c.l.b16 %v3310
      %v3447 = vunpack.c.l.b16 %v3311
      %v3448 = vunpack.c.l.b16 %v3312
      %v3449 = vunpack.c.l.b16 %v3313
      %v3450 = vunpack.c.l.b16 %v3314
      %v3451 = vunpack.c.l.b16 %v3315
      %v3452 = vunpack.c.l.b16 %v3316
      %v3453 = vunpack.c.l.b16 %v3317
      %v3454 = vunpack.c.l.b16 %v3318
      %v3455 = vunpack.c.l.b16 %v3319
      %v3456 = vunpack.c.l.b16 %v3320
      %v3457 = vunpack.c.l.b16 %v3321
      %v3458 = vunpack.c.l.b16 %v3322
      %v3459 = vunpack.c.l.b16 %v3323
      %v3460 = vunpack.c.l.b16 %v3324
      %v3461 = vunpack.c.l.b16 %v3325
      %v3462 = vunpack.c.l.b16 %v3326
      %v3463 = vunpack.c.l.b16 %v3327
      %v3464 = vunpack.c.l.b16 %v3328
      %v3465 = vunpack.c.l.b16 %v3329
      %v3466 = vunpack.c.l.b16 %v3330
      %v3467 = vunpack.c.l.b16 %v3331
      %v3468 = vunpack.c.l.b16 %v3332
      %v3469 = vunpack.c.l.b16 %v3333
      %v3470 = vunpack.c.l.b16 %v3334
      %v3471 = vunpack.c.l.b16 %v3335
      %v3472 = vunpack.c.l.b16 %v3336
      %v3473 = vunpack.c.l.b16 %v3337
      %v3474 = vunpack.c.l.b16 %v3338
      %v3475 = vunpack.c.l.b16 %v3339
      %v3476 = vunpack.c.l.b16 %v3340
      %v3477 = vunpack.c.l.b16 %v3341
      %v3478 = vpack.c.b16 %v3415, %v3414
      %v3479 = vpack.c.b16 %v3417, %v3416
      %v3480 = vpack.c.b16 %v3419, %v3418
      %v3481 = vpack.c.b16 %v3421, %v3420
      %v3482 = vpack.c.b16 %v3423, %v3422
      %v3483 = vpack.c.b16 %v3425, %v3424
      %v3484 = vpack.c.b16 %v3427, %v3426
      %v3485 = vpack.c.b16 %v3429, %v3428
      %v3486 = vpack.c.b16 %v3431, %v3430
      %v3487 = vpack.c.b16 %v3433, %v3432
      %v3488 = vpack.c.b16 %v3435, %v3434
      %v3489 = vpack.c.b16 %v3437, %v3436
      %v3490 = vpack.c.b16 %v3439, %v3438
      %v3491 = vpack.c.b16 %v3441, %v3440
      %v3492 = vpack.c.b16 %v3443, %v3442
      %v3493 = vpack.c.b16 %v3445, %v3444
      %v3494 = vpack.c.b16 %v3447, %v3446
      %v3495 = vpack.c.b16 %v3449, %v3448
      %v3496 = vpack.c.b16 %v3451, %v3450
      %v3497 = vpack.c.b16 %v3453, %v3452
      %v3498 = vpack.c.b16 %v3455, %v3454
      %v3499 = vpack.c.b16 %v3457, %v3456
      %v3500 = vpack.c.b16 %v3459, %v3458
      %v3501 = vpack.c.b16 %v3461, %v3460
      %v3502 = vpack.c.b16 %v3463, %v3462
      %v3503 = vpack.c.b16 %v3465, %v3464
      %v3504 = vpack.c.b16 %v3467, %v3466
      %v3505 = vpack.c.b16 %v3469, %v3468
      %v3506 = vpack.c.b16 %v3471, %v3470
      %v3507 = vpack.c.b16 %v3473, %v3472
      %v3508 = vpack.c.b16 %v3475, %v3474
      %v3509 = vpack.c.b16 %v3477, %v3476
      %3542 = vmatprep.subr.bf16.mxu0 0
      %3543 = vmatpush1.bf16.msra.mxu0 %v3478
      %3544 = vmatprep.subr.bf16.mxu0 0
      %3545 = vmatpush1.bf16.msra.mxu0 %v3479
      %3546 = vmatprep.subr.bf16.mxu0 0
      %3547 = vmatpush1.bf16.msra.mxu0 %v3480
      %3548 = vmatprep.subr.bf16.mxu0 0
      %3549 = vmatpush1.bf16.msra.mxu0 %v3481
      %3550 = vmatprep.subr.bf16.mxu0 0
      %3551 = vmatpush1.bf16.msra.mxu0 %v3482
      %3552 = vmatprep.subr.bf16.mxu0 0
      %3553 = vmatpush1.bf16.msra.mxu0 %v3483
      %3554 = vmatprep.subr.bf16.mxu0 0
      %3555 = vmatpush1.bf16.msra.mxu0 %v3484
      %3556 = vmatprep.subr.bf16.mxu0 0
      %3557 = vmatpush1.bf16.msra.mxu0 %v3485
      %3558 = vmatprep.subr.bf16.mxu0 0
      %3559 = vmatpush1.bf16.msra.mxu0 %v3486
      %3560 = vmatprep.subr.bf16.mxu0 0
      %3561 = vmatpush1.bf16.msra.mxu0 %v3487
      %3562 = vmatprep.subr.bf16.mxu0 0
      %3563 = vmatpush1.bf16.msra.mxu0 %v3488
      %3564 = vmatprep.subr.bf16.mxu0 0
      %3565 = vmatpush1.bf16.msra.mxu0 %v3489
      %3566 = vmatprep.subr.bf16.mxu0 0
      %3567 = vmatpush1.bf16.msra.mxu0 %v3490
      %3568 = vmatprep.subr.bf16.mxu0 0
      %3569 = vmatpush1.bf16.msra.mxu0 %v3491
      %3570 = vmatprep.subr.bf16.mxu0 0
      %3571 = vmatpush1.bf16.msra.mxu0 %v3492
      %3572 = vmatprep.subr.bf16.mxu0 0
      %3573 = vmatpush1.bf16.msra.mxu0 %v3493
      %3574 = vmatprep.mubr.bf16.mxu0 %v3343
      %3575 = vmatmul.mubr.bf16.gmra.mrb[0].mxu0 %v3342
      %v3576 = vpop.f32.mrb[0].mxu0
      %v3577 = vadd.f32 0.0, %v3576
      %v3578 = vpop.f32.mrb[0].mxu0
      %v3579 = vpop.f32.mrb[0].mxu0
      %v3580 = vadd.f32 0.0, %v3579
      %v3581 = vpop.f32.mrb[0].mxu0
      %3582 = vmatprep.mubr.bf16.mxu0 %v3347
      %3583 = vmatmul.mubr.bf16.gmra.mrb[0].mxu0 %v3346
      %v3584 = vpop.f32.mrb[0].mxu0
      %v3585 = vadd.f32 0.0, %v3584
      %v3586 = vpop.f32.mrb[0].mxu0
      %v3587 = vpop.f32.mrb[0].mxu0
      %v3588 = vadd.f32 0.0, %v3587
      %v3589 = vpop.f32.mrb[0].mxu0
      %3590 = vdwg.mxu0
      %3591 = vmatprep.subr.bf16.mxu0 0
      %3592 = vmatpush1.bf16.msra.mxu0 %v3494
      %3593 = vmatprep.subr.bf16.mxu0 0
      %3594 = vmatpush1.bf16.msra.mxu0 %v3495
      %3595 = vmatprep.subr.bf16.mxu0 0
      %3596 = vmatpush1.bf16.msra.mxu0 %v3496
      %3597 = vmatprep.subr.bf16.mxu0 0
      %3598 = vmatpush1.bf16.msra.mxu0 %v3497
      %3599 = vmatprep.subr.bf16.mxu0 0
      %3600 = vmatpush1.bf16.msra.mxu0 %v3498
      %3601 = vmatprep.subr.bf16.mxu0 0
      %3602 = vmatpush1.bf16.msra.mxu0 %v3499
      %3603 = vmatprep.subr.bf16.mxu0 0
      %3604 = vmatpush1.bf16.msra.mxu0 %v3500
      %3605 = vmatprep.subr.bf16.mxu0 0
      %3606 = vmatpush1.bf16.msra.mxu0 %v3501
      %3607 = vmatprep.subr.bf16.mxu0 0
      %3608 = vmatpush1.bf16.msra.mxu0 %v3502
      %3609 = vmatprep.subr.bf16.mxu0 0
      %3610 = vmatpush1.bf16.msra.mxu0 %v3503
      %3611 = vmatprep.subr.bf16.mxu0 0
      %3612 = vmatpush1.bf16.msra.mxu0 %v3504
      %3613 = vmatprep.subr.bf16.mxu0 0
      %3614 = vmatpush1.bf16.msra.mxu0 %v3505
      %3615 = vmatprep.subr.bf16.mxu0 0
      %3616 = vmatpush1.bf16.msra.mxu0 %v3506
      %3617 = vmatprep.subr.bf16.mxu0 0
      %3618 = vmatpush1.bf16.msra.mxu0 %v3507
      %3619 = vmatprep.subr.bf16.mxu0 0
      %3620 = vmatpush1.bf16.msra.mxu0 %v3508
      %3621 = vmatprep.subr.bf16.mxu0 0
      %3622 = vmatpush1.bf16.msra.mxu0 %v3509
      %3623 = vmatprep.mubr.bf16.mxu0 %v3345
      %3624 = vmatmul.mubr.bf16.gmra.mrb[0].mxu0 %v3344
      %v3625 = vpop.f32.mrb[0].mxu0
      %v3626 = vadd.f32 %v3577, %v3625
      %v3627 = vpop.f32.mrb[0].mxu0
      %v3628 = vpop.f32.mrb[0].mxu0
      %v3629 = vadd.f32 %v3580, %v3628
      %v3630 = vpop.f32.mrb[0].mxu0
      %3631 = vmatprep.mubr.bf16.mxu0 %v3349
      %3632 = vmatmul.mubr.bf16.gmra.mrb[0].mxu0 %v3348
      %v3633 = vpop.f32.mrb[0].mxu0
      %v3634 = vadd.f32 %v3585, %v3633
      %v3635 = vpop.f32.mrb[0].mxu0
      %v3636 = vpop.f32.mrb[0].mxu0
      %v3637 = vadd.f32 %v3588, %v3636
      %v3638 = vpop.f32.mrb[0].mxu0
      %3639 = vdwg.mxu0
      %v3640 = vadd.f32 %v2454, %v3626
      %v3641 = vadd.f32 %v2455, %v3629
      %v3642 = vadd.f32 %v2456, %v3634
      %v3643 = vadd.f32 %v2457, %v3637
      %v3644 = vld [vmem:[%s806] sm:$0x1]
      %v3646 = vlaneseq
      %v3647 = vshrl.u32 %v3646, 7
      %v3648 = vsub.s32 0, %v3647
      %v3649 = vrot.slane %v3644, %v3648
      %v3651 = vadd.f32 %v3640, %v3649
      %v3652 = vadd.f32 %v3641, %v3649
      %v3653 = vadd.f32 %v3642, %v3649
      %v3654 = vadd.f32 %v3643, %v3649
      %3655 = vst [vmem:[#allocation2] sm:$0xff] %v3651
      %3656 = vst [vmem:[#allocation2 + $0x8] sm:$0xff] %v3652
      %3657 = vst [vmem:[#allocation2 + $0x10] sm:$0xff] %v3653
      %3658 = vst [vmem:[#allocation2 + $0x18] sm:$0xff] %v3654
      %p3659 = scmp.eq.s32.totalorder %s35, 1
      // Predicated region
      $region101: #{vit_forward_impl.1} parent=95 // pred_check
        %p3660 = pneg %p3659
      $region102: #{vit_forward_impl.1} parent=95 // pred_check_branch
        %3662 = sbr.rel (%p3660) target = $region104
      $region103: #{vit_forward_impl.1} parent=95 // pred_region
        %v3663 = vld [vmem:[%s15] sm:$0x1]
        %v3664 = vld [vmem:[%s16] sm:$0x1]
        %3665 = vadd.xlane.f32.xlu0 %v3651
        %v3666 = vpop.xlane.xlu0 %3665
        %v3667 = vmul.f32 %v3666, %v1244
        %v3668 = vsub.f32 %v3651, %v3667
        %v3669 = vmul.f32 %v3668, %v3668
        %3670 = vadd.xlane.f32.xlu0 %v3669
        %v3671 = vpop.xlane.xlu0 %3670
        %v3672 = vmul.f32 %v3671, %v1244
        %v3673 = vadd.f32 %v3672, 1e-06
        %v3674 = vrsqrt.pop %v3673
        %v3675 = vmul.f32 %v3668, %v3674
        %v3677 = vlaneseq
        %v3678 = vshrl.u32 %v3677, 7
        %v3679 = vsub.s32 0, %v3678
        %v3680 = vrot.slane %v3663, %v3679
        %v3682 = vmul.f32 %v3675, %v3680
        %v3684 = vlaneseq
        %v3685 = vshrl.u32 %v3684, 7
        %v3686 = vsub.s32 0, %v3685
        %v3687 = vrot.slane %v3664, %v3686
        %v3689 = vadd.f32 %v3682, %v3687
        %v3690 = vld [vmem:[%s17] sm:$0xf]
        %v3691 = vld [vmem:[%s17 + $0x4] sm:$0xf]
        %v3692 = vld [vmem:[%s17 + $0x8] sm:$0xf]
        %v3693 = vld [vmem:[%s17 + $0xc] sm:$0xf]
        %v3694 = vld [vmem:[%s17 + $0x10] sm:$0xf]
        %v3695 = vld [vmem:[%s17 + $0x14] sm:$0xf]
        %v3696 = vld [vmem:[%s17 + $0x18] sm:$0xf]
        %v3697 = vld [vmem:[%s17 + $0x1c] sm:$0xf]
        %v3698 = vld [vmem:[%s17 + $0x20] sm:$0xf]
        %v3699 = vld [vmem:[%s17 + $0x24] sm:$0xf]
        %v3700 = vld [vmem:[%s17 + $0x28] sm:$0xf]
        %v3701 = vld [vmem:[%s17 + $0x2c] sm:$0xf]
        %v3702 = vld [vmem:[%s17 + $0x30] sm:$0xf]
        %v3703 = vld [vmem:[%s17 + $0x34] sm:$0xf]
        %v3704 = vld [vmem:[%s17 + $0x38] sm:$0xf]
        %v3705 = vld [vmem:[%s17 + $0x3c] sm:$0xf]
        %v3706 = vpack.c.bf16 %v3689, %v3689
        %v3707 = vld [vmem:[%s18] sm:$0x1]
        %v3709 = vlaneseq
        %v3710 = vshrl.u32 %v3709, 7
        %v3711 = vsub.s32 0, %v3710
        %v3712 = vrot.slane %v3707, %v3711
        %v3730 = vunpack.c.l.b16 %v3690
        %v3731 = vunpack.c.l.b16 %v3691
        %v3732 = vunpack.c.l.b16 %v3692
        %v3733 = vunpack.c.l.b16 %v3693
        %v3734 = vunpack.c.l.b16 %v3694
        %v3735 = vunpack.c.l.b16 %v3695
        %v3736 = vunpack.c.l.b16 %v3696
        %v3737 = vunpack.c.l.b16 %v3697
        %v3738 = vunpack.c.l.b16 %v3698
        %v3739 = vunpack.c.l.b16 %v3699
        %v3740 = vunpack.c.l.b16 %v3700
        %v3741 = vunpack.c.l.b16 %v3701
        %v3742 = vunpack.c.l.b16 %v3702
        %v3743 = vunpack.c.l.b16 %v3703
        %v3744 = vunpack.c.l.b16 %v3704
        %v3745 = vunpack.c.l.b16 %v3705
        %v3746 = vpack.c.b16 %v3731, %v3730
        %v3747 = vpack.c.b16 %v3733, %v3732
        %v3748 = vpack.c.b16 %v3735, %v3734
        %v3749 = vpack.c.b16 %v3737, %v3736
        %v3750 = vpack.c.b16 %v3739, %v3738
        %v3751 = vpack.c.b16 %v3741, %v3740
        %v3752 = vpack.c.b16 %v3743, %v3742
        %v3753 = vpack.c.b16 %v3745, %v3744
        %3762 = vmatprep.subr.bf16.mxu0 0
        %3763 = vmatpush1.bf16.msra.mxu0 %v3746
        %3764 = vmatprep.subr.bf16.mxu0 0
        %3765 = vmatpush1.bf16.msra.mxu0 %v3747
        %3766 = vmatprep.subr.bf16.mxu0 0
        %3767 = vmatpush1.bf16.msra.mxu0 %v3748
        %3768 = vmatprep.subr.bf16.mxu0 0
        %3769 = vmatpush1.bf16.msra.mxu0 %v3749
        %3770 = vmatprep.subr.bf16.mxu0 0
        %3771 = vmatpush1.bf16.msra.mxu0 %v3750
        %3772 = vmatprep.subr.bf16.mxu0 0
        %3773 = vmatpush1.bf16.msra.mxu0 %v3751
        %3774 = vmatprep.subr.bf16.mxu0 0
        %3775 = vmatpush1.bf16.msra.mxu0 %v3752
        %3776 = vmatprep.subr.bf16.mxu0 0
        %3777 = vmatpush1.bf16.msra.mxu0 %v3753
        %3778 = vmatprep.subr.bf16.mxu0 0
        %3779 = vmatpush1.bf16.msra.mxu0 0
        %3780 = vmatprep.subr.bf16.mxu0 0
        %3781 = vmatpush1.bf16.msra.mxu0 0
        %3782 = vmatprep.subr.bf16.mxu0 0
        %3783 = vmatpush1.bf16.msra.mxu0 0
        %3784 = vmatprep.subr.bf16.mxu0 0
        %3785 = vmatpush1.bf16.msra.mxu0 0
        %3786 = vmatprep.subr.bf16.mxu0 0
        %3787 = vmatpush1.bf16.msra.mxu0 0
        %3788 = vmatprep.subr.bf16.mxu0 0
        %3789 = vmatpush1.bf16.msra.mxu0 0
        %3790 = vmatprep.subr.bf16.mxu0 0
        %3791 = vmatpush1.bf16.msra.mxu0 0
        %3792 = vmatprep.subr.bf16.mxu0 0
        %3793 = vmatpush1.bf16.msra.mxu0 0
        %3794 = vmatprep.mubr.bf16.mxu0 0
        %3795 = vmatmul.mubr.bf16.gmra.mrb[0].mxu0 %v3706
        %v3796 = vpop.f32.mrb[0].mxu0
        %v3797 = vadd.f32 %v3712, %v3796
        %v3798 = vpop.f32.mrb[0].mxu0
        %v3799 = vpop.f32.mrb[0].mxu0
        %v3800 = vpop.f32.mrb[0].mxu0
        %3801 = vdwg.mxu0
        %3802 = vst [vmem:[%s810] sm:$0xff] %v3797
      $region104: #{vit_forward_impl.1} parent=95 // pred_fallthru
        _
      %p3803 = scmp.lt.s32.totalorder %s34, 1
      %s3804 = scalar_select %p3803, %s34, 1
      %s3805 = smul.addr %s3804, 8
      %s3806 = scalar_lea.vmem %s19, %s3805
      // Predicated region
      $region105: #{vit_forward_impl.1} parent=95 // pred_check
        %p3807 = pneg %p524
      $region106: #{vit_forward_impl.1} parent=95 // pred_check_branch
        %3809 = sbr.rel (%p3807) target = $region108
      $region107: #{vit_forward_impl.1} parent=95 // pred_region
        _
      $region108: #{vit_forward_impl.1} parent=95 // pred_fallthru
        _
    $region96: #{vit_forward_impl.1} parent=5 // pred_fallthru
      _
    %p3810 = scmp.le.s32.totalorder 2, %s25
    // Predicated region
    $region109: #{vit_forward_impl.1} parent=5 // pred_check
      %p3811 = pneg %p3810
    $region110: #{vit_forward_impl.1} parent=5 // pred_check_branch
      %3813 = sbr.rel (%p3811) target = $region112
    $region111: #{vit_forward_impl.1} parent=5 // pred_region
      %s3814 = ssub.s32 %s25, 2
      // Predicated region
      $region113: #{vit_forward_impl.1} parent=111 // pred_check
        %p3815 = pneg %p530
      $region114: #{vit_forward_impl.1} parent=111 // pred_check_branch
        %3817 = sbr.rel (%p3815) target = $region116
      $region115: #{vit_forward_impl.1} parent=111 // pred_region
        %p3818 = scmp.lt.s32.totalorder %s36, 1
        %s3819 = scalar_select %p3818, %s36, 1
        %s3820 = smul.addr %s3819, 8
        %s3821 = scalar_lea.vmem %s19, %s3820
      $region116: #{vit_forward_impl.1} parent=111 // pred_fallthru
        _
    $region112: #{vit_forward_impl.1} parent=5 // pred_fallthru
      _
  $region6: #{vit_forward_impl.1} parent=0 // loop_footer
    %s29 = sadd.s32 1, %s25
  $region7: #{vit_forward_impl.1} parent=0 // loop_footer_branch
    %24 = sbr.rel target = $region3
  $region8: #{vit_forward_impl.1} parent=0 // loop_exit
    _

</llo_original>
